<compile_context>
chip_gen: v6e
topology: v6e:2x2x1
jax: 0.10.0
libtpu: 0.0.40
codegen_flags: <defaults>
</compile_context>

<pallas_src>
import jax
import jax.numpy as jnp
from jax.experimental import pallas as pl
from jax.experimental.pallas import tpu as pltpu

BN_EPS = 1e-5
LEAKY_SLOPE = 0.2
IN_DIM = 100
IN_DIM_PADDED = 128          # lane-aligned contraction dim for layer 1
OUT_DIM = 28 * 28            # 784


def _bn_leaky(h, gamma, beta):
    """Training-mode BatchNorm1d folded to a single scale/shift + LeakyReLU(0.2)."""
    mean = jnp.mean(h, axis=0, keepdims=True)
    d = h - mean
    var = jnp.mean(d * d, axis=0, keepdims=True)          # biased variance
    scale = gamma * jax.lax.rsqrt(var + BN_EPS)
    hn = d * scale + beta
    # LeakyReLU with slope 0.2 (< 1)  ==  max(x, 0.2*x)
    return jnp.maximum(hn, LEAKY_SLOPE * hn)


def generator_kernel(
    x_ref,
    w1_ref, g1_ref, be1_ref,
    w2_ref, g2_ref, be2_ref,
    w3_ref, g3_ref, be3_ref,
    w4_ref, g4_ref, be4_ref,
    w5_ref, b5_ref,
    out_ref,
):
    # Weights are bf16 in VMEM; upcast to f32 in-register, accumulate in f32.
    # Biases of layers 1-4 are omitted (exactly cancelled by the BN mean-sub).
    h = jnp.dot(x_ref[...], w1_ref[...].astype(jnp.float32),
                preferred_element_type=jnp.float32)
    h = _bn_leaky(h, g1_ref[...], be1_ref[...])

    h = jnp.dot(h, w2_ref[...].astype(jnp.float32),
                preferred_element_type=jnp.float32)
    h = _bn_leaky(h, g2_ref[...], be2_ref[...])

    h = jnp.dot(h, w3_ref[...].astype(jnp.float32),
                preferred_element_type=jnp.float32)
    h = _bn_leaky(h, g3_ref[...], be3_ref[...])

    h = jnp.dot(h, w4_ref[...].astype(jnp.float32),
                preferred_element_type=jnp.float32)
    h = _bn_leaky(h, g4_ref[...], be4_ref[...])

    # Layer 5: Linear(1024, 784) + tanh (bias kept, no BN here).
    h = jnp.dot(h, w5_ref[...].astype(jnp.float32),
                preferred_element_type=jnp.float32)
    out_ref[...] = jnp.tanh(h + b5_ref[...])


def init_params(key):
    """Deterministic f32 parameter init (PyTorch-Linear-style uniform bounds).

    Returns the flat list: w1,b1,g1,be1, ..., w4,b4,g4,be4, w5,b5 with weights
    already transposed to (in_features, out_features).
    """
    dims = [IN_DIM, 128, 256, 512, 1024, OUT_DIM]
    flat = []
    keys = jax.random.split(key, 2 * (len(dims) - 1))
    for i in range(len(dims) - 1):
        fan_in, fan_out = dims[i], dims[i + 1]
        bound = 1.0 / jnp.sqrt(jnp.float32(fan_in))
        w = jax.random.uniform(keys[2 * i], (fan_in, fan_out), jnp.float32,
                               minval=-bound, maxval=bound)
        b = jax.random.uniform(keys[2 * i + 1], (1, fan_out), jnp.float32,
                               minval=-bound, maxval=bound)
        flat.extend((w, b))
        if i < 4:  # BN affine params for the first 4 layers (gamma=1, beta=0)
            flat.extend((jnp.ones((1, fan_out), jnp.float32),
                         jnp.zeros((1, fan_out), jnp.float32)))
    return flat


def prepare_kernel_params(flat):
    """Convert f32 module params into the kernel's arg list:

      - weights cast to bf16 (w1 also zero-padded to K=128 rows),
      - biases b1..b4 dropped (cancelled exactly by training-mode BN),
      - BN gamma/beta and the final bias b5 kept in f32.
    """
    (w1, b1, g1, be1,
     w2, b2, g2, be2,
     w3, b3, g3, be3,
     w4, b4, g4, be4,
     w5, b5) = flat
    del b1, b2, b3, b4  # algebraically dead under training-mode BN
    w1p = jnp.pad(w1, ((0, IN_DIM_PADDED - IN_DIM), (0, 0)))
    return [
        w1p.astype(jnp.bfloat16), g1, be1,
        w2.astype(jnp.bfloat16), g2, be2,
        w3.astype(jnp.bfloat16), g3, be3,
        w4.astype(jnp.bfloat16), g4, be4,
        w5.astype(jnp.bfloat16), b5,
    ]


@jax.jit
def generator_forward(x, *kernel_params):
    B = x.shape[0]
    # Zero-pad the K=100 contraction dim to 128 lanes (w1 is pre-padded to match).
    x_pad = jnp.pad(x, ((0, 0), (0, IN_DIM_PADDED - IN_DIM)))
    all_inputs = (x_pad,) + tuple(kernel_params)
    vmem = pl.BlockSpec(memory_space=pltpu.MemorySpace.VMEM)
    return pl.pallas_call(
        generator_kernel,
        out_shape=jax.ShapeDtypeStruct((B, OUT_DIM), jnp.float32),
        in_specs=[vmem] * len(all_inputs),
        out_specs=vmem,
        compiler_params=pltpu.CompilerParams(
            vmem_limit_bytes=32 * 1024 * 1024),  # fits v7x's 64 MiB physical VMEM
    )(*all_inputs)


def generator_ref(x, flat):
    """Pure-JAX reference with full PyTorch semantics (biases included, standard
    BN formulation). Uses the same bf16-rounded weight values as the kernel so
    the comparison isolates kernel correctness from the bf16 weight cast, and
    HIGHEST matmul precision so XLA's default low-precision f32 dot path does
    not pollute the check."""
    (w1, b1, g1, be1,
     w2, b2, g2, be2,
     w3, b3, g3, be3,
     w4, b4, g4, be4,
     w5, b5) = flat

    def q(w):  # same quantization the kernel sees
        return w.astype(jnp.bfloat16).astype(jnp.float32)

    def mm(a, w):
        return jnp.dot(a, q(w), precision=jax.lax.Precision.HIGHEST,
                       preferred_element_type=jnp.float32)

    def bn_leaky(h, g, be):
        mean = jnp.mean(h, axis=0, keepdims=True)
        var = jnp.mean((h - mean) ** 2, axis=0, keepdims=True)
        hn = (h - mean) / jnp.sqrt(var + BN_EPS) * g + be
        return jnp.where(hn > 0, hn, LEAKY_SLOPE * hn)

    h = bn_leaky(mm(x, w1) + b1, g1, be1)
    h = bn_leaky(mm(h, w2) + b2, g2, be2)
    h = bn_leaky(mm(h, w3) + b3, g3, be3)
    h = bn_leaky(mm(h, w4) + b4, g4, be4)
    return jnp.tanh(mm(h, w5) + b5)


if __name__ == "__main__":
    key = jax.random.PRNGKey(0)
    k_x, k_p = jax.random.split(key)

    B = 8  # small batch (training-mode BN needs batch statistics)
    x = jax.random.normal(k_x, (B, IN_DIM), jnp.float32)
    params = init_params(k_p)
    kparams = prepare_kernel_params(params)

    out = generator_forward(x, *kparams)
    out = jax.block_until_ready(out)

    ref = generator_ref(x, params)
    assert out.shape == (B, OUT_DIM)
    # tanh output in [-1, 1]; remaining deltas are accumulation order / EUP vs
    # XLA transcendentals, well below 1e-3.
    assert jnp.allclose(out, ref, atol=1e-3, rtol=1e-3), "mismatch vs JAX reference"

    print("KERNEL_OK")
</pallas_src>

<mosaic_0001>
module attributes {stable_mosaic.version = 11 : i64} {
  func.func @generator_kernel(%arg0: memref<8x128xf32, #tpu.memory_space<vmem>>, %arg1: memref<128x128xbf16, #tpu.memory_space<vmem>>, %arg2: memref<1x128xf32, #tpu.memory_space<vmem>>, %arg3: memref<1x128xf32, #tpu.memory_space<vmem>>, %arg4: memref<128x256xbf16, #tpu.memory_space<vmem>>, %arg5: memref<1x256xf32, #tpu.memory_space<vmem>>, %arg6: memref<1x256xf32, #tpu.memory_space<vmem>>, %arg7: memref<256x512xbf16, #tpu.memory_space<vmem>>, %arg8: memref<1x512xf32, #tpu.memory_space<vmem>>, %arg9: memref<1x512xf32, #tpu.memory_space<vmem>>, %arg10: memref<512x1024xbf16, #tpu.memory_space<vmem>>, %arg11: memref<1x1024xf32, #tpu.memory_space<vmem>>, %arg12: memref<1x1024xf32, #tpu.memory_space<vmem>>, %arg13: memref<1024x784xbf16, #tpu.memory_space<vmem>>, %arg14: memref<1x784xf32, #tpu.memory_space<vmem>>, %arg15: memref<8x784xf32, #tpu.memory_space<vmem>>) attributes {dimension_semantics = [], scalar_prefetch = 0 : i64, scratch_operands = 0 : i64, tpu.core_type = #tpu.core_type<tc>} {
    %c0 = arith.constant 0 : index
    %c0_0 = arith.constant 0 : index
    %0 = vector.load %arg0[%c0, %c0_0] : memref<8x128xf32, #tpu.memory_space<vmem>>, vector<8x128xf32>
    %c0_1 = arith.constant 0 : index
    %c0_2 = arith.constant 0 : index
    %1 = vector.load %arg1[%c0_1, %c0_2] : memref<128x128xbf16, #tpu.memory_space<vmem>>, vector<128x128xbf16>
    %2 = arith.extf %1 : vector<128x128xbf16> to vector<128x128xf32>
    %cst = arith.constant dense<0.000000e+00> : vector<8x128xf32>
    %3 = tpu.matmul %0, %2, %cst {dimension_numbers = #tpu.dot_dimension_numbers<[1], [0], [0], [1], [0, 0, 1, 1], [], []>} : vector<8x128xf32>, vector<128x128xf32>, vector<8x128xf32> -> vector<8x128xf32>
    %c0_3 = arith.constant 0 : index
    %c0_4 = arith.constant 0 : index
    %4 = vector.load %arg2[%c0_3, %c0_4] : memref<1x128xf32, #tpu.memory_space<vmem>>, vector<1x128xf32>
    %c0_5 = arith.constant 0 : index
    %c0_6 = arith.constant 0 : index
    %5 = vector.load %arg3[%c0_5, %c0_6] : memref<1x128xf32, #tpu.memory_space<vmem>>, vector<1x128xf32>
    %cst_7 = arith.constant dense<0.000000e+00> : vector<128xf32>
    %6 = vector.multi_reduction <add>, %3, %cst_7 [0] : vector<8x128xf32> to vector<128xf32>
    %7 = vector.shape_cast %6 : vector<128xf32> to vector<1x128xf32>
    %cst_8 = arith.constant 8.000000e+00 : f32
    %8 = vector.broadcast %cst_8 : f32 to vector<1x128xf32>
    %9 = arith.divf %7, %8 : vector<1x128xf32>
    %10 = vector.broadcast %9 : vector<1x128xf32> to vector<8x128xf32>
    %11 = arith.subf %3, %10 : vector<8x128xf32>
    %12 = arith.mulf %11, %11 : vector<8x128xf32>
    %cst_9 = arith.constant dense<0.000000e+00> : vector<128xf32>
    %13 = vector.multi_reduction <add>, %12, %cst_9 [0] : vector<8x128xf32> to vector<128xf32>
    %14 = vector.shape_cast %13 : vector<128xf32> to vector<1x128xf32>
    %cst_10 = arith.constant 8.000000e+00 : f32
    %15 = vector.broadcast %cst_10 : f32 to vector<1x128xf32>
    %16 = arith.divf %14, %15 : vector<1x128xf32>
    %cst_11 = arith.constant 9.99999974E-6 : f32
    %17 = vector.broadcast %cst_11 : f32 to vector<1x128xf32>
    %18 = arith.addf %16, %17 : vector<1x128xf32>
    %19 = math.rsqrt %18 : vector<1x128xf32>
    %20 = arith.mulf %4, %19 : vector<1x128xf32>
    %21 = vector.broadcast %20 : vector<1x128xf32> to vector<8x128xf32>
    %22 = arith.mulf %11, %21 : vector<8x128xf32>
    %23 = vector.broadcast %5 : vector<1x128xf32> to vector<8x128xf32>
    %24 = arith.addf %22, %23 : vector<8x128xf32>
    %cst_12 = arith.constant 2.000000e-01 : f32
    %25 = vector.broadcast %cst_12 : f32 to vector<8x128xf32>
    %26 = arith.mulf %25, %24 : vector<8x128xf32>
    %27 = arith.maximumf %24, %26 : vector<8x128xf32>
    %c0_13 = arith.constant 0 : index
    %c0_14 = arith.constant 0 : index
    %28 = vector.load %arg4[%c0_13, %c0_14] : memref<128x256xbf16, #tpu.memory_space<vmem>>, vector<128x256xbf16>
    %29 = arith.extf %28 : vector<128x256xbf16> to vector<128x256xf32>
    %cst_15 = arith.constant dense<0.000000e+00> : vector<8x256xf32>
    %30 = tpu.matmul %27, %29, %cst_15 {dimension_numbers = #tpu.dot_dimension_numbers<[1], [0], [0], [1], [0, 0, 1, 1], [], []>} : vector<8x128xf32>, vector<128x256xf32>, vector<8x256xf32> -> vector<8x256xf32>
    %c0_16 = arith.constant 0 : index
    %c0_17 = arith.constant 0 : index
    %31 = vector.load %arg5[%c0_16, %c0_17] : memref<1x256xf32, #tpu.memory_space<vmem>>, vector<1x256xf32>
    %c0_18 = arith.constant 0 : index
    %c0_19 = arith.constant 0 : index
    %32 = vector.load %arg6[%c0_18, %c0_19] : memref<1x256xf32, #tpu.memory_space<vmem>>, vector<1x256xf32>
    %cst_20 = arith.constant dense<0.000000e+00> : vector<256xf32>
    %33 = vector.multi_reduction <add>, %30, %cst_20 [0] : vector<8x256xf32> to vector<256xf32>
    %34 = vector.shape_cast %33 : vector<256xf32> to vector<1x256xf32>
    %cst_21 = arith.constant 8.000000e+00 : f32
    %35 = vector.broadcast %cst_21 : f32 to vector<1x256xf32>
    %36 = arith.divf %34, %35 : vector<1x256xf32>
    %37 = vector.broadcast %36 : vector<1x256xf32> to vector<8x256xf32>
    %38 = arith.subf %30, %37 : vector<8x256xf32>
    %39 = arith.mulf %38, %38 : vector<8x256xf32>
    %cst_22 = arith.constant dense<0.000000e+00> : vector<256xf32>
    %40 = vector.multi_reduction <add>, %39, %cst_22 [0] : vector<8x256xf32> to vector<256xf32>
    %41 = vector.shape_cast %40 : vector<256xf32> to vector<1x256xf32>
    %cst_23 = arith.constant 8.000000e+00 : f32
    %42 = vector.broadcast %cst_23 : f32 to vector<1x256xf32>
    %43 = arith.divf %41, %42 : vector<1x256xf32>
    %cst_24 = arith.constant 9.99999974E-6 : f32
    %44 = vector.broadcast %cst_24 : f32 to vector<1x256xf32>
    %45 = arith.addf %43, %44 : vector<1x256xf32>
    %46 = math.rsqrt %45 : vector<1x256xf32>
    %47 = arith.mulf %31, %46 : vector<1x256xf32>
    %48 = vector.broadcast %47 : vector<1x256xf32> to vector<8x256xf32>
    %49 = arith.mulf %38, %48 : vector<8x256xf32>
    %50 = vector.broadcast %32 : vector<1x256xf32> to vector<8x256xf32>
    %51 = arith.addf %49, %50 : vector<8x256xf32>
    %cst_25 = arith.constant 2.000000e-01 : f32
    %52 = vector.broadcast %cst_25 : f32 to vector<8x256xf32>
    %53 = arith.mulf %52, %51 : vector<8x256xf32>
    %54 = arith.maximumf %51, %53 : vector<8x256xf32>
    %c0_26 = arith.constant 0 : index
    %c0_27 = arith.constant 0 : index
    %55 = vector.load %arg7[%c0_26, %c0_27] : memref<256x512xbf16, #tpu.memory_space<vmem>>, vector<256x512xbf16>
    %56 = arith.extf %55 : vector<256x512xbf16> to vector<256x512xf32>
    %cst_28 = arith.constant dense<0.000000e+00> : vector<8x512xf32>
    %57 = tpu.matmul %54, %56, %cst_28 {dimension_numbers = #tpu.dot_dimension_numbers<[1], [0], [0], [1], [0, 0, 1, 1], [], []>} : vector<8x256xf32>, vector<256x512xf32>, vector<8x512xf32> -> vector<8x512xf32>
    %c0_29 = arith.constant 0 : index
    %c0_30 = arith.constant 0 : index
    %58 = vector.load %arg8[%c0_29, %c0_30] : memref<1x512xf32, #tpu.memory_space<vmem>>, vector<1x512xf32>
    %c0_31 = arith.constant 0 : index
    %c0_32 = arith.constant 0 : index
    %59 = vector.load %arg9[%c0_31, %c0_32] : memref<1x512xf32, #tpu.memory_space<vmem>>, vector<1x512xf32>
    %cst_33 = arith.constant dense<0.000000e+00> : vector<512xf32>
    %60 = vector.multi_reduction <add>, %57, %cst_33 [0] : vector<8x512xf32> to vector<512xf32>
    %61 = vector.shape_cast %60 : vector<512xf32> to vector<1x512xf32>
    %cst_34 = arith.constant 8.000000e+00 : f32
    %62 = vector.broadcast %cst_34 : f32 to vector<1x512xf32>
    %63 = arith.divf %61, %62 : vector<1x512xf32>
    %64 = vector.broadcast %63 : vector<1x512xf32> to vector<8x512xf32>
    %65 = arith.subf %57, %64 : vector<8x512xf32>
    %66 = arith.mulf %65, %65 : vector<8x512xf32>
    %cst_35 = arith.constant dense<0.000000e+00> : vector<512xf32>
    %67 = vector.multi_reduction <add>, %66, %cst_35 [0] : vector<8x512xf32> to vector<512xf32>
    %68 = vector.shape_cast %67 : vector<512xf32> to vector<1x512xf32>
    %cst_36 = arith.constant 8.000000e+00 : f32
    %69 = vector.broadcast %cst_36 : f32 to vector<1x512xf32>
    %70 = arith.divf %68, %69 : vector<1x512xf32>
    %cst_37 = arith.constant 9.99999974E-6 : f32
    %71 = vector.broadcast %cst_37 : f32 to vector<1x512xf32>
    %72 = arith.addf %70, %71 : vector<1x512xf32>
    %73 = math.rsqrt %72 : vector<1x512xf32>
    %74 = arith.mulf %58, %73 : vector<1x512xf32>
    %75 = vector.broadcast %74 : vector<1x512xf32> to vector<8x512xf32>
    %76 = arith.mulf %65, %75 : vector<8x512xf32>
    %77 = vector.broadcast %59 : vector<1x512xf32> to vector<8x512xf32>
    %78 = arith.addf %76, %77 : vector<8x512xf32>
    %cst_38 = arith.constant 2.000000e-01 : f32
    %79 = vector.broadcast %cst_38 : f32 to vector<8x512xf32>
    %80 = arith.mulf %79, %78 : vector<8x512xf32>
    %81 = arith.maximumf %78, %80 : vector<8x512xf32>
    %c0_39 = arith.constant 0 : index
    %c0_40 = arith.constant 0 : index
    %82 = vector.load %arg10[%c0_39, %c0_40] : memref<512x1024xbf16, #tpu.memory_space<vmem>>, vector<512x1024xbf16>
    %83 = arith.extf %82 : vector<512x1024xbf16> to vector<512x1024xf32>
    %cst_41 = arith.constant dense<0.000000e+00> : vector<8x1024xf32>
    %84 = tpu.matmul %81, %83, %cst_41 {dimension_numbers = #tpu.dot_dimension_numbers<[1], [0], [0], [1], [0, 0, 1, 1], [], []>} : vector<8x512xf32>, vector<512x1024xf32>, vector<8x1024xf32> -> vector<8x1024xf32>
    %c0_42 = arith.constant 0 : index
    %c0_43 = arith.constant 0 : index
    %85 = vector.load %arg11[%c0_42, %c0_43] : memref<1x1024xf32, #tpu.memory_space<vmem>>, vector<1x1024xf32>
    %c0_44 = arith.constant 0 : index
    %c0_45 = arith.constant 0 : index
    %86 = vector.load %arg12[%c0_44, %c0_45] : memref<1x1024xf32, #tpu.memory_space<vmem>>, vector<1x1024xf32>
    %cst_46 = arith.constant dense<0.000000e+00> : vector<1024xf32>
    %87 = vector.multi_reduction <add>, %84, %cst_46 [0] : vector<8x1024xf32> to vector<1024xf32>
    %88 = vector.shape_cast %87 : vector<1024xf32> to vector<1x1024xf32>
    %cst_47 = arith.constant 8.000000e+00 : f32
    %89 = vector.broadcast %cst_47 : f32 to vector<1x1024xf32>
    %90 = arith.divf %88, %89 : vector<1x1024xf32>
    %91 = vector.broadcast %90 : vector<1x1024xf32> to vector<8x1024xf32>
    %92 = arith.subf %84, %91 : vector<8x1024xf32>
    %93 = arith.mulf %92, %92 : vector<8x1024xf32>
    %cst_48 = arith.constant dense<0.000000e+00> : vector<1024xf32>
    %94 = vector.multi_reduction <add>, %93, %cst_48 [0] : vector<8x1024xf32> to vector<1024xf32>
    %95 = vector.shape_cast %94 : vector<1024xf32> to vector<1x1024xf32>
    %cst_49 = arith.constant 8.000000e+00 : f32
    %96 = vector.broadcast %cst_49 : f32 to vector<1x1024xf32>
    %97 = arith.divf %95, %96 : vector<1x1024xf32>
    %cst_50 = arith.constant 9.99999974E-6 : f32
    %98 = vector.broadcast %cst_50 : f32 to vector<1x1024xf32>
    %99 = arith.addf %97, %98 : vector<1x1024xf32>
    %100 = math.rsqrt %99 : vector<1x1024xf32>
    %101 = arith.mulf %85, %100 : vector<1x1024xf32>
    %102 = vector.broadcast %101 : vector<1x1024xf32> to vector<8x1024xf32>
    %103 = arith.mulf %92, %102 : vector<8x1024xf32>
    %104 = vector.broadcast %86 : vector<1x1024xf32> to vector<8x1024xf32>
    %105 = arith.addf %103, %104 : vector<8x1024xf32>
    %cst_51 = arith.constant 2.000000e-01 : f32
    %106 = vector.broadcast %cst_51 : f32 to vector<8x1024xf32>
    %107 = arith.mulf %106, %105 : vector<8x1024xf32>
    %108 = arith.maximumf %105, %107 : vector<8x1024xf32>
    %c0_52 = arith.constant 0 : index
    %c0_53 = arith.constant 0 : index
    %109 = vector.load %arg13[%c0_52, %c0_53] : memref<1024x784xbf16, #tpu.memory_space<vmem>>, vector<1024x784xbf16>
    %110 = arith.extf %109 : vector<1024x784xbf16> to vector<1024x784xf32>
    %cst_54 = arith.constant dense<0.000000e+00> : vector<8x784xf32>
    %111 = tpu.matmul %108, %110, %cst_54 {dimension_numbers = #tpu.dot_dimension_numbers<[1], [0], [0], [1], [0, 0, 1, 1], [], []>} : vector<8x1024xf32>, vector<1024x784xf32>, vector<8x784xf32> -> vector<8x784xf32>
    %c0_55 = arith.constant 0 : index
    %c0_56 = arith.constant 0 : index
    %112 = vector.load %arg14[%c0_55, %c0_56] : memref<1x784xf32, #tpu.memory_space<vmem>>, vector<1x784xf32>
    %113 = vector.broadcast %112 : vector<1x784xf32> to vector<8x784xf32>
    %114 = arith.addf %111, %113 : vector<8x784xf32>
    %115 = math.tanh %114 : vector<8x784xf32>
    %c0_57 = arith.constant 0 : index
    %c0_58 = arith.constant 0 : index
    %116 = vector.load %arg15[%c0_57, %c0_58] : memref<8x784xf32, #tpu.memory_space<vmem>>, vector<8x784xf32>
    tpu.vector_store %arg15[%c0_57, %c0_58], %115 {strides = array<i32>} : memref<8x784xf32, #tpu.memory_space<vmem>>, vector<8x784xf32>,
    return
  }
}

</mosaic_0001>

<llo_original>
// kernel: generator_forward.1
$region0: #{generator_forward.1}
  #allocation0 [shape = 'u32[]', space=smem, size = 0x4, offset = 0x4, fixed_abs, tag = 'smem constant byte address 0x4 - core index']
  #allocation1 [shape = 'u32[144,128]{1,0:T(1,128)}', space=vmem, size = 0x12000, scoped, tag = 'internal scratch']
  %s0 = inlined_call_operand.vmem [shape: f32[8,128], index: 0, kind: input, shape index: {}]
  %s1 = inlined_call_operand.vmem [shape: bf16[128,128], index: 1, kind: input, shape index: {}]
  %s2 = inlined_call_operand.vmem [shape: f32[1,128], index: 2, kind: input, shape index: {}]
  %s3 = inlined_call_operand.vmem [shape: f32[1,128], index: 3, kind: input, shape index: {}]
  %s4 = inlined_call_operand.vmem [shape: bf16[128,256], index: 4, kind: input, shape index: {}]
  %s5 = inlined_call_operand.vmem [shape: f32[1,256], index: 5, kind: input, shape index: {}]
  %s6 = inlined_call_operand.vmem [shape: f32[1,256], index: 6, kind: input, shape index: {}]
  %s7 = inlined_call_operand.vmem [shape: bf16[256,512], index: 7, kind: input, shape index: {}]
  %s8 = inlined_call_operand.vmem [shape: f32[1,512], index: 8, kind: input, shape index: {}]
  %s9 = inlined_call_operand.vmem [shape: f32[1,512], index: 9, kind: input, shape index: {}]
  %s10 = inlined_call_operand.vmem [shape: bf16[512,1024], index: 10, kind: input, shape index: {}]
  %s11 = inlined_call_operand.vmem [shape: f32[1,1024], index: 11, kind: input, shape index: {}]
  %s12 = inlined_call_operand.vmem [shape: f32[1,1024], index: 12, kind: input, shape index: {}]
  %s13 = inlined_call_operand.vmem [shape: bf16[1024,784], index: 13, kind: input, shape index: {}]
  %s14 = inlined_call_operand.vmem [shape: f32[1,784], index: 14, kind: input, shape index: {}]
  %s15 = inlined_call_operand.hbm [shape: f32[8,784], index: 15, kind: output, shape index: {}]
  %s16 = sld [smem:[#allocation0]]
  $region70: #{generator_forward.1} parent=0
    _
  %s18 = ssub.s32 1, %s16
  %s19 = scalar_select 0, %s18, %s16
  $region1: #{generator_forward.1} parent=0
    #allocation2 [shape = 'u8[28672]{0}', space=vmem, size = 0x7000, scoped, tag = 'output window, operand 0, single buffered']
    #allocation3 [shape = 's32[1]{0}', space=sflag, size = 0x4, scoped, tag = 'scoped memory for generator_forward.1']
    %20 = vsyncpa [#allocation3], 0
    // Predicated region
    $region2: #{generator_forward.1} parent=1 // pred_check
      _
    $region3: #{generator_forward.1} parent=1 // pred_check_branch
      %22 = sbr.rel (0) target = $region5
    $region4: #{generator_forward.1} parent=1 // pred_region
      _
    $region5: #{generator_forward.1} parent=1 // pred_fallthru
      _
    // Predicated region
    $region6: #{generator_forward.1} parent=1 // pred_check
      _
    $region7: #{generator_forward.1} parent=1 // pred_check_branch
      %24 = sbr.rel (0) target = $region9
    $region8: #{generator_forward.1} parent=1 // pred_region
      _
    $region9: #{generator_forward.1} parent=1 // pred_fallthru
      _
    // Predicated region
    $region10: #{generator_forward.1} parent=1 // pred_check
      _
    $region11: #{generator_forward.1} parent=1 // pred_check_branch
      %26 = sbr.rel (0) target = $region13
    $region12: #{generator_forward.1} parent=1 // pred_region
      _
    $region13: #{generator_forward.1} parent=1 // pred_fallthru
      _
    // Predicated region
    $region14: #{generator_forward.1} parent=1 // pred_check
      _
    $region15: #{generator_forward.1} parent=1 // pred_check_branch
      %28 = sbr.rel (0) target = $region17
    $region16: #{generator_forward.1} parent=1 // pred_region
      _
    $region17: #{generator_forward.1} parent=1 // pred_fallthru
      _
    // Predicated region
    $region18: #{generator_forward.1} parent=1 // pred_check
      _
    $region19: #{generator_forward.1} parent=1 // pred_check_branch
      %30 = sbr.rel (0) target = $region21
    $region20: #{generator_forward.1} parent=1 // pred_region
      _
    $region21: #{generator_forward.1} parent=1 // pred_fallthru
      _
    // Predicated region
    $region22: #{generator_forward.1} parent=1 // pred_check
      _
    $region23: #{generator_forward.1} parent=1 // pred_check_branch
      %32 = sbr.rel (0) target = $region25
    $region24: #{generator_forward.1} parent=1 // pred_region
      _
    $region25: #{generator_forward.1} parent=1 // pred_fallthru
      _
    // Predicated region
    $region26: #{generator_forward.1} parent=1 // pred_check
      _
    $region27: #{generator_forward.1} parent=1 // pred_check_branch
      %34 = sbr.rel (0) target = $region29
    $region28: #{generator_forward.1} parent=1 // pred_region
      _
    $region29: #{generator_forward.1} parent=1 // pred_fallthru
      _
    // Predicated region
    $region30: #{generator_forward.1} parent=1 // pred_check
      _
    $region31: #{generator_forward.1} parent=1 // pred_check_branch
      %36 = sbr.rel (0) target = $region33
    $region32: #{generator_forward.1} parent=1 // pred_region
      _
    $region33: #{generator_forward.1} parent=1 // pred_fallthru
      _
    // Predicated region
    $region34: #{generator_forward.1} parent=1 // pred_check
      _
    $region35: #{generator_forward.1} parent=1 // pred_check_branch
      %38 = sbr.rel (0) target = $region37
    $region36: #{generator_forward.1} parent=1 // pred_region
      _
    $region37: #{generator_forward.1} parent=1 // pred_fallthru
      _
    // Predicated region
    $region38: #{generator_forward.1} parent=1 // pred_check
      _
    $region39: #{generator_forward.1} parent=1 // pred_check_branch
      %40 = sbr.rel (0) target = $region41
    $region40: #{generator_forward.1} parent=1 // pred_region
      _
    $region41: #{generator_forward.1} parent=1 // pred_fallthru
      _
    // Predicated region
    $region42: #{generator_forward.1} parent=1 // pred_check
      _
    $region43: #{generator_forward.1} parent=1 // pred_check_branch
      %42 = sbr.rel (0) target = $region45
    $region44: #{generator_forward.1} parent=1 // pred_region
      _
    $region45: #{generator_forward.1} parent=1 // pred_fallthru
      _
    // Predicated region
    $region46: #{generator_forward.1} parent=1 // pred_check
      _
    $region47: #{generator_forward.1} parent=1 // pred_check_branch
      %44 = sbr.rel (0) target = $region49
    $region48: #{generator_forward.1} parent=1 // pred_region
      _
    $region49: #{generator_forward.1} parent=1 // pred_fallthru
      _
    // Predicated region
    $region50: #{generator_forward.1} parent=1 // pred_check
      _
    $region51: #{generator_forward.1} parent=1 // pred_check_branch
      %46 = sbr.rel (0) target = $region53
    $region52: #{generator_forward.1} parent=1 // pred_region
      _
    $region53: #{generator_forward.1} parent=1 // pred_fallthru
      _
    // Predicated region
    $region54: #{generator_forward.1} parent=1 // pred_check
      _
    $region55: #{generator_forward.1} parent=1 // pred_check_branch
      %48 = sbr.rel (0) target = $region57
    $region56: #{generator_forward.1} parent=1 // pred_region
      _
    $region57: #{generator_forward.1} parent=1 // pred_fallthru
      _
    // Predicated region
    $region58: #{generator_forward.1} parent=1 // pred_check
      _
    $region59: #{generator_forward.1} parent=1 // pred_check_branch
      %50 = sbr.rel (0) target = $region61
    $region60: #{generator_forward.1} parent=1 // pred_region
      _
    $region61: #{generator_forward.1} parent=1 // pred_fallthru
      _
    %v51 = vld [vmem:[%s0] sm:$0xff]
    %v52 = vld [vmem:[%s1] sm:$0xf]
    %v53 = vld [vmem:[%s1 + $0x4] sm:$0xf]
    %v54 = vld [vmem:[%s1 + $0x8] sm:$0xf]
    %v55 = vld [vmem:[%s1 + $0xc] sm:$0xf]
    %v56 = vld [vmem:[%s1 + $0x10] sm:$0xf]
    %v57 = vld [vmem:[%s1 + $0x14] sm:$0xf]
    %v58 = vld [vmem:[%s1 + $0x18] sm:$0xf]
    %v59 = vld [vmem:[%s1 + $0x1c] sm:$0xf]
    %v60 = vld [vmem:[%s1 + $0x20] sm:$0xf]
    %v61 = vld [vmem:[%s1 + $0x24] sm:$0xf]
    %v62 = vld [vmem:[%s1 + $0x28] sm:$0xf]
    %v63 = vld [vmem:[%s1 + $0x2c] sm:$0xf]
    %v64 = vld [vmem:[%s1 + $0x30] sm:$0xf]
    %v65 = vld [vmem:[%s1 + $0x34] sm:$0xf]
    %v66 = vld [vmem:[%s1 + $0x38] sm:$0xf]
    %v67 = vld [vmem:[%s1 + $0x3c] sm:$0xf]
    %v68 = vunpack.c.l.bf16 %v52
    %v69 = vunpack.c.l.bf16 %v53
    %v70 = vunpack.c.l.bf16 %v54
    %v71 = vunpack.c.l.bf16 %v55
    %v72 = vunpack.c.l.bf16 %v56
    %v73 = vunpack.c.l.bf16 %v57
    %v74 = vunpack.c.l.bf16 %v58
    %v75 = vunpack.c.l.bf16 %v59
    %v76 = vunpack.c.l.bf16 %v60
    %v77 = vunpack.c.l.bf16 %v61
    %v78 = vunpack.c.l.bf16 %v62
    %v79 = vunpack.c.l.bf16 %v63
    %v80 = vunpack.c.l.bf16 %v64
    %v81 = vunpack.c.l.bf16 %v65
    %v82 = vunpack.c.l.bf16 %v66
    %v83 = vunpack.c.l.bf16 %v67
    %84 = vmatprep.subr.mxu0 0.0
    %85 = vmatpush1.msra.mxu0 %v83
    %86 = vmatprep.subr.mxu0 0.0
    %87 = vmatpush1.msra.mxu0 %v82
    %88 = vmatprep.subr.mxu0 0.0
    %89 = vmatpush1.msra.mxu0 %v81
    %90 = vmatprep.subr.mxu0 0.0
    %91 = vmatpush1.msra.mxu0 %v80
    %92 = vmatprep.subr.mxu0 0.0
    %93 = vmatpush1.msra.mxu0 %v79
    %94 = vmatprep.subr.mxu0 0.0
    %95 = vmatpush1.msra.mxu0 %v78
    %96 = vmatprep.subr.mxu0 0.0
    %97 = vmatpush1.msra.mxu0 %v77
    %98 = vmatprep.subr.mxu0 0.0
    %99 = vmatpush1.msra.mxu0 %v76
    %100 = vmatprep.subr.mxu0 0.0
    %101 = vmatpush1.msra.mxu0 %v75
    %102 = vmatprep.subr.mxu0 0.0
    %103 = vmatpush1.msra.mxu0 %v74
    %104 = vmatprep.subr.mxu0 0.0
    %105 = vmatpush1.msra.mxu0 %v73
    %106 = vmatprep.subr.mxu0 0.0
    %107 = vmatpush1.msra.mxu0 %v72
    %108 = vmatprep.subr.mxu0 0.0
    %109 = vmatpush1.msra.mxu0 %v71
    %110 = vmatprep.subr.mxu0 0.0
    %111 = vmatpush1.msra.mxu0 %v70
    %112 = vmatprep.subr.mxu0 0.0
    %113 = vmatpush1.msra.mxu0 %v69
    %114 = vmatprep.subr.mxu0 0.0
    %115 = vmatpush1.msra.mxu0 %v68
    %116 = vmatprep.subr.mxu0 0.0
    %117 = vmatpush2.msra.mxu0 0.0
    %118 = vmatprep.subr.mxu0 0.0
    %119 = vmatpush2.msra.mxu0 0.0
    %120 = vmatprep.subr.mxu0 0.0
    %121 = vmatpush2.msra.mxu0 0.0
    %122 = vmatprep.subr.mxu0 0.0
    %123 = vmatpush2.msra.mxu0 0.0
    %124 = vmatprep.subr.mxu0 0.0
    %125 = vmatpush2.msra.mxu0 0.0
    %126 = vmatprep.subr.mxu0 0.0
    %127 = vmatpush2.msra.mxu0 0.0
    %128 = vmatprep.subr.mxu0 0.0
    %129 = vmatpush2.msra.mxu0 0.0
    %130 = vmatprep.subr.mxu0 0.0
    %131 = vmatpush2.msra.mxu0 0.0
    %132 = vmatprep.subr.mxu0 0.0
    %133 = vmatpush2.msra.mxu0 0.0
    %134 = vmatprep.subr.mxu0 0.0
    %135 = vmatpush2.msra.mxu0 0.0
    %136 = vmatprep.subr.mxu0 0.0
    %137 = vmatpush2.msra.mxu0 0.0
    %138 = vmatprep.subr.mxu0 0.0
    %139 = vmatpush2.msra.mxu0 0.0
    %140 = vmatprep.subr.mxu0 0.0
    %141 = vmatpush2.msra.mxu0 0.0
    %142 = vmatprep.subr.mxu0 0.0
    %143 = vmatpush2.msra.mxu0 0.0
    %144 = vmatprep.subr.mxu0 0.0
    %145 = vmatpush2.msra.mxu0 0.0
    %146 = vmatprep.subr.mxu0 0.0
    %147 = vmatpush2.msra.mxu0 0.0
    %148 = vmatprep.mubr.f32.mxu0 0.0
    %149 = vmatmul.mubr.f32.gmra.mxu0 %v51
    %v150 = vpop.f32.mrf.mxu0
    %v151 = vadd.f32 0.0, %v150
    %v152 = vpop.f32.mrf.mxu0
    %153 = vdwg.mxu0
    %v154 = vld [vmem:[%s2] sm:$0x1]
    %v155 = vld [vmem:[%s3] sm:$0x1]
    %v156 = vrot.slane %v151, 4
    %v157 = vadd.f32 %v151, %v156
    %v158 = vrot.slane %v157, 2
    %v159 = vadd.f32 %v157, %v158
    %v160 = vrot.slane %v159, 1
    %v161 = vadd.f32 %v159, %v160
    %v162 = vrcp.pop 8.0
    %v163 = vmul.f32 %v161, %v162
    %v164 = vsub.f32 %v151, %v163
    %v165 = vmul.f32 %v164, %v164
    %v166 = vrot.slane %v165, 4
    %v167 = vadd.f32 %v165, %v166
    %v168 = vrot.slane %v167, 2
    %v169 = vadd.f32 %v167, %v168
    %v170 = vrot.slane %v169, 1
    %v171 = vadd.f32 %v169, %v170
    %v172 = vmul.f32 %v171, %v162
    %v173 = vadd.f32 %v172, 1e-05
    %v174 = vrsqrt.pop %v173
    %v175 = vmul.f32 %v154, %v174
    %v177 = vlaneseq
    %v178 = vshrl.u32 %v177, 7
    %v179 = vsub.s32 0, %v178
    %v180 = vrot.slane %v175, %v179
    %v182 = vmul.f32 %v164, %v180
    %v184 = vlaneseq
    %v185 = vshrl.u32 %v184, 7
    %v186 = vsub.s32 0, %v185
    %v187 = vrot.slane %v155, %v186
    %v189 = vadd.f32 %v182, %v187
    %v190 = vmul.f32 %v189, 0.2
    %v191 = vmax.f32 %v189, %v190
    %v192 = vld [vmem:[%s4] sm:$0xff]
    %v193 = vld [vmem:[%s4 + $0x8] sm:$0xff]
    %v194 = vld [vmem:[%s4 + $0x10] sm:$0xff]
    %v195 = vld [vmem:[%s4 + $0x18] sm:$0xff]
    %v196 = vld [vmem:[%s4 + $0x20] sm:$0xff]
    %v197 = vld [vmem:[%s4 + $0x28] sm:$0xff]
    %v198 = vld [vmem:[%s4 + $0x30] sm:$0xff]
    %v199 = vld [vmem:[%s4 + $0x38] sm:$0xff]
    %v200 = vld [vmem:[%s4 + $0x40] sm:$0xff]
    %v201 = vld [vmem:[%s4 + $0x48] sm:$0xff]
    %v202 = vld [vmem:[%s4 + $0x50] sm:$0xff]
    %v203 = vld [vmem:[%s4 + $0x58] sm:$0xff]
    %v204 = vld [vmem:[%s4 + $0x60] sm:$0xff]
    %v205 = vld [vmem:[%s4 + $0x68] sm:$0xff]
    %v206 = vld [vmem:[%s4 + $0x70] sm:$0xff]
    %v207 = vld [vmem:[%s4 + $0x78] sm:$0xff]
    %v208 = vunpack.c.l.bf16 %v192
    %v209 = vunpack.c.h.bf16 %v192
    %v210 = vunpack.c.l.bf16 %v193
    %v211 = vunpack.c.h.bf16 %v193
    %v212 = vunpack.c.l.bf16 %v194
    %v213 = vunpack.c.h.bf16 %v194
    %v214 = vunpack.c.l.bf16 %v195
    %v215 = vunpack.c.h.bf16 %v195
    %v216 = vunpack.c.l.bf16 %v196
    %v217 = vunpack.c.h.bf16 %v196
    %v218 = vunpack.c.l.bf16 %v197
    %v219 = vunpack.c.h.bf16 %v197
    %v220 = vunpack.c.l.bf16 %v198
    %v221 = vunpack.c.h.bf16 %v198
    %v222 = vunpack.c.l.bf16 %v199
    %v223 = vunpack.c.h.bf16 %v199
    %v224 = vunpack.c.l.bf16 %v200
    %v225 = vunpack.c.h.bf16 %v200
    %v226 = vunpack.c.l.bf16 %v201
    %v227 = vunpack.c.h.bf16 %v201
    %v228 = vunpack.c.l.bf16 %v202
    %v229 = vunpack.c.h.bf16 %v202
    %v230 = vunpack.c.l.bf16 %v203
    %v231 = vunpack.c.h.bf16 %v203
    %v232 = vunpack.c.l.bf16 %v204
    %v233 = vunpack.c.h.bf16 %v204
    %v234 = vunpack.c.l.bf16 %v205
    %v235 = vunpack.c.h.bf16 %v205
    %v236 = vunpack.c.l.bf16 %v206
    %v237 = vunpack.c.h.bf16 %v206
    %v238 = vunpack.c.l.bf16 %v207
    %v239 = vunpack.c.h.bf16 %v207
    %240 = vmatprep.subr.mxu0 %v239
    %241 = vmatpush1.msra.mxu0 %v238
    %242 = vmatprep.subr.mxu0 %v237
    %243 = vmatpush1.msra.mxu0 %v236
    %244 = vmatprep.subr.mxu0 %v235
    %245 = vmatpush1.msra.mxu0 %v234
    %246 = vmatprep.subr.mxu0 %v233
    %247 = vmatpush1.msra.mxu0 %v232
    %248 = vmatprep.subr.mxu0 %v231
    %249 = vmatpush1.msra.mxu0 %v230
    %250 = vmatprep.subr.mxu0 %v229
    %251 = vmatpush1.msra.mxu0 %v228
    %252 = vmatprep.subr.mxu0 %v227
    %253 = vmatpush1.msra.mxu0 %v226
    %254 = vmatprep.subr.mxu0 %v225
    %255 = vmatpush1.msra.mxu0 %v224
    %256 = vmatprep.subr.mxu0 %v223
    %257 = vmatpush1.msra.mxu0 %v222
    %258 = vmatprep.subr.mxu0 %v221
    %259 = vmatpush1.msra.mxu0 %v220
    %260 = vmatprep.subr.mxu0 %v219
    %261 = vmatpush1.msra.mxu0 %v218
    %262 = vmatprep.subr.mxu0 %v217
    %263 = vmatpush1.msra.mxu0 %v216
    %264 = vmatprep.subr.mxu0 %v215
    %265 = vmatpush1.msra.mxu0 %v214
    %266 = vmatprep.subr.mxu0 %v213
    %267 = vmatpush1.msra.mxu0 %v212
    %268 = vmatprep.subr.mxu0 %v211
    %269 = vmatpush1.msra.mxu0 %v210
    %270 = vmatprep.subr.mxu0 %v209
    %271 = vmatpush1.msra.mxu0 %v208
    %272 = vmatprep.subr.mxu0 0.0
    %273 = vmatpush2.msra.mxu0 0.0
    %274 = vmatprep.subr.mxu0 0.0
    %275 = vmatpush2.msra.mxu0 0.0
    %276 = vmatprep.subr.mxu0 0.0
    %277 = vmatpush2.msra.mxu0 0.0
    %278 = vmatprep.subr.mxu0 0.0
    %279 = vmatpush2.msra.mxu0 0.0
    %280 = vmatprep.subr.mxu0 0.0
    %281 = vmatpush2.msra.mxu0 0.0
    %282 = vmatprep.subr.mxu0 0.0
    %283 = vmatpush2.msra.mxu0 0.0
    %284 = vmatprep.subr.mxu0 0.0
    %285 = vmatpush2.msra.mxu0 0.0
    %286 = vmatprep.subr.mxu0 0.0
    %287 = vmatpush2.msra.mxu0 0.0
    %288 = vmatprep.subr.mxu0 0.0
    %289 = vmatpush2.msra.mxu0 0.0
    %290 = vmatprep.subr.mxu0 0.0
    %291 = vmatpush2.msra.mxu0 0.0
    %292 = vmatprep.subr.mxu0 0.0
    %293 = vmatpush2.msra.mxu0 0.0
    %294 = vmatprep.subr.mxu0 0.0
    %295 = vmatpush2.msra.mxu0 0.0
    %296 = vmatprep.subr.mxu0 0.0
    %297 = vmatpush2.msra.mxu0 0.0
    %298 = vmatprep.subr.mxu0 0.0
    %299 = vmatpush2.msra.mxu0 0.0
    %300 = vmatprep.subr.mxu0 0.0
    %301 = vmatpush2.msra.mxu0 0.0
    %302 = vmatprep.subr.mxu0 0.0
    %303 = vmatpush2.msra.mxu0 0.0
    %304 = vmatprep.mubr.f32.mxu0 0.0
    %305 = vmatmul.mubr.f32.gmra.mxu0 %v191
    %v306 = vpop.f32.mrf.mxu0
    %v307 = vadd.f32 0.0, %v306
    %v308 = vpop.f32.mrf.mxu0
    %v309 = vadd.f32 0.0, %v308
    %310 = vdwg.mxu0
    %v311 = vld [vmem:[%s5] sm:$0x3]
    %v312 = vld [vmem:[%s6] sm:$0x3]
    %v313 = vrot.slane %v307, 4
    %v314 = vadd.f32 %v307, %v313
    %v315 = vrot.slane %v314, 2
    %v316 = vadd.f32 %v314, %v315
    %v317 = vrot.slane %v316, 1
    %v318 = vadd.f32 %v316, %v317
    %v319 = vrot.slane %v309, 4
    %v320 = vadd.f32 %v309, %v319
    %v321 = vrot.slane %v320, 2
    %v322 = vadd.f32 %v320, %v321
    %v323 = vrot.slane %v322, 1
    %v324 = vadd.f32 %v322, %v323
    %v325 = vmul.f32 %v318, %v162
    %v326 = vmul.f32 %v324, %v162
    %v327 = vsub.f32 %v307, %v325
    %v328 = vsub.f32 %v309, %v326
    %v329 = vmul.f32 %v327, %v327
    %v330 = vmul.f32 %v328, %v328
    %v331 = vrot.slane %v329, 4
    %v332 = vadd.f32 %v329, %v331
    %v333 = vrot.slane %v332, 2
    %v334 = vadd.f32 %v332, %v333
    %v335 = vrot.slane %v334, 1
    %v336 = vadd.f32 %v334, %v335
    %v337 = vrot.slane %v330, 4
    %v338 = vadd.f32 %v330, %v337
    %v339 = vrot.slane %v338, 2
    %v340 = vadd.f32 %v338, %v339
    %v341 = vrot.slane %v340, 1
    %v342 = vadd.f32 %v340, %v341
    %v343 = vmul.f32 %v336, %v162
    %v344 = vmul.f32 %v342, %v162
    %v345 = vadd.f32 %v343, 1e-05
    %v346 = vadd.f32 %v344, 1e-05
    %v347 = vrsqrt.pop %v345
    %v348 = vrsqrt.pop %v346
    %v351 = vcombine.low %v347, %v348
    %v353 = vunpack.c.l.s4 1966171168
    %v354 = vunpack.c.0.s8 %v353
    %v355 = vlaneseq
    %v356 = vshrl.u32 %v355, 7
    %v357 = vsub.s32 %v354, %v356
    %v358 = vrot.slane %v351, %v357
    %v360 = vunpack.c.l.s4 1966171168
    %v361 = vunpack.c.0.s8 %v360
    %v362 = vlaneseq
    %v363 = vshrl.u32 %v362, 7
    %v364 = vsub.s32 %v361, %v363
    %v365 = vrot.slane %v358, %v364
    %v367 = vmul.f32 %v311, %v365
    %v369 = vlaneseq
    %v370 = vshrl.u32 %v369, 7
    %v371 = vsub.s32 0, %v370
    %v372 = vrot.slane %v367, %v371
    %v373 = vlaneseq
    %v374 = vshrl.u32 %v373, 7
    %v375 = vsub.s32 1, %v374
    %v376 = vrot.slane %v367, %v375
    %v379 = vmul.f32 %v327, %v372
    %v380 = vmul.f32 %v328, %v376
    %v382 = vlaneseq
    %v383 = vshrl.u32 %v382, 7
    %v384 = vsub.s32 0, %v383
    %v385 = vrot.slane %v312, %v384
    %v386 = vlaneseq
    %v387 = vshrl.u32 %v386, 7
    %v388 = vsub.s32 1, %v387
    %v389 = vrot.slane %v312, %v388
    %v392 = vadd.f32 %v379, %v385
    %v393 = vadd.f32 %v380, %v389
    %v394 = vmul.f32 %v392, 0.2
    %v395 = vmul.f32 %v393, 0.2
    %v396 = vmax.f32 %v392, %v394
    %v397 = vmax.f32 %v393, %v395
    %v398 = vld [vmem:[%s7] sm:$0xff]
    %v399 = vld [vmem:[%s7 + $0x8] sm:$0xff]
    %v400 = vld [vmem:[%s7 + $0x10] sm:$0xff]
    %v401 = vld [vmem:[%s7 + $0x18] sm:$0xff]
    %v402 = vld [vmem:[%s7 + $0x20] sm:$0xff]
    %v403 = vld [vmem:[%s7 + $0x28] sm:$0xff]
    %v404 = vld [vmem:[%s7 + $0x30] sm:$0xff]
    %v405 = vld [vmem:[%s7 + $0x38] sm:$0xff]
    %v406 = vld [vmem:[%s7 + $0x40] sm:$0xff]
    %v407 = vld [vmem:[%s7 + $0x48] sm:$0xff]
    %v408 = vld [vmem:[%s7 + $0x50] sm:$0xff]
    %v409 = vld [vmem:[%s7 + $0x58] sm:$0xff]
    %v410 = vld [vmem:[%s7 + $0x60] sm:$0xff]
    %v411 = vld [vmem:[%s7 + $0x68] sm:$0xff]
    %v412 = vld [vmem:[%s7 + $0x70] sm:$0xff]
    %v413 = vld [vmem:[%s7 + $0x78] sm:$0xff]
    %v414 = vld [vmem:[%s7 + $0x80] sm:$0xff]
    %v415 = vld [vmem:[%s7 + $0x88] sm:$0xff]
    %v416 = vld [vmem:[%s7 + $0x90] sm:$0xff]
    %v417 = vld [vmem:[%s7 + $0x98] sm:$0xff]
    %v418 = vld [vmem:[%s7 + $0xa0] sm:$0xff]
    %v419 = vld [vmem:[%s7 + $0xa8] sm:$0xff]
    %v420 = vld [vmem:[%s7 + $0xb0] sm:$0xff]
    %v421 = vld [vmem:[%s7 + $0xb8] sm:$0xff]
    %v422 = vld [vmem:[%s7 + $0xc0] sm:$0xff]
    %v423 = vld [vmem:[%s7 + $0xc8] sm:$0xff]
    %v424 = vld [vmem:[%s7 + $0xd0] sm:$0xff]
    %v425 = vld [vmem:[%s7 + $0xd8] sm:$0xff]
    %v426 = vld [vmem:[%s7 + $0xe0] sm:$0xff]
    %v427 = vld [vmem:[%s7 + $0xe8] sm:$0xff]
    %v428 = vld [vmem:[%s7 + $0xf0] sm:$0xff]
    %v429 = vld [vmem:[%s7 + $0xf8] sm:$0xff]
    %v430 = vld [vmem:[%s7 + $0x100] sm:$0xff]
    %v431 = vld [vmem:[%s7 + $0x108] sm:$0xff]
    %v432 = vld [vmem:[%s7 + $0x110] sm:$0xff]
    %v433 = vld [vmem:[%s7 + $0x118] sm:$0xff]
    %v434 = vld [vmem:[%s7 + $0x120] sm:$0xff]
    %v435 = vld [vmem:[%s7 + $0x128] sm:$0xff]
    %v436 = vld [vmem:[%s7 + $0x130] sm:$0xff]
    %v437 = vld [vmem:[%s7 + $0x138] sm:$0xff]
    %v438 = vld [vmem:[%s7 + $0x140] sm:$0xff]
    %v439 = vld [vmem:[%s7 + $0x148] sm:$0xff]
    %v440 = vld [vmem:[%s7 + $0x150] sm:$0xff]
    %v441 = vld [vmem:[%s7 + $0x158] sm:$0xff]
    %v442 = vld [vmem:[%s7 + $0x160] sm:$0xff]
    %v443 = vld [vmem:[%s7 + $0x168] sm:$0xff]
    %v444 = vld [vmem:[%s7 + $0x170] sm:$0xff]
    %v445 = vld [vmem:[%s7 + $0x178] sm:$0xff]
    %v446 = vld [vmem:[%s7 + $0x180] sm:$0xff]
    %v447 = vld [vmem:[%s7 + $0x188] sm:$0xff]
    %v448 = vld [vmem:[%s7 + $0x190] sm:$0xff]
    %v449 = vld [vmem:[%s7 + $0x198] sm:$0xff]
    %v450 = vld [vmem:[%s7 + $0x1a0] sm:$0xff]
    %v451 = vld [vmem:[%s7 + $0x1a8] sm:$0xff]
    %v452 = vld [vmem:[%s7 + $0x1b0] sm:$0xff]
    %v453 = vld [vmem:[%s7 + $0x1b8] sm:$0xff]
    %v454 = vld [vmem:[%s7 + $0x1c0] sm:$0xff]
    %v455 = vld [vmem:[%s7 + $0x1c8] sm:$0xff]
    %v456 = vld [vmem:[%s7 + $0x1d0] sm:$0xff]
    %v457 = vld [vmem:[%s7 + $0x1d8] sm:$0xff]
    %v458 = vld [vmem:[%s7 + $0x1e0] sm:$0xff]
    %v459 = vld [vmem:[%s7 + $0x1e8] sm:$0xff]
    %v460 = vld [vmem:[%s7 + $0x1f0] sm:$0xff]
    %v461 = vld [vmem:[%s7 + $0x1f8] sm:$0xff]
    %v462 = vunpack.c.l.bf16 %v398
    %v463 = vunpack.c.h.bf16 %v398
    %v464 = vunpack.c.l.bf16 %v399
    %v465 = vunpack.c.h.bf16 %v399
    %v466 = vunpack.c.l.bf16 %v400
    %v467 = vunpack.c.h.bf16 %v400
    %v468 = vunpack.c.l.bf16 %v401
    %v469 = vunpack.c.h.bf16 %v401
    %v470 = vunpack.c.l.bf16 %v402
    %v471 = vunpack.c.h.bf16 %v402
    %v472 = vunpack.c.l.bf16 %v403
    %v473 = vunpack.c.h.bf16 %v403
    %v474 = vunpack.c.l.bf16 %v404
    %v475 = vunpack.c.h.bf16 %v404
    %v476 = vunpack.c.l.bf16 %v405
    %v477 = vunpack.c.h.bf16 %v405
    %v478 = vunpack.c.l.bf16 %v406
    %v479 = vunpack.c.h.bf16 %v406
    %v480 = vunpack.c.l.bf16 %v407
    %v481 = vunpack.c.h.bf16 %v407
    %v482 = vunpack.c.l.bf16 %v408
    %v483 = vunpack.c.h.bf16 %v408
    %v484 = vunpack.c.l.bf16 %v409
    %v485 = vunpack.c.h.bf16 %v409
    %v486 = vunpack.c.l.bf16 %v410
    %v487 = vunpack.c.h.bf16 %v410
    %v488 = vunpack.c.l.bf16 %v411
    %v489 = vunpack.c.h.bf16 %v411
    %v490 = vunpack.c.l.bf16 %v412
    %v491 = vunpack.c.h.bf16 %v412
    %v492 = vunpack.c.l.bf16 %v413
    %v493 = vunpack.c.h.bf16 %v413
    %v494 = vunpack.c.l.bf16 %v414
    %v495 = vunpack.c.h.bf16 %v414
    %v496 = vunpack.c.l.bf16 %v415
    %v497 = vunpack.c.h.bf16 %v415
    %v498 = vunpack.c.l.bf16 %v416
    %v499 = vunpack.c.h.bf16 %v416
    %v500 = vunpack.c.l.bf16 %v417
    %v501 = vunpack.c.h.bf16 %v417
    %v502 = vunpack.c.l.bf16 %v418
    %v503 = vunpack.c.h.bf16 %v418
    %v504 = vunpack.c.l.bf16 %v419
    %v505 = vunpack.c.h.bf16 %v419
    %v506 = vunpack.c.l.bf16 %v420
    %v507 = vunpack.c.h.bf16 %v420
    %v508 = vunpack.c.l.bf16 %v421
    %v509 = vunpack.c.h.bf16 %v421
    %v510 = vunpack.c.l.bf16 %v422
    %v511 = vunpack.c.h.bf16 %v422
    %v512 = vunpack.c.l.bf16 %v423
    %v513 = vunpack.c.h.bf16 %v423
    %v514 = vunpack.c.l.bf16 %v424
    %v515 = vunpack.c.h.bf16 %v424
    %v516 = vunpack.c.l.bf16 %v425
    %v517 = vunpack.c.h.bf16 %v425
    %v518 = vunpack.c.l.bf16 %v426
    %v519 = vunpack.c.h.bf16 %v426
    %v520 = vunpack.c.l.bf16 %v427
    %v521 = vunpack.c.h.bf16 %v427
    %v522 = vunpack.c.l.bf16 %v428
    %v523 = vunpack.c.h.bf16 %v428
    %v524 = vunpack.c.l.bf16 %v429
    %v525 = vunpack.c.h.bf16 %v429
    %v526 = vunpack.c.l.bf16 %v430
    %v527 = vunpack.c.h.bf16 %v430
    %v528 = vunpack.c.l.bf16 %v431
    %v529 = vunpack.c.h.bf16 %v431
    %v530 = vunpack.c.l.bf16 %v432
    %v531 = vunpack.c.h.bf16 %v432
    %v532 = vunpack.c.l.bf16 %v433
    %v533 = vunpack.c.h.bf16 %v433
    %v534 = vunpack.c.l.bf16 %v434
    %v535 = vunpack.c.h.bf16 %v434
    %v536 = vunpack.c.l.bf16 %v435
    %v537 = vunpack.c.h.bf16 %v435
    %v538 = vunpack.c.l.bf16 %v436
    %v539 = vunpack.c.h.bf16 %v436
    %v540 = vunpack.c.l.bf16 %v437
    %v541 = vunpack.c.h.bf16 %v437
    %v542 = vunpack.c.l.bf16 %v438
    %v543 = vunpack.c.h.bf16 %v438
    %v544 = vunpack.c.l.bf16 %v439
    %v545 = vunpack.c.h.bf16 %v439
    %v546 = vunpack.c.l.bf16 %v440
    %v547 = vunpack.c.h.bf16 %v440
    %v548 = vunpack.c.l.bf16 %v441
    %v549 = vunpack.c.h.bf16 %v441
    %v550 = vunpack.c.l.bf16 %v442
    %v551 = vunpack.c.h.bf16 %v442
    %v552 = vunpack.c.l.bf16 %v443
    %v553 = vunpack.c.h.bf16 %v443
    %v554 = vunpack.c.l.bf16 %v444
    %v555 = vunpack.c.h.bf16 %v444
    %v556 = vunpack.c.l.bf16 %v445
    %v557 = vunpack.c.h.bf16 %v445
    %v558 = vunpack.c.l.bf16 %v446
    %v559 = vunpack.c.h.bf16 %v446
    %v560 = vunpack.c.l.bf16 %v447
    %v561 = vunpack.c.h.bf16 %v447
    %v562 = vunpack.c.l.bf16 %v448
    %v563 = vunpack.c.h.bf16 %v448
    %v564 = vunpack.c.l.bf16 %v449
    %v565 = vunpack.c.h.bf16 %v449
    %v566 = vunpack.c.l.bf16 %v450
    %v567 = vunpack.c.h.bf16 %v450
    %v568 = vunpack.c.l.bf16 %v451
    %v569 = vunpack.c.h.bf16 %v451
    %v570 = vunpack.c.l.bf16 %v452
    %v571 = vunpack.c.h.bf16 %v452
    %v572 = vunpack.c.l.bf16 %v453
    %v573 = vunpack.c.h.bf16 %v453
    %v574 = vunpack.c.l.bf16 %v454
    %v575 = vunpack.c.h.bf16 %v454
    %v576 = vunpack.c.l.bf16 %v455
    %v577 = vunpack.c.h.bf16 %v455
    %v578 = vunpack.c.l.bf16 %v456
    %v579 = vunpack.c.h.bf16 %v456
    %v580 = vunpack.c.l.bf16 %v457
    %v581 = vunpack.c.h.bf16 %v457
    %v582 = vunpack.c.l.bf16 %v458
    %v583 = vunpack.c.h.bf16 %v458
    %v584 = vunpack.c.l.bf16 %v459
    %v585 = vunpack.c.h.bf16 %v459
    %v586 = vunpack.c.l.bf16 %v460
    %v587 = vunpack.c.h.bf16 %v460
    %v588 = vunpack.c.l.bf16 %v461
    %v589 = vunpack.c.h.bf16 %v461
    %590 = vmatprep.subr.mxu0 %v523
    %591 = vmatpush1.msra.mxu0 %v522
    %592 = vmatprep.subr.mxu0 %v519
    %593 = vmatpush1.msra.mxu0 %v518
    %594 = vmatprep.subr.mxu0 %v515
    %595 = vmatpush1.msra.mxu0 %v514
    %596 = vmatprep.subr.mxu0 %v511
    %597 = vmatpush1.msra.mxu0 %v510
    %598 = vmatprep.subr.mxu0 %v507
    %599 = vmatpush1.msra.mxu0 %v506
    %600 = vmatprep.subr.mxu0 %v503
    %601 = vmatpush1.msra.mxu0 %v502
    %602 = vmatprep.subr.mxu0 %v499
    %603 = vmatpush1.msra.mxu0 %v498
    %604 = vmatprep.subr.mxu0 %v495
    %605 = vmatpush1.msra.mxu0 %v494
    %606 = vmatprep.subr.mxu0 %v491
    %607 = vmatpush1.msra.mxu0 %v490
    %608 = vmatprep.subr.mxu0 %v487
    %609 = vmatpush1.msra.mxu0 %v486
    %610 = vmatprep.subr.mxu0 %v483
    %611 = vmatpush1.msra.mxu0 %v482
    %612 = vmatprep.subr.mxu0 %v479
    %613 = vmatpush1.msra.mxu0 %v478
    %614 = vmatprep.subr.mxu0 %v475
    %615 = vmatpush1.msra.mxu0 %v474
    %616 = vmatprep.subr.mxu0 %v471
    %617 = vmatpush1.msra.mxu0 %v470
    %618 = vmatprep.subr.mxu0 %v467
    %619 = vmatpush1.msra.mxu0 %v466
    %620 = vmatprep.subr.mxu0 %v463
    %621 = vmatpush1.msra.mxu0 %v462
    %622 = vmatprep.subr.mxu0 %v587
    %623 = vmatpush2.msra.mxu0 %v586
    %624 = vmatprep.subr.mxu0 %v583
    %625 = vmatpush2.msra.mxu0 %v582
    %626 = vmatprep.subr.mxu0 %v579
    %627 = vmatpush2.msra.mxu0 %v578
    %628 = vmatprep.subr.mxu0 %v575
    %629 = vmatpush2.msra.mxu0 %v574
    %630 = vmatprep.subr.mxu0 %v571
    %631 = vmatpush2.msra.mxu0 %v570
    %632 = vmatprep.subr.mxu0 %v567
    %633 = vmatpush2.msra.mxu0 %v566
    %634 = vmatprep.subr.mxu0 %v563
    %635 = vmatpush2.msra.mxu0 %v562
    %636 = vmatprep.subr.mxu0 %v559
    %637 = vmatpush2.msra.mxu0 %v558
    %638 = vmatprep.subr.mxu0 %v555
    %639 = vmatpush2.msra.mxu0 %v554
    %640 = vmatprep.subr.mxu0 %v551
    %641 = vmatpush2.msra.mxu0 %v550
    %642 = vmatprep.subr.mxu0 %v547
    %643 = vmatpush2.msra.mxu0 %v546
    %644 = vmatprep.subr.mxu0 %v543
    %645 = vmatpush2.msra.mxu0 %v542
    %646 = vmatprep.subr.mxu0 %v539
    %647 = vmatpush2.msra.mxu0 %v538
    %648 = vmatprep.subr.mxu0 %v535
    %649 = vmatpush2.msra.mxu0 %v534
    %650 = vmatprep.subr.mxu0 %v531
    %651 = vmatpush2.msra.mxu0 %v530
    %652 = vmatprep.subr.mxu0 %v527
    %653 = vmatpush2.msra.mxu0 %v526
    %654 = vmatprep.mubr.f32.mxu0 %v397
    %655 = vmatmul.mubr.f32.gmra.mxu0 %v396
    %v656 = vpop.f32.mrf.mxu0
    %v657 = vadd.f32 0.0, %v656
    %v658 = vpop.f32.mrf.mxu0
    %v659 = vadd.f32 0.0, %v658
    %660 = vdwg.mxu0
    %661 = vmatprep.subr.mxu0 %v525
    %662 = vmatpush1.msra.mxu0 %v524
    %663 = vmatprep.subr.mxu0 %v521
    %664 = vmatpush1.msra.mxu0 %v520
    %665 = vmatprep.subr.mxu0 %v517
    %666 = vmatpush1.msra.mxu0 %v516
    %667 = vmatprep.subr.mxu0 %v513
    %668 = vmatpush1.msra.mxu0 %v512
    %669 = vmatprep.subr.mxu0 %v509
    %670 = vmatpush1.msra.mxu0 %v508
    %671 = vmatprep.subr.mxu0 %v505
    %672 = vmatpush1.msra.mxu0 %v504
    %673 = vmatprep.subr.mxu0 %v501
    %674 = vmatpush1.msra.mxu0 %v500
    %675 = vmatprep.subr.mxu0 %v497
    %676 = vmatpush1.msra.mxu0 %v496
    %677 = vmatprep.subr.mxu0 %v493
    %678 = vmatpush1.msra.mxu0 %v492
    %679 = vmatprep.subr.mxu0 %v489
    %680 = vmatpush1.msra.mxu0 %v488
    %681 = vmatprep.subr.mxu0 %v485
    %682 = vmatpush1.msra.mxu0 %v484
    %683 = vmatprep.subr.mxu0 %v481
    %684 = vmatpush1.msra.mxu0 %v480
    %685 = vmatprep.subr.mxu0 %v477
    %686 = vmatpush1.msra.mxu0 %v476
    %687 = vmatprep.subr.mxu0 %v473
    %688 = vmatpush1.msra.mxu0 %v472
    %689 = vmatprep.subr.mxu0 %v469
    %690 = vmatpush1.msra.mxu0 %v468
    %691 = vmatprep.subr.mxu0 %v465
    %692 = vmatpush1.msra.mxu0 %v464
    %693 = vmatprep.subr.mxu0 %v589
    %694 = vmatpush2.msra.mxu0 %v588
    %695 = vmatprep.subr.mxu0 %v585
    %696 = vmatpush2.msra.mxu0 %v584
    %697 = vmatprep.subr.mxu0 %v581
    %698 = vmatpush2.msra.mxu0 %v580
    %699 = vmatprep.subr.mxu0 %v577
    %700 = vmatpush2.msra.mxu0 %v576
    %701 = vmatprep.subr.mxu0 %v573
    %702 = vmatpush2.msra.mxu0 %v572
    %703 = vmatprep.subr.mxu0 %v569
    %704 = vmatpush2.msra.mxu0 %v568
    %705 = vmatprep.subr.mxu0 %v565
    %706 = vmatpush2.msra.mxu0 %v564
    %707 = vmatprep.subr.mxu0 %v561
    %708 = vmatpush2.msra.mxu0 %v560
    %709 = vmatprep.subr.mxu0 %v557
    %710 = vmatpush2.msra.mxu0 %v556
    %711 = vmatprep.subr.mxu0 %v553
    %712 = vmatpush2.msra.mxu0 %v552
    %713 = vmatprep.subr.mxu0 %v549
    %714 = vmatpush2.msra.mxu0 %v548
    %715 = vmatprep.subr.mxu0 %v545
    %716 = vmatpush2.msra.mxu0 %v544
    %717 = vmatprep.subr.mxu0 %v541
    %718 = vmatpush2.msra.mxu0 %v540
    %719 = vmatprep.subr.mxu0 %v537
    %720 = vmatpush2.msra.mxu0 %v536
    %721 = vmatprep.subr.mxu0 %v533
    %722 = vmatpush2.msra.mxu0 %v532
    %723 = vmatprep.subr.mxu0 %v529
    %724 = vmatpush2.msra.mxu0 %v528
    %725 = vmatprep.mubr.f32.mxu0 %v397
    %726 = vmatmul.mubr.f32.gmra.mxu0 %v396
    %v727 = vpop.f32.mrf.mxu0
    %v728 = vadd.f32 0.0, %v727
    %v729 = vpop.f32.mrf.mxu0
    %v730 = vadd.f32 0.0, %v729
    %731 = vdwg.mxu0
    %v732 = vld [vmem:[%s8] sm:$0xf]
    %v733 = vld [vmem:[%s9] sm:$0xf]
    %v734 = vrot.slane %v657, 4
    %v735 = vadd.f32 %v657, %v734
    %v736 = vrot.slane %v735, 2
    %v737 = vadd.f32 %v735, %v736
    %v738 = vrot.slane %v737, 1
    %v739 = vadd.f32 %v737, %v738
    %v740 = vrot.slane %v659, 4
    %v741 = vadd.f32 %v659, %v740
    %v742 = vrot.slane %v741, 2
    %v743 = vadd.f32 %v741, %v742
    %v744 = vrot.slane %v743, 1
    %v745 = vadd.f32 %v743, %v744
    %v746 = vrot.slane %v728, 4
    %v747 = vadd.f32 %v728, %v746
    %v748 = vrot.slane %v747, 2
    %v749 = vadd.f32 %v747, %v748
    %v750 = vrot.slane %v749, 1
    %v751 = vadd.f32 %v749, %v750
    %v752 = vrot.slane %v730, 4
    %v753 = vadd.f32 %v730, %v752
    %v754 = vrot.slane %v753, 2
    %v755 = vadd.f32 %v753, %v754
    %v756 = vrot.slane %v755, 1
    %v757 = vadd.f32 %v755, %v756
    %v758 = vmul.f32 %v739, %v162
    %v759 = vmul.f32 %v745, %v162
    %v760 = vmul.f32 %v751, %v162
    %v761 = vmul.f32 %v757, %v162
    %v762 = vsub.f32 %v657, %v758
    %v763 = vsub.f32 %v659, %v759
    %v764 = vsub.f32 %v728, %v760
    %v765 = vsub.f32 %v730, %v761
    %v766 = vmul.f32 %v762, %v762
    %v767 = vmul.f32 %v763, %v763
    %v768 = vmul.f32 %v764, %v764
    %v769 = vmul.f32 %v765, %v765
    %v770 = vrot.slane %v766, 4
    %v771 = vadd.f32 %v766, %v770
    %v772 = vrot.slane %v771, 2
    %v773 = vadd.f32 %v771, %v772
    %v774 = vrot.slane %v773, 1
    %v775 = vadd.f32 %v773, %v774
    %v776 = vrot.slane %v767, 4
    %v777 = vadd.f32 %v767, %v776
    %v778 = vrot.slane %v777, 2
    %v779 = vadd.f32 %v777, %v778
    %v780 = vrot.slane %v779, 1
    %v781 = vadd.f32 %v779, %v780
    %v782 = vrot.slane %v768, 4
    %v783 = vadd.f32 %v768, %v782
    %v784 = vrot.slane %v783, 2
    %v785 = vadd.f32 %v783, %v784
    %v786 = vrot.slane %v785, 1
    %v787 = vadd.f32 %v785, %v786
    %v788 = vrot.slane %v769, 4
    %v789 = vadd.f32 %v769, %v788
    %v790 = vrot.slane %v789, 2
    %v791 = vadd.f32 %v789, %v790
    %v792 = vrot.slane %v791, 1
    %v793 = vadd.f32 %v791, %v792
    %v794 = vmul.f32 %v775, %v162
    %v795 = vmul.f32 %v781, %v162
    %v796 = vmul.f32 %v787, %v162
    %v797 = vmul.f32 %v793, %v162
    %v798 = vadd.f32 %v794, 1e-05
    %v799 = vadd.f32 %v795, 1e-05
    %v800 = vadd.f32 %v796, 1e-05
    %v801 = vadd.f32 %v797, 1e-05
    %v802 = vrsqrt.pop %v798
    %v803 = vrsqrt.pop %v799
    %v804 = vrsqrt.pop %v800
    %v805 = vrsqrt.pop %v801
    %v810 = vcombine.low %v802, %v803
    %v811 = vcombine.low %v804, %v805
    %v813 = vunpack.c.l.s4 1966171168
    %v814 = vunpack.c.0.s8 %v813
    %v815 = vlaneseq
    %v816 = vshrl.u32 %v815, 7
    %v817 = vsub.s32 %v814, %v816
    %v818 = vrot.slane %v810, %v817
    %v820 = vunpack.c.l.s4 1966171168
    %v821 = vunpack.c.0.s8 %v820
    %v822 = vlaneseq
    %v823 = vshrl.u32 %v822, 7
    %v824 = vsub.s32 %v821, %v823
    %v825 = vrot.slane %v811, %v824
    %v826 = vcombine.low %v818, %v825
    %v828 = vunpack.c.l.s4 1966171168
    %v829 = vunpack.c.0.s8 %v828
    %v830 = vlaneseq
    %v831 = vshrl.u32 %v830, 7
    %v832 = vsub.s32 %v829, %v831
    %v833 = vrot.slane %v826, %v832
    %v835 = vmul.f32 %v732, %v833
    %v837 = vlaneseq
    %v838 = vshrl.u32 %v837, 7
    %v839 = vsub.s32 0, %v838
    %v840 = vrot.slane %v835, %v839
    %v841 = vlaneseq
    %v842 = vshrl.u32 %v841, 7
    %v843 = vsub.s32 1, %v842
    %v844 = vrot.slane %v835, %v843
    %v845 = vlaneseq
    %v846 = vshrl.u32 %v845, 7
    %v847 = vsub.s32 2, %v846
    %v848 = vrot.slane %v835, %v847
    %v849 = vlaneseq
    %v850 = vshrl.u32 %v849, 7
    %v851 = vsub.s32 3, %v850
    %v852 = vrot.slane %v835, %v851
    %v857 = vmul.f32 %v762, %v840
    %v858 = vmul.f32 %v763, %v844
    %v859 = vmul.f32 %v764, %v848
    %v860 = vmul.f32 %v765, %v852
    %v862 = vlaneseq
    %v863 = vshrl.u32 %v862, 7
    %v864 = vsub.s32 0, %v863
    %v865 = vrot.slane %v733, %v864
    %v866 = vlaneseq
    %v867 = vshrl.u32 %v866, 7
    %v868 = vsub.s32 1, %v867
    %v869 = vrot.slane %v733, %v868
    %v870 = vlaneseq
    %v871 = vshrl.u32 %v870, 7
    %v872 = vsub.s32 2, %v871
    %v873 = vrot.slane %v733, %v872
    %v874 = vlaneseq
    %v875 = vshrl.u32 %v874, 7
    %v876 = vsub.s32 3, %v875
    %v877 = vrot.slane %v733, %v876
    %v882 = vadd.f32 %v857, %v865
    %v883 = vadd.f32 %v858, %v869
    %v884 = vadd.f32 %v859, %v873
    %v885 = vadd.f32 %v860, %v877
    %v886 = vmul.f32 %v882, 0.2
    %v887 = vmul.f32 %v883, 0.2
    %v888 = vmul.f32 %v884, 0.2
    %v889 = vmul.f32 %v885, 0.2
    %v890 = vmax.f32 %v882, %v886
    %v891 = vmax.f32 %v883, %v887
    %v892 = vmax.f32 %v884, %v888
    %v893 = vmax.f32 %v885, %v889
    %v894 = vld [vmem:[%s10] sm:$0xff]
    %v895 = vld [vmem:[%s10 + $0x8] sm:$0xff]
    %v896 = vld [vmem:[%s10 + $0x10] sm:$0xff]
    %v897 = vld [vmem:[%s10 + $0x18] sm:$0xff]
    %v898 = vld [vmem:[%s10 + $0x20] sm:$0xff]
    %v899 = vld [vmem:[%s10 + $0x28] sm:$0xff]
    %v900 = vld [vmem:[%s10 + $0x30] sm:$0xff]
    %v901 = vld [vmem:[%s10 + $0x38] sm:$0xff]
    %v902 = vld [vmem:[%s10 + $0x40] sm:$0xff]
    %v903 = vld [vmem:[%s10 + $0x48] sm:$0xff]
    %v904 = vld [vmem:[%s10 + $0x50] sm:$0xff]
    %v905 = vld [vmem:[%s10 + $0x58] sm:$0xff]
    %v906 = vld [vmem:[%s10 + $0x60] sm:$0xff]
    %v907 = vld [vmem:[%s10 + $0x68] sm:$0xff]
    %v908 = vld [vmem:[%s10 + $0x70] sm:$0xff]
    %v909 = vld [vmem:[%s10 + $0x78] sm:$0xff]
    %v910 = vld [vmem:[%s10 + $0x80] sm:$0xff]
    %v911 = vld [vmem:[%s10 + $0x88] sm:$0xff]
    %v912 = vld [vmem:[%s10 + $0x90] sm:$0xff]
    %v913 = vld [vmem:[%s10 + $0x98] sm:$0xff]
    %v914 = vld [vmem:[%s10 + $0xa0] sm:$0xff]
    %v915 = vld [vmem:[%s10 + $0xa8] sm:$0xff]
    %v916 = vld [vmem:[%s10 + $0xb0] sm:$0xff]
    %v917 = vld [vmem:[%s10 + $0xb8] sm:$0xff]
    %v918 = vld [vmem:[%s10 + $0xc0] sm:$0xff]
    %v919 = vld [vmem:[%s10 + $0xc8] sm:$0xff]
    %v920 = vld [vmem:[%s10 + $0xd0] sm:$0xff]
    %v921 = vld [vmem:[%s10 + $0xd8] sm:$0xff]
    %v922 = vld [vmem:[%s10 + $0xe0] sm:$0xff]
    %v923 = vld [vmem:[%s10 + $0xe8] sm:$0xff]
    %v924 = vld [vmem:[%s10 + $0xf0] sm:$0xff]
    %v925 = vld [vmem:[%s10 + $0xf8] sm:$0xff]
    %v926 = vld [vmem:[%s10 + $0x100] sm:$0xff]
    %v927 = vld [vmem:[%s10 + $0x108] sm:$0xff]
    %v928 = vld [vmem:[%s10 + $0x110] sm:$0xff]
    %v929 = vld [vmem:[%s10 + $0x118] sm:$0xff]
    %v930 = vld [vmem:[%s10 + $0x120] sm:$0xff]
    %v931 = vld [vmem:[%s10 + $0x128] sm:$0xff]
    %v932 = vld [vmem:[%s10 + $0x130] sm:$0xff]
    %v933 = vld [vmem:[%s10 + $0x138] sm:$0xff]
    %v934 = vld [vmem:[%s10 + $0x140] sm:$0xff]
    %v935 = vld [vmem:[%s10 + $0x148] sm:$0xff]
    %v936 = vld [vmem:[%s10 + $0x150] sm:$0xff]
    %v937 = vld [vmem:[%s10 + $0x158] sm:$0xff]
    %v938 = vld [vmem:[%s10 + $0x160] sm:$0xff]
    %v939 = vld [vmem:[%s10 + $0x168] sm:$0xff]
    %v940 = vld [vmem:[%s10 + $0x170] sm:$0xff]
    %v941 = vld [vmem:[%s10 + $0x178] sm:$0xff]
    %v942 = vld [vmem:[%s10 + $0x180] sm:$0xff]
    %v943 = vld [vmem:[%s10 + $0x188] sm:$0xff]
    %v944 = vld [vmem:[%s10 + $0x190] sm:$0xff]
    %v945 = vld [vmem:[%s10 + $0x198] sm:$0xff]
    %v946 = vld [vmem:[%s10 + $0x1a0] sm:$0xff]
    %v947 = vld [vmem:[%s10 + $0x1a8] sm:$0xff]
    %v948 = vld [vmem:[%s10 + $0x1b0] sm:$0xff]
    %v949 = vld [vmem:[%s10 + $0x1b8] sm:$0xff]
    %v950 = vld [vmem:[%s10 + $0x1c0] sm:$0xff]
    %v951 = vld [vmem:[%s10 + $0x1c8] sm:$0xff]
    %v952 = vld [vmem:[%s10 + $0x1d0] sm:$0xff]
    %v953 = vld [vmem:[%s10 + $0x1d8] sm:$0xff]
    %v954 = vld [vmem:[%s10 + $0x1e0] sm:$0xff]
    %v955 = vld [vmem:[%s10 + $0x1e8] sm:$0xff]
    %v956 = vld [vmem:[%s10 + $0x1f0] sm:$0xff]
    %v957 = vld [vmem:[%s10 + $0x1f8] sm:$0xff]
    %v958 = vld [vmem:[%s10 + $0x200] sm:$0xff]
    %v959 = vld [vmem:[%s10 + $0x208] sm:$0xff]
    %v960 = vld [vmem:[%s10 + $0x210] sm:$0xff]
    %v961 = vld [vmem:[%s10 + $0x218] sm:$0xff]
    %v962 = vld [vmem:[%s10 + $0x220] sm:$0xff]
    %v963 = vld [vmem:[%s10 + $0x228] sm:$0xff]
    %v964 = vld [vmem:[%s10 + $0x230] sm:$0xff]
    %v965 = vld [vmem:[%s10 + $0x238] sm:$0xff]
    %v966 = vld [vmem:[%s10 + $0x240] sm:$0xff]
    %v967 = vld [vmem:[%s10 + $0x248] sm:$0xff]
    %v968 = vld [vmem:[%s10 + $0x250] sm:$0xff]
    %v969 = vld [vmem:[%s10 + $0x258] sm:$0xff]
    %v970 = vld [vmem:[%s10 + $0x260] sm:$0xff]
    %v971 = vld [vmem:[%s10 + $0x268] sm:$0xff]
    %v972 = vld [vmem:[%s10 + $0x270] sm:$0xff]
    %v973 = vld [vmem:[%s10 + $0x278] sm:$0xff]
    %v974 = vld [vmem:[%s10 + $0x280] sm:$0xff]
    %v975 = vld [vmem:[%s10 + $0x288] sm:$0xff]
    %v976 = vld [vmem:[%s10 + $0x290] sm:$0xff]
    %v977 = vld [vmem:[%s10 + $0x298] sm:$0xff]
    %v978 = vld [vmem:[%s10 + $0x2a0] sm:$0xff]
    %v979 = vld [vmem:[%s10 + $0x2a8] sm:$0xff]
    %v980 = vld [vmem:[%s10 + $0x2b0] sm:$0xff]
    %v981 = vld [vmem:[%s10 + $0x2b8] sm:$0xff]
    %v982 = vld [vmem:[%s10 + $0x2c0] sm:$0xff]
    %v983 = vld [vmem:[%s10 + $0x2c8] sm:$0xff]
    %v984 = vld [vmem:[%s10 + $0x2d0] sm:$0xff]
    %v985 = vld [vmem:[%s10 + $0x2d8] sm:$0xff]
    %v986 = vld [vmem:[%s10 + $0x2e0] sm:$0xff]
    %v987 = vld [vmem:[%s10 + $0x2e8] sm:$0xff]
    %v988 = vld [vmem:[%s10 + $0x2f0] sm:$0xff]
    %v989 = vld [vmem:[%s10 + $0x2f8] sm:$0xff]
    %v990 = vld [vmem:[%s10 + $0x300] sm:$0xff]
    %v991 = vld [vmem:[%s10 + $0x308] sm:$0xff]
    %v992 = vld [vmem:[%s10 + $0x310] sm:$0xff]
    %v993 = vld [vmem:[%s10 + $0x318] sm:$0xff]
    %v994 = vld [vmem:[%s10 + $0x320] sm:$0xff]
    %v995 = vld [vmem:[%s10 + $0x328] sm:$0xff]
    %v996 = vld [vmem:[%s10 + $0x330] sm:$0xff]
    %v997 = vld [vmem:[%s10 + $0x338] sm:$0xff]
    %v998 = vld [vmem:[%s10 + $0x340] sm:$0xff]
    %v999 = vld [vmem:[%s10 + $0x348] sm:$0xff]
    %v1000 = vld [vmem:[%s10 + $0x350] sm:$0xff]
    %v1001 = vld [vmem:[%s10 + $0x358] sm:$0xff]
    %v1002 = vld [vmem:[%s10 + $0x360] sm:$0xff]
    %v1003 = vld [vmem:[%s10 + $0x368] sm:$0xff]
    %v1004 = vld [vmem:[%s10 + $0x370] sm:$0xff]
    %v1005 = vld [vmem:[%s10 + $0x378] sm:$0xff]
    %v1006 = vld [vmem:[%s10 + $0x380] sm:$0xff]
    %v1007 = vld [vmem:[%s10 + $0x388] sm:$0xff]
    %v1008 = vld [vmem:[%s10 + $0x390] sm:$0xff]
    %v1009 = vld [vmem:[%s10 + $0x398] sm:$0xff]
    %v1010 = vld [vmem:[%s10 + $0x3a0] sm:$0xff]
    %v1011 = vld [vmem:[%s10 + $0x3a8] sm:$0xff]
    %v1012 = vld [vmem:[%s10 + $0x3b0] sm:$0xff]
    %v1013 = vld [vmem:[%s10 + $0x3b8] sm:$0xff]
    %v1014 = vld [vmem:[%s10 + $0x3c0] sm:$0xff]
    %v1015 = vld [vmem:[%s10 + $0x3c8] sm:$0xff]
    %v1016 = vld [vmem:[%s10 + $0x3d0] sm:$0xff]
    %v1017 = vld [vmem:[%s10 + $0x3d8] sm:$0xff]
    %v1018 = vld [vmem:[%s10 + $0x3e0] sm:$0xff]
    %v1019 = vld [vmem:[%s10 + $0x3e8] sm:$0xff]
    %v1020 = vld [vmem:[%s10 + $0x3f0] sm:$0xff]
    %v1021 = vld [vmem:[%s10 + $0x3f8] sm:$0xff]
    %v1022 = vld [vmem:[%s10 + $0x400] sm:$0xff]
    %v1023 = vld [vmem:[%s10 + $0x408] sm:$0xff]
    %v1024 = vld [vmem:[%s10 + $0x410] sm:$0xff]
    %v1025 = vld [vmem:[%s10 + $0x418] sm:$0xff]
    %v1026 = vld [vmem:[%s10 + $0x420] sm:$0xff]
    %v1027 = vld [vmem:[%s10 + $0x428] sm:$0xff]
    %v1028 = vld [vmem:[%s10 + $0x430] sm:$0xff]
    %v1029 = vld [vmem:[%s10 + $0x438] sm:$0xff]
    %v1030 = vld [vmem:[%s10 + $0x440] sm:$0xff]
    %v1031 = vld [vmem:[%s10 + $0x448] sm:$0xff]
    %v1032 = vld [vmem:[%s10 + $0x450] sm:$0xff]
    %v1033 = vld [vmem:[%s10 + $0x458] sm:$0xff]
    %v1034 = vld [vmem:[%s10 + $0x460] sm:$0xff]
    %v1035 = vld [vmem:[%s10 + $0x468] sm:$0xff]
    %v1036 = vld [vmem:[%s10 + $0x470] sm:$0xff]
    %v1037 = vld [vmem:[%s10 + $0x478] sm:$0xff]
    %v1038 = vld [vmem:[%s10 + $0x480] sm:$0xff]
    %v1039 = vld [vmem:[%s10 + $0x488] sm:$0xff]
    %v1040 = vld [vmem:[%s10 + $0x490] sm:$0xff]
    %v1041 = vld [vmem:[%s10 + $0x498] sm:$0xff]
    %v1042 = vld [vmem:[%s10 + $0x4a0] sm:$0xff]
    %v1043 = vld [vmem:[%s10 + $0x4a8] sm:$0xff]
    %v1044 = vld [vmem:[%s10 + $0x4b0] sm:$0xff]
    %v1045 = vld [vmem:[%s10 + $0x4b8] sm:$0xff]
    %v1046 = vld [vmem:[%s10 + $0x4c0] sm:$0xff]
    %v1047 = vld [vmem:[%s10 + $0x4c8] sm:$0xff]
    %v1048 = vld [vmem:[%s10 + $0x4d0] sm:$0xff]
    %v1049 = vld [vmem:[%s10 + $0x4d8] sm:$0xff]
    %v1050 = vld [vmem:[%s10 + $0x4e0] sm:$0xff]
    %v1051 = vld [vmem:[%s10 + $0x4e8] sm:$0xff]
    %v1052 = vld [vmem:[%s10 + $0x4f0] sm:$0xff]
    %v1053 = vld [vmem:[%s10 + $0x4f8] sm:$0xff]
    %v1054 = vld [vmem:[%s10 + $0x500] sm:$0xff]
    %v1055 = vld [vmem:[%s10 + $0x508] sm:$0xff]
    %v1056 = vld [vmem:[%s10 + $0x510] sm:$0xff]
    %v1057 = vld [vmem:[%s10 + $0x518] sm:$0xff]
    %v1058 = vld [vmem:[%s10 + $0x520] sm:$0xff]
    %v1059 = vld [vmem:[%s10 + $0x528] sm:$0xff]
    %v1060 = vld [vmem:[%s10 + $0x530] sm:$0xff]
    %v1061 = vld [vmem:[%s10 + $0x538] sm:$0xff]
    %v1062 = vld [vmem:[%s10 + $0x540] sm:$0xff]
    %v1063 = vld [vmem:[%s10 + $0x548] sm:$0xff]
    %v1064 = vld [vmem:[%s10 + $0x550] sm:$0xff]
    %v1065 = vld [vmem:[%s10 + $0x558] sm:$0xff]
    %v1066 = vld [vmem:[%s10 + $0x560] sm:$0xff]
    %v1067 = vld [vmem:[%s10 + $0x568] sm:$0xff]
    %v1068 = vld [vmem:[%s10 + $0x570] sm:$0xff]
    %v1069 = vld [vmem:[%s10 + $0x578] sm:$0xff]
    %v1070 = vld [vmem:[%s10 + $0x580] sm:$0xff]
    %v1071 = vld [vmem:[%s10 + $0x588] sm:$0xff]
    %v1072 = vld [vmem:[%s10 + $0x590] sm:$0xff]
    %v1073 = vld [vmem:[%s10 + $0x598] sm:$0xff]
    %v1074 = vld [vmem:[%s10 + $0x5a0] sm:$0xff]
    %v1075 = vld [vmem:[%s10 + $0x5a8] sm:$0xff]
    %v1076 = vld [vmem:[%s10 + $0x5b0] sm:$0xff]
    %v1077 = vld [vmem:[%s10 + $0x5b8] sm:$0xff]
    %v1078 = vld [vmem:[%s10 + $0x5c0] sm:$0xff]
    %v1079 = vld [vmem:[%s10 + $0x5c8] sm:$0xff]
    %v1080 = vld [vmem:[%s10 + $0x5d0] sm:$0xff]
    %v1081 = vld [vmem:[%s10 + $0x5d8] sm:$0xff]
    %v1082 = vld [vmem:[%s10 + $0x5e0] sm:$0xff]
    %v1083 = vld [vmem:[%s10 + $0x5e8] sm:$0xff]
    %v1084 = vld [vmem:[%s10 + $0x5f0] sm:$0xff]
    %v1085 = vld [vmem:[%s10 + $0x5f8] sm:$0xff]
    %v1086 = vld [vmem:[%s10 + $0x600] sm:$0xff]
    %v1087 = vld [vmem:[%s10 + $0x608] sm:$0xff]
    %v1088 = vld [vmem:[%s10 + $0x610] sm:$0xff]
    %v1089 = vld [vmem:[%s10 + $0x618] sm:$0xff]
    %v1090 = vld [vmem:[%s10 + $0x620] sm:$0xff]
    %v1091 = vld [vmem:[%s10 + $0x628] sm:$0xff]
    %v1092 = vld [vmem:[%s10 + $0x630] sm:$0xff]
    %v1093 = vld [vmem:[%s10 + $0x638] sm:$0xff]
    %v1094 = vld [vmem:[%s10 + $0x640] sm:$0xff]
    %v1095 = vld [vmem:[%s10 + $0x648] sm:$0xff]
    %v1096 = vld [vmem:[%s10 + $0x650] sm:$0xff]
    %v1097 = vld [vmem:[%s10 + $0x658] sm:$0xff]
    %v1098 = vld [vmem:[%s10 + $0x660] sm:$0xff]
    %v1099 = vld [vmem:[%s10 + $0x668] sm:$0xff]
    %v1100 = vld [vmem:[%s10 + $0x670] sm:$0xff]
    %v1101 = vld [vmem:[%s10 + $0x678] sm:$0xff]
    %v1102 = vld [vmem:[%s10 + $0x680] sm:$0xff]
    %v1103 = vld [vmem:[%s10 + $0x688] sm:$0xff]
    %v1104 = vld [vmem:[%s10 + $0x690] sm:$0xff]
    %v1105 = vld [vmem:[%s10 + $0x698] sm:$0xff]
    %v1106 = vld [vmem:[%s10 + $0x6a0] sm:$0xff]
    %v1107 = vld [vmem:[%s10 + $0x6a8] sm:$0xff]
    %v1108 = vld [vmem:[%s10 + $0x6b0] sm:$0xff]
    %v1109 = vld [vmem:[%s10 + $0x6b8] sm:$0xff]
    %v1110 = vld [vmem:[%s10 + $0x6c0] sm:$0xff]
    %v1111 = vld [vmem:[%s10 + $0x6c8] sm:$0xff]
    %v1112 = vld [vmem:[%s10 + $0x6d0] sm:$0xff]
    %v1113 = vld [vmem:[%s10 + $0x6d8] sm:$0xff]
    %v1114 = vld [vmem:[%s10 + $0x6e0] sm:$0xff]
    %v1115 = vld [vmem:[%s10 + $0x6e8] sm:$0xff]
    %v1116 = vld [vmem:[%s10 + $0x6f0] sm:$0xff]
    %v1117 = vld [vmem:[%s10 + $0x6f8] sm:$0xff]
    %v1118 = vld [vmem:[%s10 + $0x700] sm:$0xff]
    %v1119 = vld [vmem:[%s10 + $0x708] sm:$0xff]
    %v1120 = vld [vmem:[%s10 + $0x710] sm:$0xff]
    %v1121 = vld [vmem:[%s10 + $0x718] sm:$0xff]
    %v1122 = vld [vmem:[%s10 + $0x720] sm:$0xff]
    %v1123 = vld [vmem:[%s10 + $0x728] sm:$0xff]
    %v1124 = vld [vmem:[%s10 + $0x730] sm:$0xff]
    %v1125 = vld [vmem:[%s10 + $0x738] sm:$0xff]
    %v1126 = vld [vmem:[%s10 + $0x740] sm:$0xff]
    %v1127 = vld [vmem:[%s10 + $0x748] sm:$0xff]
    %v1128 = vld [vmem:[%s10 + $0x750] sm:$0xff]
    %v1129 = vld [vmem:[%s10 + $0x758] sm:$0xff]
    %v1130 = vld [vmem:[%s10 + $0x760] sm:$0xff]
    %v1131 = vld [vmem:[%s10 + $0x768] sm:$0xff]
    %v1132 = vld [vmem:[%s10 + $0x770] sm:$0xff]
    %v1133 = vld [vmem:[%s10 + $0x778] sm:$0xff]
    %v1134 = vld [vmem:[%s10 + $0x780] sm:$0xff]
    %v1135 = vld [vmem:[%s10 + $0x788] sm:$0xff]
    %v1136 = vld [vmem:[%s10 + $0x790] sm:$0xff]
    %v1137 = vld [vmem:[%s10 + $0x798] sm:$0xff]
    %v1138 = vld [vmem:[%s10 + $0x7a0] sm:$0xff]
    %v1139 = vld [vmem:[%s10 + $0x7a8] sm:$0xff]
    %v1140 = vld [vmem:[%s10 + $0x7b0] sm:$0xff]
    %v1141 = vld [vmem:[%s10 + $0x7b8] sm:$0xff]
    %v1142 = vld [vmem:[%s10 + $0x7c0] sm:$0xff]
    %v1143 = vld [vmem:[%s10 + $0x7c8] sm:$0xff]
    %v1144 = vld [vmem:[%s10 + $0x7d0] sm:$0xff]
    %v1145 = vld [vmem:[%s10 + $0x7d8] sm:$0xff]
    %v1146 = vld [vmem:[%s10 + $0x7e0] sm:$0xff]
    %v1147 = vld [vmem:[%s10 + $0x7e8] sm:$0xff]
    %v1148 = vld [vmem:[%s10 + $0x7f0] sm:$0xff]
    %v1149 = vld [vmem:[%s10 + $0x7f8] sm:$0xff]
    %v1150 = vunpack.c.l.bf16 %v894
    %v1151 = vunpack.c.h.bf16 %v894
    %v1152 = vunpack.c.l.bf16 %v895
    %v1153 = vunpack.c.h.bf16 %v895
    %v1154 = vunpack.c.l.bf16 %v896
    %v1155 = vunpack.c.h.bf16 %v896
    %v1156 = vunpack.c.l.bf16 %v897
    %v1157 = vunpack.c.h.bf16 %v897
    %v1158 = vunpack.c.l.bf16 %v898
    %v1159 = vunpack.c.h.bf16 %v898
    %v1160 = vunpack.c.l.bf16 %v899
    %v1161 = vunpack.c.h.bf16 %v899
    %v1162 = vunpack.c.l.bf16 %v900
    %v1163 = vunpack.c.h.bf16 %v900
    %v1164 = vunpack.c.l.bf16 %v901
    %v1165 = vunpack.c.h.bf16 %v901
    %v1166 = vunpack.c.l.bf16 %v902
    %v1167 = vunpack.c.h.bf16 %v902
    %v1168 = vunpack.c.l.bf16 %v903
    %v1169 = vunpack.c.h.bf16 %v903
    %v1170 = vunpack.c.l.bf16 %v904
    %v1171 = vunpack.c.h.bf16 %v904
    %v1172 = vunpack.c.l.bf16 %v905
    %v1173 = vunpack.c.h.bf16 %v905
    %v1174 = vunpack.c.l.bf16 %v906
    %v1175 = vunpack.c.h.bf16 %v906
    %v1176 = vunpack.c.l.bf16 %v907
    %v1177 = vunpack.c.h.bf16 %v907
    %v1178 = vunpack.c.l.bf16 %v908
    %v1179 = vunpack.c.h.bf16 %v908
    %v1180 = vunpack.c.l.bf16 %v909
    %v1181 = vunpack.c.h.bf16 %v909
    %v1182 = vunpack.c.l.bf16 %v910
    %v1183 = vunpack.c.h.bf16 %v910
    %v1184 = vunpack.c.l.bf16 %v911
    %v1185 = vunpack.c.h.bf16 %v911
    %v1186 = vunpack.c.l.bf16 %v912
    %v1187 = vunpack.c.h.bf16 %v912
    %v1188 = vunpack.c.l.bf16 %v913
    %v1189 = vunpack.c.h.bf16 %v913
    %v1190 = vunpack.c.l.bf16 %v914
    %v1191 = vunpack.c.h.bf16 %v914
    %v1192 = vunpack.c.l.bf16 %v915
    %v1193 = vunpack.c.h.bf16 %v915
    %v1194 = vunpack.c.l.bf16 %v916
    %v1195 = vunpack.c.h.bf16 %v916
    %v1196 = vunpack.c.l.bf16 %v917
    %v1197 = vunpack.c.h.bf16 %v917
    %v1198 = vunpack.c.l.bf16 %v918
    %v1199 = vunpack.c.h.bf16 %v918
    %v1200 = vunpack.c.l.bf16 %v919
    %v1201 = vunpack.c.h.bf16 %v919
    %v1202 = vunpack.c.l.bf16 %v920
    %v1203 = vunpack.c.h.bf16 %v920
    %v1204 = vunpack.c.l.bf16 %v921
    %v1205 = vunpack.c.h.bf16 %v921
    %v1206 = vunpack.c.l.bf16 %v922
    %v1207 = vunpack.c.h.bf16 %v922
    %v1208 = vunpack.c.l.bf16 %v923
    %v1209 = vunpack.c.h.bf16 %v923
    %v1210 = vunpack.c.l.bf16 %v924
    %v1211 = vunpack.c.h.bf16 %v924
    %v1212 = vunpack.c.l.bf16 %v925
    %v1213 = vunpack.c.h.bf16 %v925
    %v1214 = vunpack.c.l.bf16 %v926
    %v1215 = vunpack.c.h.bf16 %v926
    %v1216 = vunpack.c.l.bf16 %v927
    %v1217 = vunpack.c.h.bf16 %v927
    %v1218 = vunpack.c.l.bf16 %v928
    %v1219 = vunpack.c.h.bf16 %v928
    %v1220 = vunpack.c.l.bf16 %v929
    %v1221 = vunpack.c.h.bf16 %v929
    %v1222 = vunpack.c.l.bf16 %v930
    %v1223 = vunpack.c.h.bf16 %v930
    %v1224 = vunpack.c.l.bf16 %v931
    %v1225 = vunpack.c.h.bf16 %v931
    %v1226 = vunpack.c.l.bf16 %v932
    %v1227 = vunpack.c.h.bf16 %v932
    %v1228 = vunpack.c.l.bf16 %v933
    %v1229 = vunpack.c.h.bf16 %v933
    %v1230 = vunpack.c.l.bf16 %v934
    %v1231 = vunpack.c.h.bf16 %v934
    %v1232 = vunpack.c.l.bf16 %v935
    %v1233 = vunpack.c.h.bf16 %v935
    %v1234 = vunpack.c.l.bf16 %v936
    %v1235 = vunpack.c.h.bf16 %v936
    %v1236 = vunpack.c.l.bf16 %v937
    %v1237 = vunpack.c.h.bf16 %v937
    %v1238 = vunpack.c.l.bf16 %v938
    %v1239 = vunpack.c.h.bf16 %v938
    %v1240 = vunpack.c.l.bf16 %v939
    %v1241 = vunpack.c.h.bf16 %v939
    %v1242 = vunpack.c.l.bf16 %v940
    %v1243 = vunpack.c.h.bf16 %v940
    %v1244 = vunpack.c.l.bf16 %v941
    %v1245 = vunpack.c.h.bf16 %v941
    %v1246 = vunpack.c.l.bf16 %v942
    %v1247 = vunpack.c.h.bf16 %v942
    %v1248 = vunpack.c.l.bf16 %v943
    %v1249 = vunpack.c.h.bf16 %v943
    %v1250 = vunpack.c.l.bf16 %v944
    %v1251 = vunpack.c.h.bf16 %v944
    %v1252 = vunpack.c.l.bf16 %v945
    %v1253 = vunpack.c.h.bf16 %v945
    %v1254 = vunpack.c.l.bf16 %v946
    %v1255 = vunpack.c.h.bf16 %v946
    %v1256 = vunpack.c.l.bf16 %v947
    %v1257 = vunpack.c.h.bf16 %v947
    %v1258 = vunpack.c.l.bf16 %v948
    %v1259 = vunpack.c.h.bf16 %v948
    %v1260 = vunpack.c.l.bf16 %v949
    %v1261 = vunpack.c.h.bf16 %v949
    %v1262 = vunpack.c.l.bf16 %v950
    %v1263 = vunpack.c.h.bf16 %v950
    %v1264 = vunpack.c.l.bf16 %v951
    %v1265 = vunpack.c.h.bf16 %v951
    %v1266 = vunpack.c.l.bf16 %v952
    %v1267 = vunpack.c.h.bf16 %v952
    %v1268 = vunpack.c.l.bf16 %v953
    %v1269 = vunpack.c.h.bf16 %v953
    %v1270 = vunpack.c.l.bf16 %v954
    %v1271 = vunpack.c.h.bf16 %v954
    %v1272 = vunpack.c.l.bf16 %v955
    %v1273 = vunpack.c.h.bf16 %v955
    %v1274 = vunpack.c.l.bf16 %v956
    %v1275 = vunpack.c.h.bf16 %v956
    %v1276 = vunpack.c.l.bf16 %v957
    %v1277 = vunpack.c.h.bf16 %v957
    %v1278 = vunpack.c.l.bf16 %v958
    %v1279 = vunpack.c.h.bf16 %v958
    %v1280 = vunpack.c.l.bf16 %v959
    %v1281 = vunpack.c.h.bf16 %v959
    %v1282 = vunpack.c.l.bf16 %v960
    %v1283 = vunpack.c.h.bf16 %v960
    %v1284 = vunpack.c.l.bf16 %v961
    %v1285 = vunpack.c.h.bf16 %v961
    %v1286 = vunpack.c.l.bf16 %v962
    %v1287 = vunpack.c.h.bf16 %v962
    %v1288 = vunpack.c.l.bf16 %v963
    %v1289 = vunpack.c.h.bf16 %v963
    %v1290 = vunpack.c.l.bf16 %v964
    %v1291 = vunpack.c.h.bf16 %v964
    %v1292 = vunpack.c.l.bf16 %v965
    %v1293 = vunpack.c.h.bf16 %v965
    %v1294 = vunpack.c.l.bf16 %v966
    %v1295 = vunpack.c.h.bf16 %v966
    %v1296 = vunpack.c.l.bf16 %v967
    %v1297 = vunpack.c.h.bf16 %v967
    %v1298 = vunpack.c.l.bf16 %v968
    %v1299 = vunpack.c.h.bf16 %v968
    %v1300 = vunpack.c.l.bf16 %v969
    %v1301 = vunpack.c.h.bf16 %v969
    %v1302 = vunpack.c.l.bf16 %v970
    %v1303 = vunpack.c.h.bf16 %v970
    %v1304 = vunpack.c.l.bf16 %v971
    %v1305 = vunpack.c.h.bf16 %v971
    %v1306 = vunpack.c.l.bf16 %v972
    %v1307 = vunpack.c.h.bf16 %v972
    %v1308 = vunpack.c.l.bf16 %v973
    %v1309 = vunpack.c.h.bf16 %v973
    %v1310 = vunpack.c.l.bf16 %v974
    %v1311 = vunpack.c.h.bf16 %v974
    %v1312 = vunpack.c.l.bf16 %v975
    %v1313 = vunpack.c.h.bf16 %v975
    %v1314 = vunpack.c.l.bf16 %v976
    %v1315 = vunpack.c.h.bf16 %v976
    %v1316 = vunpack.c.l.bf16 %v977
    %v1317 = vunpack.c.h.bf16 %v977
    %v1318 = vunpack.c.l.bf16 %v978
    %v1319 = vunpack.c.h.bf16 %v978
    %v1320 = vunpack.c.l.bf16 %v979
    %v1321 = vunpack.c.h.bf16 %v979
    %v1322 = vunpack.c.l.bf16 %v980
    %v1323 = vunpack.c.h.bf16 %v980
    %v1324 = vunpack.c.l.bf16 %v981
    %v1325 = vunpack.c.h.bf16 %v981
    %v1326 = vunpack.c.l.bf16 %v982
    %v1327 = vunpack.c.h.bf16 %v982
    %v1328 = vunpack.c.l.bf16 %v983
    %v1329 = vunpack.c.h.bf16 %v983
    %v1330 = vunpack.c.l.bf16 %v984
    %v1331 = vunpack.c.h.bf16 %v984
    %v1332 = vunpack.c.l.bf16 %v985
    %v1333 = vunpack.c.h.bf16 %v985
    %v1334 = vunpack.c.l.bf16 %v986
    %v1335 = vunpack.c.h.bf16 %v986
    %v1336 = vunpack.c.l.bf16 %v987
    %v1337 = vunpack.c.h.bf16 %v987
    %v1338 = vunpack.c.l.bf16 %v988
    %v1339 = vunpack.c.h.bf16 %v988
    %v1340 = vunpack.c.l.bf16 %v989
    %v1341 = vunpack.c.h.bf16 %v989
    %v1342 = vunpack.c.l.bf16 %v990
    %v1343 = vunpack.c.h.bf16 %v990
    %v1344 = vunpack.c.l.bf16 %v991
    %v1345 = vunpack.c.h.bf16 %v991
    %v1346 = vunpack.c.l.bf16 %v992
    %v1347 = vunpack.c.h.bf16 %v992
    %v1348 = vunpack.c.l.bf16 %v993
    %v1349 = vunpack.c.h.bf16 %v993
    %v1350 = vunpack.c.l.bf16 %v994
    %v1351 = vunpack.c.h.bf16 %v994
    %v1352 = vunpack.c.l.bf16 %v995
    %v1353 = vunpack.c.h.bf16 %v995
    %v1354 = vunpack.c.l.bf16 %v996
    %v1355 = vunpack.c.h.bf16 %v996
    %v1356 = vunpack.c.l.bf16 %v997
    %v1357 = vunpack.c.h.bf16 %v997
    %v1358 = vunpack.c.l.bf16 %v998
    %v1359 = vunpack.c.h.bf16 %v998
    %v1360 = vunpack.c.l.bf16 %v999
    %v1361 = vunpack.c.h.bf16 %v999
    %v1362 = vunpack.c.l.bf16 %v1000
    %v1363 = vunpack.c.h.bf16 %v1000
    %v1364 = vunpack.c.l.bf16 %v1001
    %v1365 = vunpack.c.h.bf16 %v1001
    %v1366 = vunpack.c.l.bf16 %v1002
    %v1367 = vunpack.c.h.bf16 %v1002
    %v1368 = vunpack.c.l.bf16 %v1003
    %v1369 = vunpack.c.h.bf16 %v1003
    %v1370 = vunpack.c.l.bf16 %v1004
    %v1371 = vunpack.c.h.bf16 %v1004
    %v1372 = vunpack.c.l.bf16 %v1005
    %v1373 = vunpack.c.h.bf16 %v1005
    %v1374 = vunpack.c.l.bf16 %v1006
    %v1375 = vunpack.c.h.bf16 %v1006
    %v1376 = vunpack.c.l.bf16 %v1007
    %v1377 = vunpack.c.h.bf16 %v1007
    %v1378 = vunpack.c.l.bf16 %v1008
    %v1379 = vunpack.c.h.bf16 %v1008
    %v1380 = vunpack.c.l.bf16 %v1009
    %v1381 = vunpack.c.h.bf16 %v1009
    %v1382 = vunpack.c.l.bf16 %v1010
    %v1383 = vunpack.c.h.bf16 %v1010
    %v1384 = vunpack.c.l.bf16 %v1011
    %v1385 = vunpack.c.h.bf16 %v1011
    %v1386 = vunpack.c.l.bf16 %v1012
    %v1387 = vunpack.c.h.bf16 %v1012
    %v1388 = vunpack.c.l.bf16 %v1013
    %v1389 = vunpack.c.h.bf16 %v1013
    %v1390 = vunpack.c.l.bf16 %v1014
    %v1391 = vunpack.c.h.bf16 %v1014
    %v1392 = vunpack.c.l.bf16 %v1015
    %v1393 = vunpack.c.h.bf16 %v1015
    %v1394 = vunpack.c.l.bf16 %v1016
    %v1395 = vunpack.c.h.bf16 %v1016
    %v1396 = vunpack.c.l.bf16 %v1017
    %v1397 = vunpack.c.h.bf16 %v1017
    %v1398 = vunpack.c.l.bf16 %v1018
    %v1399 = vunpack.c.h.bf16 %v1018
    %v1400 = vunpack.c.l.bf16 %v1019
    %v1401 = vunpack.c.h.bf16 %v1019
    %v1402 = vunpack.c.l.bf16 %v1020
    %v1403 = vunpack.c.h.bf16 %v1020
    %v1404 = vunpack.c.l.bf16 %v1021
    %v1405 = vunpack.c.h.bf16 %v1021
    %v1406 = vunpack.c.l.bf16 %v1022
    %v1407 = vunpack.c.h.bf16 %v1022
    %v1408 = vunpack.c.l.bf16 %v1023
    %v1409 = vunpack.c.h.bf16 %v1023
    %v1410 = vunpack.c.l.bf16 %v1024
    %v1411 = vunpack.c.h.bf16 %v1024
    %v1412 = vunpack.c.l.bf16 %v1025
    %v1413 = vunpack.c.h.bf16 %v1025
    %v1414 = vunpack.c.l.bf16 %v1026
    %v1415 = vunpack.c.h.bf16 %v1026
    %v1416 = vunpack.c.l.bf16 %v1027
    %v1417 = vunpack.c.h.bf16 %v1027
    %v1418 = vunpack.c.l.bf16 %v1028
    %v1419 = vunpack.c.h.bf16 %v1028
    %v1420 = vunpack.c.l.bf16 %v1029
    %v1421 = vunpack.c.h.bf16 %v1029
    %v1422 = vunpack.c.l.bf16 %v1030
    %v1423 = vunpack.c.h.bf16 %v1030
    %v1424 = vunpack.c.l.bf16 %v1031
    %v1425 = vunpack.c.h.bf16 %v1031
    %v1426 = vunpack.c.l.bf16 %v1032
    %v1427 = vunpack.c.h.bf16 %v1032
    %v1428 = vunpack.c.l.bf16 %v1033
    %v1429 = vunpack.c.h.bf16 %v1033
    %v1430 = vunpack.c.l.bf16 %v1034
    %v1431 = vunpack.c.h.bf16 %v1034
    %v1432 = vunpack.c.l.bf16 %v1035
    %v1433 = vunpack.c.h.bf16 %v1035
    %v1434 = vunpack.c.l.bf16 %v1036
    %v1435 = vunpack.c.h.bf16 %v1036
    %v1436 = vunpack.c.l.bf16 %v1037
    %v1437 = vunpack.c.h.bf16 %v1037
    %v1438 = vunpack.c.l.bf16 %v1038
    %v1439 = vunpack.c.h.bf16 %v1038
    %v1440 = vunpack.c.l.bf16 %v1039
    %v1441 = vunpack.c.h.bf16 %v1039
    %v1442 = vunpack.c.l.bf16 %v1040
    %v1443 = vunpack.c.h.bf16 %v1040
    %v1444 = vunpack.c.l.bf16 %v1041
    %v1445 = vunpack.c.h.bf16 %v1041
    %v1446 = vunpack.c.l.bf16 %v1042
    %v1447 = vunpack.c.h.bf16 %v1042
    %v1448 = vunpack.c.l.bf16 %v1043
    %v1449 = vunpack.c.h.bf16 %v1043
    %v1450 = vunpack.c.l.bf16 %v1044
    %v1451 = vunpack.c.h.bf16 %v1044
    %v1452 = vunpack.c.l.bf16 %v1045
    %v1453 = vunpack.c.h.bf16 %v1045
    %v1454 = vunpack.c.l.bf16 %v1046
    %v1455 = vunpack.c.h.bf16 %v1046
    %v1456 = vunpack.c.l.bf16 %v1047
    %v1457 = vunpack.c.h.bf16 %v1047
    %v1458 = vunpack.c.l.bf16 %v1048
    %v1459 = vunpack.c.h.bf16 %v1048
    %v1460 = vunpack.c.l.bf16 %v1049
    %v1461 = vunpack.c.h.bf16 %v1049
    %v1462 = vunpack.c.l.bf16 %v1050
    %v1463 = vunpack.c.h.bf16 %v1050
    %v1464 = vunpack.c.l.bf16 %v1051
    %v1465 = vunpack.c.h.bf16 %v1051
    %v1466 = vunpack.c.l.bf16 %v1052
    %v1467 = vunpack.c.h.bf16 %v1052
    %v1468 = vunpack.c.l.bf16 %v1053
    %v1469 = vunpack.c.h.bf16 %v1053
    %v1470 = vunpack.c.l.bf16 %v1054
    %v1471 = vunpack.c.h.bf16 %v1054
    %v1472 = vunpack.c.l.bf16 %v1055
    %v1473 = vunpack.c.h.bf16 %v1055
    %v1474 = vunpack.c.l.bf16 %v1056
    %v1475 = vunpack.c.h.bf16 %v1056
    %v1476 = vunpack.c.l.bf16 %v1057
    %v1477 = vunpack.c.h.bf16 %v1057
    %v1478 = vunpack.c.l.bf16 %v1058
    %v1479 = vunpack.c.h.bf16 %v1058
    %v1480 = vunpack.c.l.bf16 %v1059
    %v1481 = vunpack.c.h.bf16 %v1059
    %v1482 = vunpack.c.l.bf16 %v1060
    %v1483 = vunpack.c.h.bf16 %v1060
    %v1484 = vunpack.c.l.bf16 %v1061
    %v1485 = vunpack.c.h.bf16 %v1061
    %v1486 = vunpack.c.l.bf16 %v1062
    %v1487 = vunpack.c.h.bf16 %v1062
    %v1488 = vunpack.c.l.bf16 %v1063
    %v1489 = vunpack.c.h.bf16 %v1063
    %v1490 = vunpack.c.l.bf16 %v1064
    %v1491 = vunpack.c.h.bf16 %v1064
    %v1492 = vunpack.c.l.bf16 %v1065
    %v1493 = vunpack.c.h.bf16 %v1065
    %v1494 = vunpack.c.l.bf16 %v1066
    %v1495 = vunpack.c.h.bf16 %v1066
    %v1496 = vunpack.c.l.bf16 %v1067
    %v1497 = vunpack.c.h.bf16 %v1067
    %v1498 = vunpack.c.l.bf16 %v1068
    %v1499 = vunpack.c.h.bf16 %v1068
    %v1500 = vunpack.c.l.bf16 %v1069
    %v1501 = vunpack.c.h.bf16 %v1069
    %v1502 = vunpack.c.l.bf16 %v1070
    %v1503 = vunpack.c.h.bf16 %v1070
    %v1504 = vunpack.c.l.bf16 %v1071
    %v1505 = vunpack.c.h.bf16 %v1071
    %v1506 = vunpack.c.l.bf16 %v1072
    %v1507 = vunpack.c.h.bf16 %v1072
    %v1508 = vunpack.c.l.bf16 %v1073
    %v1509 = vunpack.c.h.bf16 %v1073
    %v1510 = vunpack.c.l.bf16 %v1074
    %v1511 = vunpack.c.h.bf16 %v1074
    %v1512 = vunpack.c.l.bf16 %v1075
    %v1513 = vunpack.c.h.bf16 %v1075
    %v1514 = vunpack.c.l.bf16 %v1076
    %v1515 = vunpack.c.h.bf16 %v1076
    %v1516 = vunpack.c.l.bf16 %v1077
    %v1517 = vunpack.c.h.bf16 %v1077
    %v1518 = vunpack.c.l.bf16 %v1078
    %v1519 = vunpack.c.h.bf16 %v1078
    %v1520 = vunpack.c.l.bf16 %v1079
    %v1521 = vunpack.c.h.bf16 %v1079
    %v1522 = vunpack.c.l.bf16 %v1080
    %v1523 = vunpack.c.h.bf16 %v1080
    %v1524 = vunpack.c.l.bf16 %v1081
    %v1525 = vunpack.c.h.bf16 %v1081
    %v1526 = vunpack.c.l.bf16 %v1082
    %v1527 = vunpack.c.h.bf16 %v1082
    %v1528 = vunpack.c.l.bf16 %v1083
    %v1529 = vunpack.c.h.bf16 %v1083
    %v1530 = vunpack.c.l.bf16 %v1084
    %v1531 = vunpack.c.h.bf16 %v1084
    %v1532 = vunpack.c.l.bf16 %v1085
    %v1533 = vunpack.c.h.bf16 %v1085
    %v1534 = vunpack.c.l.bf16 %v1086
    %v1535 = vunpack.c.h.bf16 %v1086
    %v1536 = vunpack.c.l.bf16 %v1087
    %v1537 = vunpack.c.h.bf16 %v1087
    %v1538 = vunpack.c.l.bf16 %v1088
    %v1539 = vunpack.c.h.bf16 %v1088
    %v1540 = vunpack.c.l.bf16 %v1089
    %v1541 = vunpack.c.h.bf16 %v1089
    %v1542 = vunpack.c.l.bf16 %v1090
    %v1543 = vunpack.c.h.bf16 %v1090
    %v1544 = vunpack.c.l.bf16 %v1091
    %v1545 = vunpack.c.h.bf16 %v1091
    %v1546 = vunpack.c.l.bf16 %v1092
    %v1547 = vunpack.c.h.bf16 %v1092
    %v1548 = vunpack.c.l.bf16 %v1093
    %v1549 = vunpack.c.h.bf16 %v1093
    %v1550 = vunpack.c.l.bf16 %v1094
    %v1551 = vunpack.c.h.bf16 %v1094
    %v1552 = vunpack.c.l.bf16 %v1095
    %v1553 = vunpack.c.h.bf16 %v1095
    %v1554 = vunpack.c.l.bf16 %v1096
    %v1555 = vunpack.c.h.bf16 %v1096
    %v1556 = vunpack.c.l.bf16 %v1097
    %v1557 = vunpack.c.h.bf16 %v1097
    %v1558 = vunpack.c.l.bf16 %v1098
    %v1559 = vunpack.c.h.bf16 %v1098
    %v1560 = vunpack.c.l.bf16 %v1099
    %v1561 = vunpack.c.h.bf16 %v1099
    %v1562 = vunpack.c.l.bf16 %v1100
    %v1563 = vunpack.c.h.bf16 %v1100
    %v1564 = vunpack.c.l.bf16 %v1101
    %v1565 = vunpack.c.h.bf16 %v1101
    %v1566 = vunpack.c.l.bf16 %v1102
    %v1567 = vunpack.c.h.bf16 %v1102
    %v1568 = vunpack.c.l.bf16 %v1103
    %v1569 = vunpack.c.h.bf16 %v1103
    %v1570 = vunpack.c.l.bf16 %v1104
    %v1571 = vunpack.c.h.bf16 %v1104
    %v1572 = vunpack.c.l.bf16 %v1105
    %v1573 = vunpack.c.h.bf16 %v1105
    %v1574 = vunpack.c.l.bf16 %v1106
    %v1575 = vunpack.c.h.bf16 %v1106
    %v1576 = vunpack.c.l.bf16 %v1107
    %v1577 = vunpack.c.h.bf16 %v1107
    %v1578 = vunpack.c.l.bf16 %v1108
    %v1579 = vunpack.c.h.bf16 %v1108
    %v1580 = vunpack.c.l.bf16 %v1109
    %v1581 = vunpack.c.h.bf16 %v1109
    %v1582 = vunpack.c.l.bf16 %v1110
    %v1583 = vunpack.c.h.bf16 %v1110
    %v1584 = vunpack.c.l.bf16 %v1111
    %v1585 = vunpack.c.h.bf16 %v1111
    %v1586 = vunpack.c.l.bf16 %v1112
    %v1587 = vunpack.c.h.bf16 %v1112
    %v1588 = vunpack.c.l.bf16 %v1113
    %v1589 = vunpack.c.h.bf16 %v1113
    %v1590 = vunpack.c.l.bf16 %v1114
    %v1591 = vunpack.c.h.bf16 %v1114
    %v1592 = vunpack.c.l.bf16 %v1115
    %v1593 = vunpack.c.h.bf16 %v1115
    %v1594 = vunpack.c.l.bf16 %v1116
    %v1595 = vunpack.c.h.bf16 %v1116
    %v1596 = vunpack.c.l.bf16 %v1117
    %v1597 = vunpack.c.h.bf16 %v1117
    %v1598 = vunpack.c.l.bf16 %v1118
    %v1599 = vunpack.c.h.bf16 %v1118
    %v1600 = vunpack.c.l.bf16 %v1119
    %v1601 = vunpack.c.h.bf16 %v1119
    %v1602 = vunpack.c.l.bf16 %v1120
    %v1603 = vunpack.c.h.bf16 %v1120
    %v1604 = vunpack.c.l.bf16 %v1121
    %v1605 = vunpack.c.h.bf16 %v1121
    %v1606 = vunpack.c.l.bf16 %v1122
    %v1607 = vunpack.c.h.bf16 %v1122
    %v1608 = vunpack.c.l.bf16 %v1123
    %v1609 = vunpack.c.h.bf16 %v1123
    %v1610 = vunpack.c.l.bf16 %v1124
    %v1611 = vunpack.c.h.bf16 %v1124
    %v1612 = vunpack.c.l.bf16 %v1125
    %v1613 = vunpack.c.h.bf16 %v1125
    %v1614 = vunpack.c.l.bf16 %v1126
    %v1615 = vunpack.c.h.bf16 %v1126
    %v1616 = vunpack.c.l.bf16 %v1127
    %v1617 = vunpack.c.h.bf16 %v1127
    %v1618 = vunpack.c.l.bf16 %v1128
    %v1619 = vunpack.c.h.bf16 %v1128
    %v1620 = vunpack.c.l.bf16 %v1129
    %v1621 = vunpack.c.h.bf16 %v1129
    %v1622 = vunpack.c.l.bf16 %v1130
    %v1623 = vunpack.c.h.bf16 %v1130
    %v1624 = vunpack.c.l.bf16 %v1131
    %v1625 = vunpack.c.h.bf16 %v1131
    %v1626 = vunpack.c.l.bf16 %v1132
    %v1627 = vunpack.c.h.bf16 %v1132
    %v1628 = vunpack.c.l.bf16 %v1133
    %v1629 = vunpack.c.h.bf16 %v1133
    %v1630 = vunpack.c.l.bf16 %v1134
    %v1631 = vunpack.c.h.bf16 %v1134
    %v1632 = vunpack.c.l.bf16 %v1135
    %v1633 = vunpack.c.h.bf16 %v1135
    %v1634 = vunpack.c.l.bf16 %v1136
    %v1635 = vunpack.c.h.bf16 %v1136
    %v1636 = vunpack.c.l.bf16 %v1137
    %v1637 = vunpack.c.h.bf16 %v1137
    %v1638 = vunpack.c.l.bf16 %v1138
    %v1639 = vunpack.c.h.bf16 %v1138
    %v1640 = vunpack.c.l.bf16 %v1139
    %v1641 = vunpack.c.h.bf16 %v1139
    %v1642 = vunpack.c.l.bf16 %v1140
    %v1643 = vunpack.c.h.bf16 %v1140
    %v1644 = vunpack.c.l.bf16 %v1141
    %v1645 = vunpack.c.h.bf16 %v1141
    %v1646 = vunpack.c.l.bf16 %v1142
    %v1647 = vunpack.c.h.bf16 %v1142
    %v1648 = vunpack.c.l.bf16 %v1143
    %v1649 = vunpack.c.h.bf16 %v1143
    %v1650 = vunpack.c.l.bf16 %v1144
    %v1651 = vunpack.c.h.bf16 %v1144
    %v1652 = vunpack.c.l.bf16 %v1145
    %v1653 = vunpack.c.h.bf16 %v1145
    %v1654 = vunpack.c.l.bf16 %v1146
    %v1655 = vunpack.c.h.bf16 %v1146
    %v1656 = vunpack.c.l.bf16 %v1147
    %v1657 = vunpack.c.h.bf16 %v1147
    %v1658 = vunpack.c.l.bf16 %v1148
    %v1659 = vunpack.c.h.bf16 %v1148
    %v1660 = vunpack.c.l.bf16 %v1149
    %v1661 = vunpack.c.h.bf16 %v1149
    %1662 = vmatprep.subr.mxu0 %v1271
    %1663 = vmatpush1.msra.mxu0 %v1270
    %1664 = vmatprep.subr.mxu0 %v1263
    %1665 = vmatpush1.msra.mxu0 %v1262
    %1666 = vmatprep.subr.mxu0 %v1255
    %1667 = vmatpush1.msra.mxu0 %v1254
    %1668 = vmatprep.subr.mxu0 %v1247
    %1669 = vmatpush1.msra.mxu0 %v1246
    %1670 = vmatprep.subr.mxu0 %v1239
    %1671 = vmatpush1.msra.mxu0 %v1238
    %1672 = vmatprep.subr.mxu0 %v1231
    %1673 = vmatpush1.msra.mxu0 %v1230
    %1674 = vmatprep.subr.mxu0 %v1223
    %1675 = vmatpush1.msra.mxu0 %v1222
    %1676 = vmatprep.subr.mxu0 %v1215
    %1677 = vmatpush1.msra.mxu0 %v1214
    %1678 = vmatprep.subr.mxu0 %v1207
    %1679 = vmatpush1.msra.mxu0 %v1206
    %1680 = vmatprep.subr.mxu0 %v1199
    %1681 = vmatpush1.msra.mxu0 %v1198
    %1682 = vmatprep.subr.mxu0 %v1191
    %1683 = vmatpush1.msra.mxu0 %v1190
    %1684 = vmatprep.subr.mxu0 %v1183
    %1685 = vmatpush1.msra.mxu0 %v1182
    %1686 = vmatprep.subr.mxu0 %v1175
    %1687 = vmatpush1.msra.mxu0 %v1174
    %1688 = vmatprep.subr.mxu0 %v1167
    %1689 = vmatpush1.msra.mxu0 %v1166
    %1690 = vmatprep.subr.mxu0 %v1159
    %1691 = vmatpush1.msra.mxu0 %v1158
    %1692 = vmatprep.subr.mxu0 %v1151
    %1693 = vmatpush1.msra.mxu0 %v1150
    %1694 = vmatprep.subr.mxu0 %v1399
    %1695 = vmatpush2.msra.mxu0 %v1398
    %1696 = vmatprep.subr.mxu0 %v1391
    %1697 = vmatpush2.msra.mxu0 %v1390
    %1698 = vmatprep.subr.mxu0 %v1383
    %1699 = vmatpush2.msra.mxu0 %v1382
    %1700 = vmatprep.subr.mxu0 %v1375
    %1701 = vmatpush2.msra.mxu0 %v1374
    %1702 = vmatprep.subr.mxu0 %v1367
    %1703 = vmatpush2.msra.mxu0 %v1366
    %1704 = vmatprep.subr.mxu0 %v1359
    %1705 = vmatpush2.msra.mxu0 %v1358
    %1706 = vmatprep.subr.mxu0 %v1351
    %1707 = vmatpush2.msra.mxu0 %v1350
    %1708 = vmatprep.subr.mxu0 %v1343
    %1709 = vmatpush2.msra.mxu0 %v1342
    %1710 = vmatprep.subr.mxu0 %v1335
    %1711 = vmatpush2.msra.mxu0 %v1334
    %1712 = vmatprep.subr.mxu0 %v1327
    %1713 = vmatpush2.msra.mxu0 %v1326
    %1714 = vmatprep.subr.mxu0 %v1319
    %1715 = vmatpush2.msra.mxu0 %v1318
    %1716 = vmatprep.subr.mxu0 %v1311
    %1717 = vmatpush2.msra.mxu0 %v1310
    %1718 = vmatprep.subr.mxu0 %v1303
    %1719 = vmatpush2.msra.mxu0 %v1302
    %1720 = vmatprep.subr.mxu0 %v1295
    %1721 = vmatpush2.msra.mxu0 %v1294
    %1722 = vmatprep.subr.mxu0 %v1287
    %1723 = vmatpush2.msra.mxu0 %v1286
    %1724 = vmatprep.subr.mxu0 %v1279
    %1725 = vmatpush2.msra.mxu0 %v1278
    %1726 = vmatprep.mubr.f32.mxu0 %v891
    %1727 = vmatmul.mubr.f32.gmra.mxu0 %v890
    %v1728 = vpop.f32.mrf.mxu0
    %v1729 = vadd.f32 0.0, %v1728
    %v1730 = vpop.f32.mrf.mxu0
    %v1731 = vadd.f32 0.0, %v1730
    %1732 = vdwg.mxu0
    %1733 = vmatprep.subr.mxu0 %v1527
    %1734 = vmatpush1.msra.mxu0 %v1526
    %1735 = vmatprep.subr.mxu0 %v1519
    %1736 = vmatpush1.msra.mxu0 %v1518
    %1737 = vmatprep.subr.mxu0 %v1511
    %1738 = vmatpush1.msra.mxu0 %v1510
    %1739 = vmatprep.subr.mxu0 %v1503
    %1740 = vmatpush1.msra.mxu0 %v1502
    %1741 = vmatprep.subr.mxu0 %v1495
    %1742 = vmatpush1.msra.mxu0 %v1494
    %1743 = vmatprep.subr.mxu0 %v1487
    %1744 = vmatpush1.msra.mxu0 %v1486
    %1745 = vmatprep.subr.mxu0 %v1479
    %1746 = vmatpush1.msra.mxu0 %v1478
    %1747 = vmatprep.subr.mxu0 %v1471
    %1748 = vmatpush1.msra.mxu0 %v1470
    %1749 = vmatprep.subr.mxu0 %v1463
    %1750 = vmatpush1.msra.mxu0 %v1462
    %1751 = vmatprep.subr.mxu0 %v1455
    %1752 = vmatpush1.msra.mxu0 %v1454
    %1753 = vmatprep.subr.mxu0 %v1447
    %1754 = vmatpush1.msra.mxu0 %v1446
    %1755 = vmatprep.subr.mxu0 %v1439
    %1756 = vmatpush1.msra.mxu0 %v1438
    %1757 = vmatprep.subr.mxu0 %v1431
    %1758 = vmatpush1.msra.mxu0 %v1430
    %1759 = vmatprep.subr.mxu0 %v1423
    %1760 = vmatpush1.msra.mxu0 %v1422
    %1761 = vmatprep.subr.mxu0 %v1415
    %1762 = vmatpush1.msra.mxu0 %v1414
    %1763 = vmatprep.subr.mxu0 %v1407
    %1764 = vmatpush1.msra.mxu0 %v1406
    %1765 = vmatprep.subr.mxu0 %v1655
    %1766 = vmatpush2.msra.mxu0 %v1654
    %1767 = vmatprep.subr.mxu0 %v1647
    %1768 = vmatpush2.msra.mxu0 %v1646
    %1769 = vmatprep.subr.mxu0 %v1639
    %1770 = vmatpush2.msra.mxu0 %v1638
    %1771 = vmatprep.subr.mxu0 %v1631
    %1772 = vmatpush2.msra.mxu0 %v1630
    %1773 = vmatprep.subr.mxu0 %v1623
    %1774 = vmatpush2.msra.mxu0 %v1622
    %1775 = vmatprep.subr.mxu0 %v1615
    %1776 = vmatpush2.msra.mxu0 %v1614
    %1777 = vmatprep.subr.mxu0 %v1607
    %1778 = vmatpush2.msra.mxu0 %v1606
    %1779 = vmatprep.subr.mxu0 %v1599
    %1780 = vmatpush2.msra.mxu0 %v1598
    %1781 = vmatprep.subr.mxu0 %v1591
    %1782 = vmatpush2.msra.mxu0 %v1590
    %1783 = vmatprep.subr.mxu0 %v1583
    %1784 = vmatpush2.msra.mxu0 %v1582
    %1785 = vmatprep.subr.mxu0 %v1575
    %1786 = vmatpush2.msra.mxu0 %v1574
    %1787 = vmatprep.subr.mxu0 %v1567
    %1788 = vmatpush2.msra.mxu0 %v1566
    %1789 = vmatprep.subr.mxu0 %v1559
    %1790 = vmatpush2.msra.mxu0 %v1558
    %1791 = vmatprep.subr.mxu0 %v1551
    %1792 = vmatpush2.msra.mxu0 %v1550
    %1793 = vmatprep.subr.mxu0 %v1543
    %1794 = vmatpush2.msra.mxu0 %v1542
    %1795 = vmatprep.subr.mxu0 %v1535
    %1796 = vmatpush2.msra.mxu0 %v1534
    %1797 = vmatprep.mubr.f32.mxu0 %v893
    %1798 = vmatmul.mubr.f32.gmra.mxu0 %v892
    %v1799 = vpop.f32.mrf.mxu0
    %v1800 = vadd.f32 %v1729, %v1799
    %v1801 = vpop.f32.mrf.mxu0
    %v1802 = vadd.f32 %v1731, %v1801
    %1803 = vdwg.mxu0
    %1804 = vmatprep.subr.mxu0 %v1273
    %1805 = vmatpush1.msra.mxu0 %v1272
    %1806 = vmatprep.subr.mxu0 %v1265
    %1807 = vmatpush1.msra.mxu0 %v1264
    %1808 = vmatprep.subr.mxu0 %v1257
    %1809 = vmatpush1.msra.mxu0 %v1256
    %1810 = vmatprep.subr.mxu0 %v1249
    %1811 = vmatpush1.msra.mxu0 %v1248
    %1812 = vmatprep.subr.mxu0 %v1241
    %1813 = vmatpush1.msra.mxu0 %v1240
    %1814 = vmatprep.subr.mxu0 %v1233
    %1815 = vmatpush1.msra.mxu0 %v1232
    %1816 = vmatprep.subr.mxu0 %v1225
    %1817 = vmatpush1.msra.mxu0 %v1224
    %1818 = vmatprep.subr.mxu0 %v1217
    %1819 = vmatpush1.msra.mxu0 %v1216
    %1820 = vmatprep.subr.mxu0 %v1209
    %1821 = vmatpush1.msra.mxu0 %v1208
    %1822 = vmatprep.subr.mxu0 %v1201
    %1823 = vmatpush1.msra.mxu0 %v1200
    %1824 = vmatprep.subr.mxu0 %v1193
    %1825 = vmatpush1.msra.mxu0 %v1192
    %1826 = vmatprep.subr.mxu0 %v1185
    %1827 = vmatpush1.msra.mxu0 %v1184
    %1828 = vmatprep.subr.mxu0 %v1177
    %1829 = vmatpush1.msra.mxu0 %v1176
    %1830 = vmatprep.subr.mxu0 %v1169
    %1831 = vmatpush1.msra.mxu0 %v1168
    %1832 = vmatprep.subr.mxu0 %v1161
    %1833 = vmatpush1.msra.mxu0 %v1160
    %1834 = vmatprep.subr.mxu0 %v1153
    %1835 = vmatpush1.msra.mxu0 %v1152
    %1836 = vmatprep.subr.mxu0 %v1401
    %1837 = vmatpush2.msra.mxu0 %v1400
    %1838 = vmatprep.subr.mxu0 %v1393
    %1839 = vmatpush2.msra.mxu0 %v1392
    %1840 = vmatprep.subr.mxu0 %v1385
    %1841 = vmatpush2.msra.mxu0 %v1384
    %1842 = vmatprep.subr.mxu0 %v1377
    %1843 = vmatpush2.msra.mxu0 %v1376
    %1844 = vmatprep.subr.mxu0 %v1369
    %1845 = vmatpush2.msra.mxu0 %v1368
    %1846 = vmatprep.subr.mxu0 %v1361
    %1847 = vmatpush2.msra.mxu0 %v1360
    %1848 = vmatprep.subr.mxu0 %v1353
    %1849 = vmatpush2.msra.mxu0 %v1352
    %1850 = vmatprep.subr.mxu0 %v1345
    %1851 = vmatpush2.msra.mxu0 %v1344
    %1852 = vmatprep.subr.mxu0 %v1337
    %1853 = vmatpush2.msra.mxu0 %v1336
    %1854 = vmatprep.subr.mxu0 %v1329
    %1855 = vmatpush2.msra.mxu0 %v1328
    %1856 = vmatprep.subr.mxu0 %v1321
    %1857 = vmatpush2.msra.mxu0 %v1320
    %1858 = vmatprep.subr.mxu0 %v1313
    %1859 = vmatpush2.msra.mxu0 %v1312
    %1860 = vmatprep.subr.mxu0 %v1305
    %1861 = vmatpush2.msra.mxu0 %v1304
    %1862 = vmatprep.subr.mxu0 %v1297
    %1863 = vmatpush2.msra.mxu0 %v1296
    %1864 = vmatprep.subr.mxu0 %v1289
    %1865 = vmatpush2.msra.mxu0 %v1288
    %1866 = vmatprep.subr.mxu0 %v1281
    %1867 = vmatpush2.msra.mxu0 %v1280
    %1868 = vmatprep.mubr.f32.mxu0 %v891
    %1869 = vmatmul.mubr.f32.gmra.mxu0 %v890
    %v1870 = vpop.f32.mrf.mxu0
    %v1871 = vadd.f32 0.0, %v1870
    %v1872 = vpop.f32.mrf.mxu0
    %v1873 = vadd.f32 0.0, %v1872
    %1874 = vdwg.mxu0
    %1875 = vmatprep.subr.mxu0 %v1529
    %1876 = vmatpush1.msra.mxu0 %v1528
    %1877 = vmatprep.subr.mxu0 %v1521
    %1878 = vmatpush1.msra.mxu0 %v1520
    %1879 = vmatprep.subr.mxu0 %v1513
    %1880 = vmatpush1.msra.mxu0 %v1512
    %1881 = vmatprep.subr.mxu0 %v1505
    %1882 = vmatpush1.msra.mxu0 %v1504
    %1883 = vmatprep.subr.mxu0 %v1497
    %1884 = vmatpush1.msra.mxu0 %v1496
    %1885 = vmatprep.subr.mxu0 %v1489
    %1886 = vmatpush1.msra.mxu0 %v1488
    %1887 = vmatprep.subr.mxu0 %v1481
    %1888 = vmatpush1.msra.mxu0 %v1480
    %1889 = vmatprep.subr.mxu0 %v1473
    %1890 = vmatpush1.msra.mxu0 %v1472
    %1891 = vmatprep.subr.mxu0 %v1465
    %1892 = vmatpush1.msra.mxu0 %v1464
    %1893 = vmatprep.subr.mxu0 %v1457
    %1894 = vmatpush1.msra.mxu0 %v1456
    %1895 = vmatprep.subr.mxu0 %v1449
    %1896 = vmatpush1.msra.mxu0 %v1448
    %1897 = vmatprep.subr.mxu0 %v1441
    %1898 = vmatpush1.msra.mxu0 %v1440
    %1899 = vmatprep.subr.mxu0 %v1433
    %1900 = vmatpush1.msra.mxu0 %v1432
    %1901 = vmatprep.subr.mxu0 %v1425
    %1902 = vmatpush1.msra.mxu0 %v1424
    %1903 = vmatprep.subr.mxu0 %v1417
    %1904 = vmatpush1.msra.mxu0 %v1416
    %1905 = vmatprep.subr.mxu0 %v1409
    %1906 = vmatpush1.msra.mxu0 %v1408
    %1907 = vmatprep.subr.mxu0 %v1657
    %1908 = vmatpush2.msra.mxu0 %v1656
    %1909 = vmatprep.subr.mxu0 %v1649
    %1910 = vmatpush2.msra.mxu0 %v1648
    %1911 = vmatprep.subr.mxu0 %v1641
    %1912 = vmatpush2.msra.mxu0 %v1640
    %1913 = vmatprep.subr.mxu0 %v1633
    %1914 = vmatpush2.msra.mxu0 %v1632
    %1915 = vmatprep.subr.mxu0 %v1625
    %1916 = vmatpush2.msra.mxu0 %v1624
    %1917 = vmatprep.subr.mxu0 %v1617
    %1918 = vmatpush2.msra.mxu0 %v1616
    %1919 = vmatprep.subr.mxu0 %v1609
    %1920 = vmatpush2.msra.mxu0 %v1608
    %1921 = vmatprep.subr.mxu0 %v1601
    %1922 = vmatpush2.msra.mxu0 %v1600
    %1923 = vmatprep.subr.mxu0 %v1593
    %1924 = vmatpush2.msra.mxu0 %v1592
    %1925 = vmatprep.subr.mxu0 %v1585
    %1926 = vmatpush2.msra.mxu0 %v1584
    %1927 = vmatprep.subr.mxu0 %v1577
    %1928 = vmatpush2.msra.mxu0 %v1576
    %1929 = vmatprep.subr.mxu0 %v1569
    %1930 = vmatpush2.msra.mxu0 %v1568
    %1931 = vmatprep.subr.mxu0 %v1561
    %1932 = vmatpush2.msra.mxu0 %v1560
    %1933 = vmatprep.subr.mxu0 %v1553
    %1934 = vmatpush2.msra.mxu0 %v1552
    %1935 = vmatprep.subr.mxu0 %v1545
    %1936 = vmatpush2.msra.mxu0 %v1544
    %1937 = vmatprep.subr.mxu0 %v1537
    %1938 = vmatpush2.msra.mxu0 %v1536
    %1939 = vmatprep.mubr.f32.mxu0 %v893
    %1940 = vmatmul.mubr.f32.gmra.mxu0 %v892
    %v1941 = vpop.f32.mrf.mxu0
    %v1942 = vadd.f32 %v1871, %v1941
    %v1943 = vpop.f32.mrf.mxu0
    %v1944 = vadd.f32 %v1873, %v1943
    %1945 = vdwg.mxu0
    %1946 = vmatprep.subr.mxu0 %v1275
    %1947 = vmatpush1.msra.mxu0 %v1274
    %1948 = vmatprep.subr.mxu0 %v1267
    %1949 = vmatpush1.msra.mxu0 %v1266
    %1950 = vmatprep.subr.mxu0 %v1259
    %1951 = vmatpush1.msra.mxu0 %v1258
    %1952 = vmatprep.subr.mxu0 %v1251
    %1953 = vmatpush1.msra.mxu0 %v1250
    %1954 = vmatprep.subr.mxu0 %v1243
    %1955 = vmatpush1.msra.mxu0 %v1242
    %1956 = vmatprep.subr.mxu0 %v1235
    %1957 = vmatpush1.msra.mxu0 %v1234
    %1958 = vmatprep.subr.mxu0 %v1227
    %1959 = vmatpush1.msra.mxu0 %v1226
    %1960 = vmatprep.subr.mxu0 %v1219
    %1961 = vmatpush1.msra.mxu0 %v1218
    %1962 = vmatprep.subr.mxu0 %v1211
    %1963 = vmatpush1.msra.mxu0 %v1210
    %1964 = vmatprep.subr.mxu0 %v1203
    %1965 = vmatpush1.msra.mxu0 %v1202
    %1966 = vmatprep.subr.mxu0 %v1195
    %1967 = vmatpush1.msra.mxu0 %v1194
    %1968 = vmatprep.subr.mxu0 %v1187
    %1969 = vmatpush1.msra.mxu0 %v1186
    %1970 = vmatprep.subr.mxu0 %v1179
    %1971 = vmatpush1.msra.mxu0 %v1178
    %1972 = vmatprep.subr.mxu0 %v1171
    %1973 = vmatpush1.msra.mxu0 %v1170
    %1974 = vmatprep.subr.mxu0 %v1163
    %1975 = vmatpush1.msra.mxu0 %v1162
    %1976 = vmatprep.subr.mxu0 %v1155
    %1977 = vmatpush1.msra.mxu0 %v1154
    %1978 = vmatprep.subr.mxu0 %v1403
    %1979 = vmatpush2.msra.mxu0 %v1402
    %1980 = vmatprep.subr.mxu0 %v1395
    %1981 = vmatpush2.msra.mxu0 %v1394
    %1982 = vmatprep.subr.mxu0 %v1387
    %1983 = vmatpush2.msra.mxu0 %v1386
    %1984 = vmatprep.subr.mxu0 %v1379
    %1985 = vmatpush2.msra.mxu0 %v1378
    %1986 = vmatprep.subr.mxu0 %v1371
    %1987 = vmatpush2.msra.mxu0 %v1370
    %1988 = vmatprep.subr.mxu0 %v1363
    %1989 = vmatpush2.msra.mxu0 %v1362
    %1990 = vmatprep.subr.mxu0 %v1355
    %1991 = vmatpush2.msra.mxu0 %v1354
    %1992 = vmatprep.subr.mxu0 %v1347
    %1993 = vmatpush2.msra.mxu0 %v1346
    %1994 = vmatprep.subr.mxu0 %v1339
    %1995 = vmatpush2.msra.mxu0 %v1338
    %1996 = vmatprep.subr.mxu0 %v1331
    %1997 = vmatpush2.msra.mxu0 %v1330
    %1998 = vmatprep.subr.mxu0 %v1323
    %1999 = vmatpush2.msra.mxu0 %v1322
    %2000 = vmatprep.subr.mxu0 %v1315
    %2001 = vmatpush2.msra.mxu0 %v1314
    %2002 = vmatprep.subr.mxu0 %v1307
    %2003 = vmatpush2.msra.mxu0 %v1306
    %2004 = vmatprep.subr.mxu0 %v1299
    %2005 = vmatpush2.msra.mxu0 %v1298
    %2006 = vmatprep.subr.mxu0 %v1291
    %2007 = vmatpush2.msra.mxu0 %v1290
    %2008 = vmatprep.subr.mxu0 %v1283
    %2009 = vmatpush2.msra.mxu0 %v1282
    %2010 = vmatprep.mubr.f32.mxu0 %v891
    %2011 = vmatmul.mubr.f32.gmra.mxu0 %v890
    %v2012 = vpop.f32.mrf.mxu0
    %v2013 = vadd.f32 0.0, %v2012
    %v2014 = vpop.f32.mrf.mxu0
    %v2015 = vadd.f32 0.0, %v2014
    %2016 = vdwg.mxu0
    %2017 = vmatprep.subr.mxu0 %v1531
    %2018 = vmatpush1.msra.mxu0 %v1530
    %2019 = vmatprep.subr.mxu0 %v1523
    %2020 = vmatpush1.msra.mxu0 %v1522
    %2021 = vmatprep.subr.mxu0 %v1515
    %2022 = vmatpush1.msra.mxu0 %v1514
    %2023 = vmatprep.subr.mxu0 %v1507
    %2024 = vmatpush1.msra.mxu0 %v1506
    %2025 = vmatprep.subr.mxu0 %v1499
    %2026 = vmatpush1.msra.mxu0 %v1498
    %2027 = vmatprep.subr.mxu0 %v1491
    %2028 = vmatpush1.msra.mxu0 %v1490
    %2029 = vmatprep.subr.mxu0 %v1483
    %2030 = vmatpush1.msra.mxu0 %v1482
    %2031 = vmatprep.subr.mxu0 %v1475
    %2032 = vmatpush1.msra.mxu0 %v1474
    %2033 = vmatprep.subr.mxu0 %v1467
    %2034 = vmatpush1.msra.mxu0 %v1466
    %2035 = vmatprep.subr.mxu0 %v1459
    %2036 = vmatpush1.msra.mxu0 %v1458
    %2037 = vmatprep.subr.mxu0 %v1451
    %2038 = vmatpush1.msra.mxu0 %v1450
    %2039 = vmatprep.subr.mxu0 %v1443
    %2040 = vmatpush1.msra.mxu0 %v1442
    %2041 = vmatprep.subr.mxu0 %v1435
    %2042 = vmatpush1.msra.mxu0 %v1434
    %2043 = vmatprep.subr.mxu0 %v1427
    %2044 = vmatpush1.msra.mxu0 %v1426
    %2045 = vmatprep.subr.mxu0 %v1419
    %2046 = vmatpush1.msra.mxu0 %v1418
    %2047 = vmatprep.subr.mxu0 %v1411
    %2048 = vmatpush1.msra.mxu0 %v1410
    %2049 = vmatprep.subr.mxu0 %v1659
    %2050 = vmatpush2.msra.mxu0 %v1658
    %2051 = vmatprep.subr.mxu0 %v1651
    %2052 = vmatpush2.msra.mxu0 %v1650
    %2053 = vmatprep.subr.mxu0 %v1643
    %2054 = vmatpush2.msra.mxu0 %v1642
    %2055 = vmatprep.subr.mxu0 %v1635
    %2056 = vmatpush2.msra.mxu0 %v1634
    %2057 = vmatprep.subr.mxu0 %v1627
    %2058 = vmatpush2.msra.mxu0 %v1626
    %2059 = vmatprep.subr.mxu0 %v1619
    %2060 = vmatpush2.msra.mxu0 %v1618
    %2061 = vmatprep.subr.mxu0 %v1611
    %2062 = vmatpush2.msra.mxu0 %v1610
    %2063 = vmatprep.subr.mxu0 %v1603
    %2064 = vmatpush2.msra.mxu0 %v1602
    %2065 = vmatprep.subr.mxu0 %v1595
    %2066 = vmatpush2.msra.mxu0 %v1594
    %2067 = vmatprep.subr.mxu0 %v1587
    %2068 = vmatpush2.msra.mxu0 %v1586
    %2069 = vmatprep.subr.mxu0 %v1579
    %2070 = vmatpush2.msra.mxu0 %v1578
    %2071 = vmatprep.subr.mxu0 %v1571
    %2072 = vmatpush2.msra.mxu0 %v1570
    %2073 = vmatprep.subr.mxu0 %v1563
    %2074 = vmatpush2.msra.mxu0 %v1562
    %2075 = vmatprep.subr.mxu0 %v1555
    %2076 = vmatpush2.msra.mxu0 %v1554
    %2077 = vmatprep.subr.mxu0 %v1547
    %2078 = vmatpush2.msra.mxu0 %v1546
    %2079 = vmatprep.subr.mxu0 %v1539
    %2080 = vmatpush2.msra.mxu0 %v1538
    %2081 = vmatprep.mubr.f32.mxu0 %v893
    %2082 = vmatmul.mubr.f32.gmra.mxu0 %v892
    %v2083 = vpop.f32.mrf.mxu0
    %v2084 = vadd.f32 %v2013, %v2083
    %v2085 = vpop.f32.mrf.mxu0
    %v2086 = vadd.f32 %v2015, %v2085
    %2087 = vdwg.mxu0
    %2088 = vmatprep.subr.mxu0 %v1277
    %2089 = vmatpush1.msra.mxu0 %v1276
    %2090 = vmatprep.subr.mxu0 %v1269
    %2091 = vmatpush1.msra.mxu0 %v1268
    %2092 = vmatprep.subr.mxu0 %v1261
    %2093 = vmatpush1.msra.mxu0 %v1260
    %2094 = vmatprep.subr.mxu0 %v1253
    %2095 = vmatpush1.msra.mxu0 %v1252
    %2096 = vmatprep.subr.mxu0 %v1245
    %2097 = vmatpush1.msra.mxu0 %v1244
    %2098 = vmatprep.subr.mxu0 %v1237
    %2099 = vmatpush1.msra.mxu0 %v1236
    %2100 = vmatprep.subr.mxu0 %v1229
    %2101 = vmatpush1.msra.mxu0 %v1228
    %2102 = vmatprep.subr.mxu0 %v1221
    %2103 = vmatpush1.msra.mxu0 %v1220
    %2104 = vmatprep.subr.mxu0 %v1213
    %2105 = vmatpush1.msra.mxu0 %v1212
    %2106 = vmatprep.subr.mxu0 %v1205
    %2107 = vmatpush1.msra.mxu0 %v1204
    %2108 = vmatprep.subr.mxu0 %v1197
    %2109 = vmatpush1.msra.mxu0 %v1196
    %2110 = vmatprep.subr.mxu0 %v1189
    %2111 = vmatpush1.msra.mxu0 %v1188
    %2112 = vmatprep.subr.mxu0 %v1181
    %2113 = vmatpush1.msra.mxu0 %v1180
    %2114 = vmatprep.subr.mxu0 %v1173
    %2115 = vmatpush1.msra.mxu0 %v1172
    %2116 = vmatprep.subr.mxu0 %v1165
    %2117 = vmatpush1.msra.mxu0 %v1164
    %2118 = vmatprep.subr.mxu0 %v1157
    %2119 = vmatpush1.msra.mxu0 %v1156
    %2120 = vmatprep.subr.mxu0 %v1405
    %2121 = vmatpush2.msra.mxu0 %v1404
    %2122 = vmatprep.subr.mxu0 %v1397
    %2123 = vmatpush2.msra.mxu0 %v1396
    %2124 = vmatprep.subr.mxu0 %v1389
    %2125 = vmatpush2.msra.mxu0 %v1388
    %2126 = vmatprep.subr.mxu0 %v1381
    %2127 = vmatpush2.msra.mxu0 %v1380
    %2128 = vmatprep.subr.mxu0 %v1373
    %2129 = vmatpush2.msra.mxu0 %v1372
    %2130 = vmatprep.subr.mxu0 %v1365
    %2131 = vmatpush2.msra.mxu0 %v1364
    %2132 = vmatprep.subr.mxu0 %v1357
    %2133 = vmatpush2.msra.mxu0 %v1356
    %2134 = vmatprep.subr.mxu0 %v1349
    %2135 = vmatpush2.msra.mxu0 %v1348
    %2136 = vmatprep.subr.mxu0 %v1341
    %2137 = vmatpush2.msra.mxu0 %v1340
    %2138 = vmatprep.subr.mxu0 %v1333
    %2139 = vmatpush2.msra.mxu0 %v1332
    %2140 = vmatprep.subr.mxu0 %v1325
    %2141 = vmatpush2.msra.mxu0 %v1324
    %2142 = vmatprep.subr.mxu0 %v1317
    %2143 = vmatpush2.msra.mxu0 %v1316
    %2144 = vmatprep.subr.mxu0 %v1309
    %2145 = vmatpush2.msra.mxu0 %v1308
    %2146 = vmatprep.subr.mxu0 %v1301
    %2147 = vmatpush2.msra.mxu0 %v1300
    %2148 = vmatprep.subr.mxu0 %v1293
    %2149 = vmatpush2.msra.mxu0 %v1292
    %2150 = vmatprep.subr.mxu0 %v1285
    %2151 = vmatpush2.msra.mxu0 %v1284
    %2152 = vmatprep.mubr.f32.mxu0 %v891
    %2153 = vmatmul.mubr.f32.gmra.mxu0 %v890
    %v2154 = vpop.f32.mrf.mxu0
    %v2155 = vadd.f32 0.0, %v2154
    %v2156 = vpop.f32.mrf.mxu0
    %v2157 = vadd.f32 0.0, %v2156
    %2158 = vdwg.mxu0
    %2159 = vmatprep.subr.mxu0 %v1533
    %2160 = vmatpush1.msra.mxu0 %v1532
    %2161 = vmatprep.subr.mxu0 %v1525
    %2162 = vmatpush1.msra.mxu0 %v1524
    %2163 = vmatprep.subr.mxu0 %v1517
    %2164 = vmatpush1.msra.mxu0 %v1516
    %2165 = vmatprep.subr.mxu0 %v1509
    %2166 = vmatpush1.msra.mxu0 %v1508
    %2167 = vmatprep.subr.mxu0 %v1501
    %2168 = vmatpush1.msra.mxu0 %v1500
    %2169 = vmatprep.subr.mxu0 %v1493
    %2170 = vmatpush1.msra.mxu0 %v1492
    %2171 = vmatprep.subr.mxu0 %v1485
    %2172 = vmatpush1.msra.mxu0 %v1484
    %2173 = vmatprep.subr.mxu0 %v1477
    %2174 = vmatpush1.msra.mxu0 %v1476
    %2175 = vmatprep.subr.mxu0 %v1469
    %2176 = vmatpush1.msra.mxu0 %v1468
    %2177 = vmatprep.subr.mxu0 %v1461
    %2178 = vmatpush1.msra.mxu0 %v1460
    %2179 = vmatprep.subr.mxu0 %v1453
    %2180 = vmatpush1.msra.mxu0 %v1452
    %2181 = vmatprep.subr.mxu0 %v1445
    %2182 = vmatpush1.msra.mxu0 %v1444
    %2183 = vmatprep.subr.mxu0 %v1437
    %2184 = vmatpush1.msra.mxu0 %v1436
    %2185 = vmatprep.subr.mxu0 %v1429
    %2186 = vmatpush1.msra.mxu0 %v1428
    %2187 = vmatprep.subr.mxu0 %v1421
    %2188 = vmatpush1.msra.mxu0 %v1420
    %2189 = vmatprep.subr.mxu0 %v1413
    %2190 = vmatpush1.msra.mxu0 %v1412
    %2191 = vmatprep.subr.mxu0 %v1661
    %2192 = vmatpush2.msra.mxu0 %v1660
    %2193 = vmatprep.subr.mxu0 %v1653
    %2194 = vmatpush2.msra.mxu0 %v1652
    %2195 = vmatprep.subr.mxu0 %v1645
    %2196 = vmatpush2.msra.mxu0 %v1644
    %2197 = vmatprep.subr.mxu0 %v1637
    %2198 = vmatpush2.msra.mxu0 %v1636
    %2199 = vmatprep.subr.mxu0 %v1629
    %2200 = vmatpush2.msra.mxu0 %v1628
    %2201 = vmatprep.subr.mxu0 %v1621
    %2202 = vmatpush2.msra.mxu0 %v1620
    %2203 = vmatprep.subr.mxu0 %v1613
    %2204 = vmatpush2.msra.mxu0 %v1612
    %2205 = vmatprep.subr.mxu0 %v1605
    %2206 = vmatpush2.msra.mxu0 %v1604
    %2207 = vmatprep.subr.mxu0 %v1597
    %2208 = vmatpush2.msra.mxu0 %v1596
    %2209 = vmatprep.subr.mxu0 %v1589
    %2210 = vmatpush2.msra.mxu0 %v1588
    %2211 = vmatprep.subr.mxu0 %v1581
    %2212 = vmatpush2.msra.mxu0 %v1580
    %2213 = vmatprep.subr.mxu0 %v1573
    %2214 = vmatpush2.msra.mxu0 %v1572
    %2215 = vmatprep.subr.mxu0 %v1565
    %2216 = vmatpush2.msra.mxu0 %v1564
    %2217 = vmatprep.subr.mxu0 %v1557
    %2218 = vmatpush2.msra.mxu0 %v1556
    %2219 = vmatprep.subr.mxu0 %v1549
    %2220 = vmatpush2.msra.mxu0 %v1548
    %2221 = vmatprep.subr.mxu0 %v1541
    %2222 = vmatpush2.msra.mxu0 %v1540
    %2223 = vmatprep.mubr.f32.mxu0 %v893
    %2224 = vmatmul.mubr.f32.gmra.mxu0 %v892
    %v2225 = vpop.f32.mrf.mxu0
    %v2226 = vadd.f32 %v2155, %v2225
    %v2227 = vpop.f32.mrf.mxu0
    %v2228 = vadd.f32 %v2157, %v2227
    %2229 = vdwg.mxu0
    %v2230 = vld [vmem:[%s11] sm:$0xff]
    %v2231 = vld [vmem:[%s12] sm:$0xff]
    %v2232 = vrot.slane %v1800, 4
    %v2233 = vadd.f32 %v1800, %v2232
    %v2234 = vrot.slane %v2233, 2
    %v2235 = vadd.f32 %v2233, %v2234
    %v2236 = vrot.slane %v2235, 1
    %v2237 = vadd.f32 %v2235, %v2236
    %v2238 = vrot.slane %v1802, 4
    %v2239 = vadd.f32 %v1802, %v2238
    %v2240 = vrot.slane %v2239, 2
    %v2241 = vadd.f32 %v2239, %v2240
    %v2242 = vrot.slane %v2241, 1
    %v2243 = vadd.f32 %v2241, %v2242
    %v2244 = vrot.slane %v1942, 4
    %v2245 = vadd.f32 %v1942, %v2244
    %v2246 = vrot.slane %v2245, 2
    %v2247 = vadd.f32 %v2245, %v2246
    %v2248 = vrot.slane %v2247, 1
    %v2249 = vadd.f32 %v2247, %v2248
    %v2250 = vrot.slane %v1944, 4
    %v2251 = vadd.f32 %v1944, %v2250
    %v2252 = vrot.slane %v2251, 2
    %v2253 = vadd.f32 %v2251, %v2252
    %v2254 = vrot.slane %v2253, 1
    %v2255 = vadd.f32 %v2253, %v2254
    %v2256 = vrot.slane %v2084, 4
    %v2257 = vadd.f32 %v2084, %v2256
    %v2258 = vrot.slane %v2257, 2
    %v2259 = vadd.f32 %v2257, %v2258
    %v2260 = vrot.slane %v2259, 1
    %v2261 = vadd.f32 %v2259, %v2260
    %v2262 = vrot.slane %v2086, 4
    %v2263 = vadd.f32 %v2086, %v2262
    %v2264 = vrot.slane %v2263, 2
    %v2265 = vadd.f32 %v2263, %v2264
    %v2266 = vrot.slane %v2265, 1
    %v2267 = vadd.f32 %v2265, %v2266
    %v2268 = vrot.slane %v2226, 4
    %v2269 = vadd.f32 %v2226, %v2268
    %v2270 = vrot.slane %v2269, 2
    %v2271 = vadd.f32 %v2269, %v2270
    %v2272 = vrot.slane %v2271, 1
    %v2273 = vadd.f32 %v2271, %v2272
    %v2274 = vrot.slane %v2228, 4
    %v2275 = vadd.f32 %v2228, %v2274
    %v2276 = vrot.slane %v2275, 2
    %v2277 = vadd.f32 %v2275, %v2276
    %v2278 = vrot.slane %v2277, 1
    %v2279 = vadd.f32 %v2277, %v2278
    %v2280 = vmul.f32 %v2237, %v162
    %v2281 = vmul.f32 %v2243, %v162
    %v2282 = vmul.f32 %v2249, %v162
    %v2283 = vmul.f32 %v2255, %v162
    %v2284 = vmul.f32 %v2261, %v162
    %v2285 = vmul.f32 %v2267, %v162
    %v2286 = vmul.f32 %v2273, %v162
    %v2287 = vmul.f32 %v2279, %v162
    %v2288 = vsub.f32 %v1800, %v2280
    %v2289 = vsub.f32 %v1802, %v2281
    %v2290 = vsub.f32 %v1942, %v2282
    %v2291 = vsub.f32 %v1944, %v2283
    %v2292 = vsub.f32 %v2084, %v2284
    %v2293 = vsub.f32 %v2086, %v2285
    %v2294 = vsub.f32 %v2226, %v2286
    %v2295 = vsub.f32 %v2228, %v2287
    %v2296 = vmul.f32 %v2288, %v2288
    %v2297 = vmul.f32 %v2289, %v2289
    %v2298 = vmul.f32 %v2290, %v2290
    %v2299 = vmul.f32 %v2291, %v2291
    %v2300 = vmul.f32 %v2292, %v2292
    %v2301 = vmul.f32 %v2293, %v2293
    %v2302 = vmul.f32 %v2294, %v2294
    %v2303 = vmul.f32 %v2295, %v2295
    %v2304 = vrot.slane %v2296, 4
    %v2305 = vadd.f32 %v2296, %v2304
    %v2306 = vrot.slane %v2305, 2
    %v2307 = vadd.f32 %v2305, %v2306
    %v2308 = vrot.slane %v2307, 1
    %v2309 = vadd.f32 %v2307, %v2308
    %v2310 = vrot.slane %v2297, 4
    %v2311 = vadd.f32 %v2297, %v2310
    %v2312 = vrot.slane %v2311, 2
    %v2313 = vadd.f32 %v2311, %v2312
    %v2314 = vrot.slane %v2313, 1
    %v2315 = vadd.f32 %v2313, %v2314
    %v2316 = vrot.slane %v2298, 4
    %v2317 = vadd.f32 %v2298, %v2316
    %v2318 = vrot.slane %v2317, 2
    %v2319 = vadd.f32 %v2317, %v2318
    %v2320 = vrot.slane %v2319, 1
    %v2321 = vadd.f32 %v2319, %v2320
    %v2322 = vrot.slane %v2299, 4
    %v2323 = vadd.f32 %v2299, %v2322
    %v2324 = vrot.slane %v2323, 2
    %v2325 = vadd.f32 %v2323, %v2324
    %v2326 = vrot.slane %v2325, 1
    %v2327 = vadd.f32 %v2325, %v2326
    %v2328 = vrot.slane %v2300, 4
    %v2329 = vadd.f32 %v2300, %v2328
    %v2330 = vrot.slane %v2329, 2
    %v2331 = vadd.f32 %v2329, %v2330
    %v2332 = vrot.slane %v2331, 1
    %v2333 = vadd.f32 %v2331, %v2332
    %v2334 = vrot.slane %v2301, 4
    %v2335 = vadd.f32 %v2301, %v2334
    %v2336 = vrot.slane %v2335, 2
    %v2337 = vadd.f32 %v2335, %v2336
    %v2338 = vrot.slane %v2337, 1
    %v2339 = vadd.f32 %v2337, %v2338
    %v2340 = vrot.slane %v2302, 4
    %v2341 = vadd.f32 %v2302, %v2340
    %v2342 = vrot.slane %v2341, 2
    %v2343 = vadd.f32 %v2341, %v2342
    %v2344 = vrot.slane %v2343, 1
    %v2345 = vadd.f32 %v2343, %v2344
    %v2346 = vrot.slane %v2303, 4
    %v2347 = vadd.f32 %v2303, %v2346
    %v2348 = vrot.slane %v2347, 2
    %v2349 = vadd.f32 %v2347, %v2348
    %v2350 = vrot.slane %v2349, 1
    %v2351 = vadd.f32 %v2349, %v2350
    %v2352 = vmul.f32 %v2309, %v162
    %v2353 = vmul.f32 %v2315, %v162
    %v2354 = vmul.f32 %v2321, %v162
    %v2355 = vmul.f32 %v2327, %v162
    %v2356 = vmul.f32 %v2333, %v162
    %v2357 = vmul.f32 %v2339, %v162
    %v2358 = vmul.f32 %v2345, %v162
    %v2359 = vmul.f32 %v2351, %v162
    %v2360 = vadd.f32 %v2352, 1e-05
    %v2361 = vadd.f32 %v2353, 1e-05
    %v2362 = vadd.f32 %v2354, 1e-05
    %v2363 = vadd.f32 %v2355, 1e-05
    %v2364 = vadd.f32 %v2356, 1e-05
    %v2365 = vadd.f32 %v2357, 1e-05
    %v2366 = vadd.f32 %v2358, 1e-05
    %v2367 = vadd.f32 %v2359, 1e-05
    %v2368 = vrsqrt.pop %v2360
    %v2369 = vrsqrt.pop %v2361
    %v2370 = vrsqrt.pop %v2362
    %v2371 = vrsqrt.pop %v2363
    %v2372 = vrsqrt.pop %v2364
    %v2373 = vrsqrt.pop %v2365
    %v2374 = vrsqrt.pop %v2366
    %v2375 = vrsqrt.pop %v2367
    %v2384 = vcombine.low %v2368, %v2369
    %v2385 = vcombine.low %v2370, %v2371
    %v2386 = vcombine.low %v2372, %v2373
    %v2387 = vcombine.low %v2374, %v2375
    %v2389 = vunpack.c.l.s4 1966171168
    %v2390 = vunpack.c.0.s8 %v2389
    %v2391 = vlaneseq
    %v2392 = vshrl.u32 %v2391, 7
    %v2393 = vsub.s32 %v2390, %v2392
    %v2394 = vrot.slane %v2384, %v2393
    %v2396 = vunpack.c.l.s4 1966171168
    %v2397 = vunpack.c.0.s8 %v2396
    %v2398 = vlaneseq
    %v2399 = vshrl.u32 %v2398, 7
    %v2400 = vsub.s32 %v2397, %v2399
    %v2401 = vrot.slane %v2385, %v2400
    %v2403 = vunpack.c.l.s4 1966171168
    %v2404 = vunpack.c.0.s8 %v2403
    %v2405 = vlaneseq
    %v2406 = vshrl.u32 %v2405, 7
    %v2407 = vsub.s32 %v2404, %v2406
    %v2408 = vrot.slane %v2386, %v2407
    %v2410 = vunpack.c.l.s4 1966171168
    %v2411 = vunpack.c.0.s8 %v2410
    %v2412 = vlaneseq
    %v2413 = vshrl.u32 %v2412, 7
    %v2414 = vsub.s32 %v2411, %v2413
    %v2415 = vrot.slane %v2387, %v2414
    %v2416 = vcombine.low %v2394, %v2401
    %v2417 = vcombine.low %v2408, %v2415
    %v2419 = vunpack.c.l.s4 1966171168
    %v2420 = vunpack.c.0.s8 %v2419
    %v2421 = vlaneseq
    %v2422 = vshrl.u32 %v2421, 7
    %v2423 = vsub.s32 %v2420, %v2422
    %v2424 = vrot.slane %v2416, %v2423
    %v2426 = vunpack.c.l.s4 1966171168
    %v2427 = vunpack.c.0.s8 %v2426
    %v2428 = vlaneseq
    %v2429 = vshrl.u32 %v2428, 7
    %v2430 = vsub.s32 %v2427, %v2429
    %v2431 = vrot.slane %v2417, %v2430
    %v2432 = vcombine.low %v2424, %v2431
    %v2434 = vmul.f32 %v2230, %v2432
    %v2436 = vlaneseq
    %v2437 = vshrl.u32 %v2436, 7
    %v2438 = vsub.s32 0, %v2437
    %v2439 = vrot.slane %v2434, %v2438
    %v2440 = vlaneseq
    %v2441 = vshrl.u32 %v2440, 7
    %v2442 = vsub.s32 1, %v2441
    %v2443 = vrot.slane %v2434, %v2442
    %v2444 = vlaneseq
    %v2445 = vshrl.u32 %v2444, 7
    %v2446 = vsub.s32 2, %v2445
    %v2447 = vrot.slane %v2434, %v2446
    %v2448 = vlaneseq
    %v2449 = vshrl.u32 %v2448, 7
    %v2450 = vsub.s32 3, %v2449
    %v2451 = vrot.slane %v2434, %v2450
    %v2452 = vlaneseq
    %v2453 = vshrl.u32 %v2452, 7
    %v2454 = vsub.s32 4, %v2453
    %v2455 = vrot.slane %v2434, %v2454
    %v2456 = vlaneseq
    %v2457 = vshrl.u32 %v2456, 7
    %v2458 = vsub.s32 5, %v2457
    %v2459 = vrot.slane %v2434, %v2458
    %v2460 = vlaneseq
    %v2461 = vshrl.u32 %v2460, 7
    %v2462 = vsub.s32 6, %v2461
    %v2463 = vrot.slane %v2434, %v2462
    %v2464 = vlaneseq
    %v2465 = vshrl.u32 %v2464, 7
    %v2466 = vsub.s32 7, %v2465
    %v2467 = vrot.slane %v2434, %v2466
    %v2476 = vmul.f32 %v2288, %v2439
    %v2477 = vmul.f32 %v2289, %v2443
    %v2478 = vmul.f32 %v2290, %v2447
    %v2479 = vmul.f32 %v2291, %v2451
    %v2480 = vmul.f32 %v2292, %v2455
    %v2481 = vmul.f32 %v2293, %v2459
    %v2482 = vmul.f32 %v2294, %v2463
    %v2483 = vmul.f32 %v2295, %v2467
    %v2485 = vlaneseq
    %v2486 = vshrl.u32 %v2485, 7
    %v2487 = vsub.s32 0, %v2486
    %v2488 = vrot.slane %v2231, %v2487
    %v2489 = vlaneseq
    %v2490 = vshrl.u32 %v2489, 7
    %v2491 = vsub.s32 1, %v2490
    %v2492 = vrot.slane %v2231, %v2491
    %v2493 = vlaneseq
    %v2494 = vshrl.u32 %v2493, 7
    %v2495 = vsub.s32 2, %v2494
    %v2496 = vrot.slane %v2231, %v2495
    %v2497 = vlaneseq
    %v2498 = vshrl.u32 %v2497, 7
    %v2499 = vsub.s32 3, %v2498
    %v2500 = vrot.slane %v2231, %v2499
    %v2501 = vlaneseq
    %v2502 = vshrl.u32 %v2501, 7
    %v2503 = vsub.s32 4, %v2502
    %v2504 = vrot.slane %v2231, %v2503
    %v2505 = vlaneseq
    %v2506 = vshrl.u32 %v2505, 7
    %v2507 = vsub.s32 5, %v2506
    %v2508 = vrot.slane %v2231, %v2507
    %v2509 = vlaneseq
    %v2510 = vshrl.u32 %v2509, 7
    %v2511 = vsub.s32 6, %v2510
    %v2512 = vrot.slane %v2231, %v2511
    %v2513 = vlaneseq
    %v2514 = vshrl.u32 %v2513, 7
    %v2515 = vsub.s32 7, %v2514
    %v2516 = vrot.slane %v2231, %v2515
    %v2525 = vadd.f32 %v2476, %v2488
    %v2526 = vadd.f32 %v2477, %v2492
    %v2527 = vadd.f32 %v2478, %v2496
    %v2528 = vadd.f32 %v2479, %v2500
    %v2529 = vadd.f32 %v2480, %v2504
    %v2530 = vadd.f32 %v2481, %v2508
    %v2531 = vadd.f32 %v2482, %v2512
    %v2532 = vadd.f32 %v2483, %v2516
    %v2533 = vmul.f32 %v2525, 0.2
    %v2534 = vmul.f32 %v2526, 0.2
    %v2535 = vmul.f32 %v2527, 0.2
    %v2536 = vmul.f32 %v2528, 0.2
    %v2537 = vmul.f32 %v2529, 0.2
    %v2538 = vmul.f32 %v2530, 0.2
    %v2539 = vmul.f32 %v2531, 0.2
    %v2540 = vmul.f32 %v2532, 0.2
    %v2541 = vmax.f32 %v2525, %v2533
    %v2542 = vmax.f32 %v2526, %v2534
    %v2543 = vmax.f32 %v2527, %v2535
    %v2544 = vmax.f32 %v2528, %v2536
    %v2545 = vmax.f32 %v2529, %v2537
    %v2546 = vmax.f32 %v2530, %v2538
    %v2547 = vmax.f32 %v2531, %v2539
    %v2548 = vmax.f32 %v2532, %v2540
    %v2549 = vld [vmem:[%s13] sm:$0xff]
    %v2550 = vld [vmem:[%s13 + $0x8] sm:$0xff]
    %v2551 = vld [vmem:[%s13 + $0x10] sm:$0xff]
    %v2552 = vld [vmem:[%s13 + $0x18] sm:$0xf]
    %v2553 = vld [vmem:[%s13 + $0x1c] sm:$0xff]
    %v2554 = vld [vmem:[%s13 + $0x24] sm:$0xff]
    %v2555 = vld [vmem:[%s13 + $0x2c] sm:$0xff]
    %v2556 = vld [vmem:[%s13 + $0x34] sm:$0xf]
    %v2557 = vld [vmem:[%s13 + $0x38] sm:$0xff]
    %v2558 = vld [vmem:[%s13 + $0x40] sm:$0xff]
    %v2559 = vld [vmem:[%s13 + $0x48] sm:$0xff]
    %v2560 = vld [vmem:[%s13 + $0x50] sm:$0xf]
    %v2561 = vld [vmem:[%s13 + $0x54] sm:$0xff]
    %v2562 = vld [vmem:[%s13 + $0x5c] sm:$0xff]
    %v2563 = vld [vmem:[%s13 + $0x64] sm:$0xff]
    %v2564 = vld [vmem:[%s13 + $0x6c] sm:$0xf]
    %v2565 = vld [vmem:[%s13 + $0x70] sm:$0xff]
    %v2566 = vld [vmem:[%s13 + $0x78] sm:$0xff]
    %v2567 = vld [vmem:[%s13 + $0x80] sm:$0xff]
    %v2568 = vld [vmem:[%s13 + $0x88] sm:$0xf]
    %v2569 = vld [vmem:[%s13 + $0x8c] sm:$0xff]
    %v2570 = vld [vmem:[%s13 + $0x94] sm:$0xff]
    %v2571 = vld [vmem:[%s13 + $0x9c] sm:$0xff]
    %v2572 = vld [vmem:[%s13 + $0xa4] sm:$0xf]
    %v2573 = vld [vmem:[%s13 + $0xa8] sm:$0xff]
    %v2574 = vld [vmem:[%s13 + $0xb0] sm:$0xff]
    %v2575 = vld [vmem:[%s13 + $0xb8] sm:$0xff]
    %v2576 = vld [vmem:[%s13 + $0xc0] sm:$0xf]
    %v2577 = vld [vmem:[%s13 + $0xc4] sm:$0xff]
    %v2578 = vld [vmem:[%s13 + $0xcc] sm:$0xff]
    %v2579 = vld [vmem:[%s13 + $0xd4] sm:$0xff]
    %v2580 = vld [vmem:[%s13 + $0xdc] sm:$0xf]
    %v2581 = vld [vmem:[%s13 + $0xe0] sm:$0xff]
    %v2582 = vld [vmem:[%s13 + $0xe8] sm:$0xff]
    %v2583 = vld [vmem:[%s13 + $0xf0] sm:$0xff]
    %v2584 = vld [vmem:[%s13 + $0xf8] sm:$0xf]
    %v2585 = vld [vmem:[%s13 + $0xfc] sm:$0xff]
    %v2586 = vld [vmem:[%s13 + $0x104] sm:$0xff]
    %v2587 = vld [vmem:[%s13 + $0x10c] sm:$0xff]
    %v2588 = vld [vmem:[%s13 + $0x114] sm:$0xf]
    %v2589 = vld [vmem:[%s13 + $0x118] sm:$0xff]
    %v2590 = vld [vmem:[%s13 + $0x120] sm:$0xff]
    %v2591 = vld [vmem:[%s13 + $0x128] sm:$0xff]
    %v2592 = vld [vmem:[%s13 + $0x130] sm:$0xf]
    %v2593 = vld [vmem:[%s13 + $0x134] sm:$0xff]
    %v2594 = vld [vmem:[%s13 + $0x13c] sm:$0xff]
    %v2595 = vld [vmem:[%s13 + $0x144] sm:$0xff]
    %v2596 = vld [vmem:[%s13 + $0x14c] sm:$0xf]
    %v2597 = vld [vmem:[%s13 + $0x150] sm:$0xff]
    %v2598 = vld [vmem:[%s13 + $0x158] sm:$0xff]
    %v2599 = vld [vmem:[%s13 + $0x160] sm:$0xff]
    %v2600 = vld [vmem:[%s13 + $0x168] sm:$0xf]
    %v2601 = vld [vmem:[%s13 + $0x16c] sm:$0xff]
    %v2602 = vld [vmem:[%s13 + $0x174] sm:$0xff]
    %v2603 = vld [vmem:[%s13 + $0x17c] sm:$0xff]
    %v2604 = vld [vmem:[%s13 + $0x184] sm:$0xf]
    %v2605 = vld [vmem:[%s13 + $0x188] sm:$0xff]
    %v2606 = vld [vmem:[%s13 + $0x190] sm:$0xff]
    %v2607 = vld [vmem:[%s13 + $0x198] sm:$0xff]
    %v2608 = vld [vmem:[%s13 + $0x1a0] sm:$0xf]
    %v2609 = vld [vmem:[%s13 + $0x1a4] sm:$0xff]
    %v2610 = vld [vmem:[%s13 + $0x1ac] sm:$0xff]
    %v2611 = vld [vmem:[%s13 + $0x1b4] sm:$0xff]
    %v2612 = vld [vmem:[%s13 + $0x1bc] sm:$0xf]
    %v2613 = vld [vmem:[%s13 + $0x1c0] sm:$0xff]
    %v2614 = vld [vmem:[%s13 + $0x1c8] sm:$0xff]
    %v2615 = vld [vmem:[%s13 + $0x1d0] sm:$0xff]
    %v2616 = vld [vmem:[%s13 + $0x1d8] sm:$0xf]
    %v2617 = vld [vmem:[%s13 + $0x1dc] sm:$0xff]
    %v2618 = vld [vmem:[%s13 + $0x1e4] sm:$0xff]
    %v2619 = vld [vmem:[%s13 + $0x1ec] sm:$0xff]
    %v2620 = vld [vmem:[%s13 + $0x1f4] sm:$0xf]
    %v2621 = vld [vmem:[%s13 + $0x1f8] sm:$0xff]
    %v2622 = vld [vmem:[%s13 + $0x200] sm:$0xff]
    %v2623 = vld [vmem:[%s13 + $0x208] sm:$0xff]
    %v2624 = vld [vmem:[%s13 + $0x210] sm:$0xf]
    %v2625 = vld [vmem:[%s13 + $0x214] sm:$0xff]
    %v2626 = vld [vmem:[%s13 + $0x21c] sm:$0xff]
    %v2627 = vld [vmem:[%s13 + $0x224] sm:$0xff]
    %v2628 = vld [vmem:[%s13 + $0x22c] sm:$0xf]
    %v2629 = vld [vmem:[%s13 + $0x230] sm:$0xff]
    %v2630 = vld [vmem:[%s13 + $0x238] sm:$0xff]
    %v2631 = vld [vmem:[%s13 + $0x240] sm:$0xff]
    %v2632 = vld [vmem:[%s13 + $0x248] sm:$0xf]
    %v2633 = vld [vmem:[%s13 + $0x24c] sm:$0xff]
    %v2634 = vld [vmem:[%s13 + $0x254] sm:$0xff]
    %v2635 = vld [vmem:[%s13 + $0x25c] sm:$0xff]
    %v2636 = vld [vmem:[%s13 + $0x264] sm:$0xf]
    %v2637 = vld [vmem:[%s13 + $0x268] sm:$0xff]
    %v2638 = vld [vmem:[%s13 + $0x270] sm:$0xff]
    %v2639 = vld [vmem:[%s13 + $0x278] sm:$0xff]
    %v2640 = vld [vmem:[%s13 + $0x280] sm:$0xf]
    %v2641 = vld [vmem:[%s13 + $0x284] sm:$0xff]
    %v2642 = vld [vmem:[%s13 + $0x28c] sm:$0xff]
    %v2643 = vld [vmem:[%s13 + $0x294] sm:$0xff]
    %v2644 = vld [vmem:[%s13 + $0x29c] sm:$0xf]
    %v2645 = vld [vmem:[%s13 + $0x2a0] sm:$0xff]
    %v2646 = vld [vmem:[%s13 + $0x2a8] sm:$0xff]
    %v2647 = vld [vmem:[%s13 + $0x2b0] sm:$0xff]
    %v2648 = vld [vmem:[%s13 + $0x2b8] sm:$0xf]
    %v2649 = vld [vmem:[%s13 + $0x2bc] sm:$0xff]
    %v2650 = vld [vmem:[%s13 + $0x2c4] sm:$0xff]
    %v2651 = vld [vmem:[%s13 + $0x2cc] sm:$0xff]
    %v2652 = vld [vmem:[%s13 + $0x2d4] sm:$0xf]
    %v2653 = vld [vmem:[%s13 + $0x2d8] sm:$0xff]
    %v2654 = vld [vmem:[%s13 + $0x2e0] sm:$0xff]
    %v2655 = vld [vmem:[%s13 + $0x2e8] sm:$0xff]
    %v2656 = vld [vmem:[%s13 + $0x2f0] sm:$0xf]
    %v2657 = vld [vmem:[%s13 + $0x2f4] sm:$0xff]
    %v2658 = vld [vmem:[%s13 + $0x2fc] sm:$0xff]
    %v2659 = vld [vmem:[%s13 + $0x304] sm:$0xff]
    %v2660 = vld [vmem:[%s13 + $0x30c] sm:$0xf]
    %v2661 = vld [vmem:[%s13 + $0x310] sm:$0xff]
    %v2662 = vld [vmem:[%s13 + $0x318] sm:$0xff]
    %v2663 = vld [vmem:[%s13 + $0x320] sm:$0xff]
    %v2664 = vld [vmem:[%s13 + $0x328] sm:$0xf]
    %v2665 = vld [vmem:[%s13 + $0x32c] sm:$0xff]
    %v2666 = vld [vmem:[%s13 + $0x334] sm:$0xff]
    %v2667 = vld [vmem:[%s13 + $0x33c] sm:$0xff]
    %v2668 = vld [vmem:[%s13 + $0x344] sm:$0xf]
    %v2669 = vld [vmem:[%s13 + $0x348] sm:$0xff]
    %v2670 = vld [vmem:[%s13 + $0x350] sm:$0xff]
    %v2671 = vld [vmem:[%s13 + $0x358] sm:$0xff]
    %v2672 = vld [vmem:[%s13 + $0x360] sm:$0xf]
    %v2673 = vld [vmem:[%s13 + $0x364] sm:$0xff]
    %v2674 = vld [vmem:[%s13 + $0x36c] sm:$0xff]
    %v2675 = vld [vmem:[%s13 + $0x374] sm:$0xff]
    %v2676 = vld [vmem:[%s13 + $0x37c] sm:$0xf]
    %v2677 = vld [vmem:[%s13 + $0x380] sm:$0xff]
    %v2678 = vld [vmem:[%s13 + $0x388] sm:$0xff]
    %v2679 = vld [vmem:[%s13 + $0x390] sm:$0xff]
    %v2680 = vld [vmem:[%s13 + $0x398] sm:$0xf]
    %v2681 = vld [vmem:[%s13 + $0x39c] sm:$0xff]
    %v2682 = vld [vmem:[%s13 + $0x3a4] sm:$0xff]
    %v2683 = vld [vmem:[%s13 + $0x3ac] sm:$0xff]
    %v2684 = vld [vmem:[%s13 + $0x3b4] sm:$0xf]
    %v2685 = vld [vmem:[%s13 + $0x3b8] sm:$0xff]
    %v2686 = vld [vmem:[%s13 + $0x3c0] sm:$0xff]
    %v2687 = vld [vmem:[%s13 + $0x3c8] sm:$0xff]
    %v2688 = vld [vmem:[%s13 + $0x3d0] sm:$0xf]
    %v2689 = vld [vmem:[%s13 + $0x3d4] sm:$0xff]
    %v2690 = vld [vmem:[%s13 + $0x3dc] sm:$0xff]
    %v2691 = vld [vmem:[%s13 + $0x3e4] sm:$0xff]
    %v2692 = vld [vmem:[%s13 + $0x3ec] sm:$0xf]
    %v2693 = vld [vmem:[%s13 + $0x3f0] sm:$0xff]
    %v2694 = vld [vmem:[%s13 + $0x3f8] sm:$0xff]
    %v2695 = vld [vmem:[%s13 + $0x400] sm:$0xff]
    %v2696 = vld [vmem:[%s13 + $0x408] sm:$0xf]
    %v2697 = vld [vmem:[%s13 + $0x40c] sm:$0xff]
    %v2698 = vld [vmem:[%s13 + $0x414] sm:$0xff]
    %v2699 = vld [vmem:[%s13 + $0x41c] sm:$0xff]
    %v2700 = vld [vmem:[%s13 + $0x424] sm:$0xf]
    %v2701 = vld [vmem:[%s13 + $0x428] sm:$0xff]
    %v2702 = vld [vmem:[%s13 + $0x430] sm:$0xff]
    %v2703 = vld [vmem:[%s13 + $0x438] sm:$0xff]
    %v2704 = vld [vmem:[%s13 + $0x440] sm:$0xf]
    %v2705 = vld [vmem:[%s13 + $0x444] sm:$0xff]
    %v2706 = vld [vmem:[%s13 + $0x44c] sm:$0xff]
    %v2707 = vld [vmem:[%s13 + $0x454] sm:$0xff]
    %v2708 = vld [vmem:[%s13 + $0x45c] sm:$0xf]
    %v2709 = vld [vmem:[%s13 + $0x460] sm:$0xff]
    %v2710 = vld [vmem:[%s13 + $0x468] sm:$0xff]
    %v2711 = vld [vmem:[%s13 + $0x470] sm:$0xff]
    %v2712 = vld [vmem:[%s13 + $0x478] sm:$0xf]
    %v2713 = vld [vmem:[%s13 + $0x47c] sm:$0xff]
    %v2714 = vld [vmem:[%s13 + $0x484] sm:$0xff]
    %v2715 = vld [vmem:[%s13 + $0x48c] sm:$0xff]
    %v2716 = vld [vmem:[%s13 + $0x494] sm:$0xf]
    %v2717 = vld [vmem:[%s13 + $0x498] sm:$0xff]
    %v2718 = vld [vmem:[%s13 + $0x4a0] sm:$0xff]
    %v2719 = vld [vmem:[%s13 + $0x4a8] sm:$0xff]
    %v2720 = vld [vmem:[%s13 + $0x4b0] sm:$0xf]
    %v2721 = vld [vmem:[%s13 + $0x4b4] sm:$0xff]
    %v2722 = vld [vmem:[%s13 + $0x4bc] sm:$0xff]
    %v2723 = vld [vmem:[%s13 + $0x4c4] sm:$0xff]
    %v2724 = vld [vmem:[%s13 + $0x4cc] sm:$0xf]
    %v2725 = vld [vmem:[%s13 + $0x4d0] sm:$0xff]
    %v2726 = vld [vmem:[%s13 + $0x4d8] sm:$0xff]
    %v2727 = vld [vmem:[%s13 + $0x4e0] sm:$0xff]
    %v2728 = vld [vmem:[%s13 + $0x4e8] sm:$0xf]
    %v2729 = vld [vmem:[%s13 + $0x4ec] sm:$0xff]
    %v2730 = vld [vmem:[%s13 + $0x4f4] sm:$0xff]
    %v2731 = vld [vmem:[%s13 + $0x4fc] sm:$0xff]
    %v2732 = vld [vmem:[%s13 + $0x504] sm:$0xf]
    %v2733 = vld [vmem:[%s13 + $0x508] sm:$0xff]
    %v2734 = vld [vmem:[%s13 + $0x510] sm:$0xff]
    %v2735 = vld [vmem:[%s13 + $0x518] sm:$0xff]
    %v2736 = vld [vmem:[%s13 + $0x520] sm:$0xf]
    %v2737 = vld [vmem:[%s13 + $0x524] sm:$0xff]
    %v2738 = vld [vmem:[%s13 + $0x52c] sm:$0xff]
    %v2739 = vld [vmem:[%s13 + $0x534] sm:$0xff]
    %v2740 = vld [vmem:[%s13 + $0x53c] sm:$0xf]
    %v2741 = vld [vmem:[%s13 + $0x540] sm:$0xff]
    %v2742 = vld [vmem:[%s13 + $0x548] sm:$0xff]
    %v2743 = vld [vmem:[%s13 + $0x550] sm:$0xff]
    %v2744 = vld [vmem:[%s13 + $0x558] sm:$0xf]
    %v2745 = vld [vmem:[%s13 + $0x55c] sm:$0xff]
    %v2746 = vld [vmem:[%s13 + $0x564] sm:$0xff]
    %v2747 = vld [vmem:[%s13 + $0x56c] sm:$0xff]
    %v2748 = vld [vmem:[%s13 + $0x574] sm:$0xf]
    %v2749 = vld [vmem:[%s13 + $0x578] sm:$0xff]
    %v2750 = vld [vmem:[%s13 + $0x580] sm:$0xff]
    %v2751 = vld [vmem:[%s13 + $0x588] sm:$0xff]
    %v2752 = vld [vmem:[%s13 + $0x590] sm:$0xf]
    %v2753 = vld [vmem:[%s13 + $0x594] sm:$0xff]
    %v2754 = vld [vmem:[%s13 + $0x59c] sm:$0xff]
    %v2755 = vld [vmem:[%s13 + $0x5a4] sm:$0xff]
    %v2756 = vld [vmem:[%s13 + $0x5ac] sm:$0xf]
    %v2757 = vld [vmem:[%s13 + $0x5b0] sm:$0xff]
    %v2758 = vld [vmem:[%s13 + $0x5b8] sm:$0xff]
    %v2759 = vld [vmem:[%s13 + $0x5c0] sm:$0xff]
    %v2760 = vld [vmem:[%s13 + $0x5c8] sm:$0xf]
    %v2761 = vld [vmem:[%s13 + $0x5cc] sm:$0xff]
    %v2762 = vld [vmem:[%s13 + $0x5d4] sm:$0xff]
    %v2763 = vld [vmem:[%s13 + $0x5dc] sm:$0xff]
    %v2764 = vld [vmem:[%s13 + $0x5e4] sm:$0xf]
    %v2765 = vld [vmem:[%s13 + $0x5e8] sm:$0xff]
    %v2766 = vld [vmem:[%s13 + $0x5f0] sm:$0xff]
    %v2767 = vld [vmem:[%s13 + $0x5f8] sm:$0xff]
    %v2768 = vld [vmem:[%s13 + $0x600] sm:$0xf]
    %v2769 = vld [vmem:[%s13 + $0x604] sm:$0xff]
    %v2770 = vld [vmem:[%s13 + $0x60c] sm:$0xff]
    %v2771 = vld [vmem:[%s13 + $0x614] sm:$0xff]
    %v2772 = vld [vmem:[%s13 + $0x61c] sm:$0xf]
    %v2773 = vld [vmem:[%s13 + $0x620] sm:$0xff]
    %v2774 = vld [vmem:[%s13 + $0x628] sm:$0xff]
    %v2775 = vld [vmem:[%s13 + $0x630] sm:$0xff]
    %v2776 = vld [vmem:[%s13 + $0x638] sm:$0xf]
    %v2777 = vld [vmem:[%s13 + $0x63c] sm:$0xff]
    %v2778 = vld [vmem:[%s13 + $0x644] sm:$0xff]
    %v2779 = vld [vmem:[%s13 + $0x64c] sm:$0xff]
    %v2780 = vld [vmem:[%s13 + $0x654] sm:$0xf]
    %v2781 = vld [vmem:[%s13 + $0x658] sm:$0xff]
    %v2782 = vld [vmem:[%s13 + $0x660] sm:$0xff]
    %v2783 = vld [vmem:[%s13 + $0x668] sm:$0xff]
    %v2784 = vld [vmem:[%s13 + $0x670] sm:$0xf]
    %v2785 = vld [vmem:[%s13 + $0x674] sm:$0xff]
    %v2786 = vld [vmem:[%s13 + $0x67c] sm:$0xff]
    %v2787 = vld [vmem:[%s13 + $0x684] sm:$0xff]
    %v2788 = vld [vmem:[%s13 + $0x68c] sm:$0xf]
    %v2789 = vld [vmem:[%s13 + $0x690] sm:$0xff]
    %v2790 = vld [vmem:[%s13 + $0x698] sm:$0xff]
    %v2791 = vld [vmem:[%s13 + $0x6a0] sm:$0xff]
    %v2792 = vld [vmem:[%s13 + $0x6a8] sm:$0xf]
    %v2793 = vld [vmem:[%s13 + $0x6ac] sm:$0xff]
    %v2794 = vld [vmem:[%s13 + $0x6b4] sm:$0xff]
    %v2795 = vld [vmem:[%s13 + $0x6bc] sm:$0xff]
    %v2796 = vld [vmem:[%s13 + $0x6c4] sm:$0xf]
    %v2797 = vld [vmem:[%s13 + $0x6c8] sm:$0xff]
    %v2798 = vld [vmem:[%s13 + $0x6d0] sm:$0xff]
    %v2799 = vld [vmem:[%s13 + $0x6d8] sm:$0xff]
    %v2800 = vld [vmem:[%s13 + $0x6e0] sm:$0xf]
    %v2801 = vld [vmem:[%s13 + $0x6e4] sm:$0xff]
    %v2802 = vld [vmem:[%s13 + $0x6ec] sm:$0xff]
    %v2803 = vld [vmem:[%s13 + $0x6f4] sm:$0xff]
    %v2804 = vld [vmem:[%s13 + $0x6fc] sm:$0xf]
    %v2805 = vld [vmem:[%s13 + $0x700] sm:$0xff]
    %v2806 = vld [vmem:[%s13 + $0x708] sm:$0xff]
    %v2807 = vld [vmem:[%s13 + $0x710] sm:$0xff]
    %v2808 = vld [vmem:[%s13 + $0x718] sm:$0xf]
    %v2809 = vld [vmem:[%s13 + $0x71c] sm:$0xff]
    %v2810 = vld [vmem:[%s13 + $0x724] sm:$0xff]
    %v2811 = vld [vmem:[%s13 + $0x72c] sm:$0xff]
    %v2812 = vld [vmem:[%s13 + $0x734] sm:$0xf]
    %v2813 = vld [vmem:[%s13 + $0x738] sm:$0xff]
    %v2814 = vld [vmem:[%s13 + $0x740] sm:$0xff]
    %v2815 = vld [vmem:[%s13 + $0x748] sm:$0xff]
    %v2816 = vld [vmem:[%s13 + $0x750] sm:$0xf]
    %v2817 = vld [vmem:[%s13 + $0x754] sm:$0xff]
    %v2818 = vld [vmem:[%s13 + $0x75c] sm:$0xff]
    %v2819 = vld [vmem:[%s13 + $0x764] sm:$0xff]
    %v2820 = vld [vmem:[%s13 + $0x76c] sm:$0xf]
    %v2821 = vld [vmem:[%s13 + $0x770] sm:$0xff]
    %v2822 = vld [vmem:[%s13 + $0x778] sm:$0xff]
    %v2823 = vld [vmem:[%s13 + $0x780] sm:$0xff]
    %v2824 = vld [vmem:[%s13 + $0x788] sm:$0xf]
    %v2825 = vld [vmem:[%s13 + $0x78c] sm:$0xff]
    %v2826 = vld [vmem:[%s13 + $0x794] sm:$0xff]
    %v2827 = vld [vmem:[%s13 + $0x79c] sm:$0xff]
    %v2828 = vld [vmem:[%s13 + $0x7a4] sm:$0xf]
    %v2829 = vld [vmem:[%s13 + $0x7a8] sm:$0xff]
    %v2830 = vld [vmem:[%s13 + $0x7b0] sm:$0xff]
    %v2831 = vld [vmem:[%s13 + $0x7b8] sm:$0xff]
    %v2832 = vld [vmem:[%s13 + $0x7c0] sm:$0xf]
    %v2833 = vld [vmem:[%s13 + $0x7c4] sm:$0xff]
    %v2834 = vld [vmem:[%s13 + $0x7cc] sm:$0xff]
    %v2835 = vld [vmem:[%s13 + $0x7d4] sm:$0xff]
    %v2836 = vld [vmem:[%s13 + $0x7dc] sm:$0xf]
    %v2837 = vld [vmem:[%s13 + $0x7e0] sm:$0xff]
    %v2838 = vld [vmem:[%s13 + $0x7e8] sm:$0xff]
    %v2839 = vld [vmem:[%s13 + $0x7f0] sm:$0xff]
    %v2840 = vld [vmem:[%s13 + $0x7f8] sm:$0xf]
    %v2841 = vld [vmem:[%s13 + $0x7fc] sm:$0xff]
    %v2842 = vld [vmem:[%s13 + $0x804] sm:$0xff]
    %v2843 = vld [vmem:[%s13 + $0x80c] sm:$0xff]
    %v2844 = vld [vmem:[%s13 + $0x814] sm:$0xf]
    %v2845 = vld [vmem:[%s13 + $0x818] sm:$0xff]
    %v2846 = vld [vmem:[%s13 + $0x820] sm:$0xff]
    %v2847 = vld [vmem:[%s13 + $0x828] sm:$0xff]
    %v2848 = vld [vmem:[%s13 + $0x830] sm:$0xf]
    %v2849 = vld [vmem:[%s13 + $0x834] sm:$0xff]
    %v2850 = vld [vmem:[%s13 + $0x83c] sm:$0xff]
    %v2851 = vld [vmem:[%s13 + $0x844] sm:$0xff]
    %v2852 = vld [vmem:[%s13 + $0x84c] sm:$0xf]
    %v2853 = vld [vmem:[%s13 + $0x850] sm:$0xff]
    %v2854 = vld [vmem:[%s13 + $0x858] sm:$0xff]
    %v2855 = vld [vmem:[%s13 + $0x860] sm:$0xff]
    %v2856 = vld [vmem:[%s13 + $0x868] sm:$0xf]
    %v2857 = vld [vmem:[%s13 + $0x86c] sm:$0xff]
    %v2858 = vld [vmem:[%s13 + $0x874] sm:$0xff]
    %v2859 = vld [vmem:[%s13 + $0x87c] sm:$0xff]
    %v2860 = vld [vmem:[%s13 + $0x884] sm:$0xf]
    %v2861 = vld [vmem:[%s13 + $0x888] sm:$0xff]
    %v2862 = vld [vmem:[%s13 + $0x890] sm:$0xff]
    %v2863 = vld [vmem:[%s13 + $0x898] sm:$0xff]
    %v2864 = vld [vmem:[%s13 + $0x8a0] sm:$0xf]
    %v2865 = vld [vmem:[%s13 + $0x8a4] sm:$0xff]
    %v2866 = vld [vmem:[%s13 + $0x8ac] sm:$0xff]
    %v2867 = vld [vmem:[%s13 + $0x8b4] sm:$0xff]
    %v2868 = vld [vmem:[%s13 + $0x8bc] sm:$0xf]
    %v2869 = vld [vmem:[%s13 + $0x8c0] sm:$0xff]
    %v2870 = vld [vmem:[%s13 + $0x8c8] sm:$0xff]
    %v2871 = vld [vmem:[%s13 + $0x8d0] sm:$0xff]
    %v2872 = vld [vmem:[%s13 + $0x8d8] sm:$0xf]
    %v2873 = vld [vmem:[%s13 + $0x8dc] sm:$0xff]
    %v2874 = vld [vmem:[%s13 + $0x8e4] sm:$0xff]
    %v2875 = vld [vmem:[%s13 + $0x8ec] sm:$0xff]
    %v2876 = vld [vmem:[%s13 + $0x8f4] sm:$0xf]
    %v2877 = vld [vmem:[%s13 + $0x8f8] sm:$0xff]
    %v2878 = vld [vmem:[%s13 + $0x900] sm:$0xff]
    %v2879 = vld [vmem:[%s13 + $0x908] sm:$0xff]
    %v2880 = vld [vmem:[%s13 + $0x910] sm:$0xf]
    %v2881 = vld [vmem:[%s13 + $0x914] sm:$0xff]
    %v2882 = vld [vmem:[%s13 + $0x91c] sm:$0xff]
    %v2883 = vld [vmem:[%s13 + $0x924] sm:$0xff]
    %v2884 = vld [vmem:[%s13 + $0x92c] sm:$0xf]
    %v2885 = vld [vmem:[%s13 + $0x930] sm:$0xff]
    %v2886 = vld [vmem:[%s13 + $0x938] sm:$0xff]
    %v2887 = vld [vmem:[%s13 + $0x940] sm:$0xff]
    %v2888 = vld [vmem:[%s13 + $0x948] sm:$0xf]
    %v2889 = vld [vmem:[%s13 + $0x94c] sm:$0xff]
    %v2890 = vld [vmem:[%s13 + $0x954] sm:$0xff]
    %v2891 = vld [vmem:[%s13 + $0x95c] sm:$0xff]
    %v2892 = vld [vmem:[%s13 + $0x964] sm:$0xf]
    %v2893 = vld [vmem:[%s13 + $0x968] sm:$0xff]
    %v2894 = vld [vmem:[%s13 + $0x970] sm:$0xff]
    %v2895 = vld [vmem:[%s13 + $0x978] sm:$0xff]
    %v2896 = vld [vmem:[%s13 + $0x980] sm:$0xf]
    %v2897 = vld [vmem:[%s13 + $0x984] sm:$0xff]
    %v2898 = vld [vmem:[%s13 + $0x98c] sm:$0xff]
    %v2899 = vld [vmem:[%s13 + $0x994] sm:$0xff]
    %v2900 = vld [vmem:[%s13 + $0x99c] sm:$0xf]
    %v2901 = vld [vmem:[%s13 + $0x9a0] sm:$0xff]
    %v2902 = vld [vmem:[%s13 + $0x9a8] sm:$0xff]
    %v2903 = vld [vmem:[%s13 + $0x9b0] sm:$0xff]
    %v2904 = vld [vmem:[%s13 + $0x9b8] sm:$0xf]
    %v2905 = vld [vmem:[%s13 + $0x9bc] sm:$0xff]
    %v2906 = vld [vmem:[%s13 + $0x9c4] sm:$0xff]
    %v2907 = vld [vmem:[%s13 + $0x9cc] sm:$0xff]
    %v2908 = vld [vmem:[%s13 + $0x9d4] sm:$0xf]
    %v2909 = vld [vmem:[%s13 + $0x9d8] sm:$0xff]
    %v2910 = vld [vmem:[%s13 + $0x9e0] sm:$0xff]
    %v2911 = vld [vmem:[%s13 + $0x9e8] sm:$0xff]
    %v2912 = vld [vmem:[%s13 + $0x9f0] sm:$0xf]
    %v2913 = vld [vmem:[%s13 + $0x9f4] sm:$0xff]
    %v2914 = vld [vmem:[%s13 + $0x9fc] sm:$0xff]
    %v2915 = vld [vmem:[%s13 + $0xa04] sm:$0xff]
    %v2916 = vld [vmem:[%s13 + $0xa0c] sm:$0xf]
    %v2917 = vld [vmem:[%s13 + $0xa10] sm:$0xff]
    %v2918 = vld [vmem:[%s13 + $0xa18] sm:$0xff]
    %v2919 = vld [vmem:[%s13 + $0xa20] sm:$0xff]
    %v2920 = vld [vmem:[%s13 + $0xa28] sm:$0xf]
    %v2921 = vld [vmem:[%s13 + $0xa2c] sm:$0xff]
    %v2922 = vld [vmem:[%s13 + $0xa34] sm:$0xff]
    %v2923 = vld [vmem:[%s13 + $0xa3c] sm:$0xff]
    %v2924 = vld [vmem:[%s13 + $0xa44] sm:$0xf]
    %v2925 = vld [vmem:[%s13 + $0xa48] sm:$0xff]
    %v2926 = vld [vmem:[%s13 + $0xa50] sm:$0xff]
    %v2927 = vld [vmem:[%s13 + $0xa58] sm:$0xff]
    %v2928 = vld [vmem:[%s13 + $0xa60] sm:$0xf]
    %v2929 = vld [vmem:[%s13 + $0xa64] sm:$0xff]
    %v2930 = vld [vmem:[%s13 + $0xa6c] sm:$0xff]
    %v2931 = vld [vmem:[%s13 + $0xa74] sm:$0xff]
    %v2932 = vld [vmem:[%s13 + $0xa7c] sm:$0xf]
    %v2933 = vld [vmem:[%s13 + $0xa80] sm:$0xff]
    %v2934 = vld [vmem:[%s13 + $0xa88] sm:$0xff]
    %v2935 = vld [vmem:[%s13 + $0xa90] sm:$0xff]
    %v2936 = vld [vmem:[%s13 + $0xa98] sm:$0xf]
    %v2937 = vld [vmem:[%s13 + $0xa9c] sm:$0xff]
    %v2938 = vld [vmem:[%s13 + $0xaa4] sm:$0xff]
    %v2939 = vld [vmem:[%s13 + $0xaac] sm:$0xff]
    %v2940 = vld [vmem:[%s13 + $0xab4] sm:$0xf]
    %v2941 = vld [vmem:[%s13 + $0xab8] sm:$0xff]
    %v2942 = vld [vmem:[%s13 + $0xac0] sm:$0xff]
    %v2943 = vld [vmem:[%s13 + $0xac8] sm:$0xff]
    %v2944 = vld [vmem:[%s13 + $0xad0] sm:$0xf]
    %v2945 = vld [vmem:[%s13 + $0xad4] sm:$0xff]
    %v2946 = vld [vmem:[%s13 + $0xadc] sm:$0xff]
    %v2947 = vld [vmem:[%s13 + $0xae4] sm:$0xff]
    %v2948 = vld [vmem:[%s13 + $0xaec] sm:$0xf]
    %v2949 = vld [vmem:[%s13 + $0xaf0] sm:$0xff]
    %v2950 = vld [vmem:[%s13 + $0xaf8] sm:$0xff]
    %v2951 = vld [vmem:[%s13 + $0xb00] sm:$0xff]
    %v2952 = vld [vmem:[%s13 + $0xb08] sm:$0xf]
    %v2953 = vld [vmem:[%s13 + $0xb0c] sm:$0xff]
    %v2954 = vld [vmem:[%s13 + $0xb14] sm:$0xff]
    %v2955 = vld [vmem:[%s13 + $0xb1c] sm:$0xff]
    %v2956 = vld [vmem:[%s13 + $0xb24] sm:$0xf]
    %v2957 = vld [vmem:[%s13 + $0xb28] sm:$0xff]
    %v2958 = vld [vmem:[%s13 + $0xb30] sm:$0xff]
    %v2959 = vld [vmem:[%s13 + $0xb38] sm:$0xff]
    %v2960 = vld [vmem:[%s13 + $0xb40] sm:$0xf]
    %v2961 = vld [vmem:[%s13 + $0xb44] sm:$0xff]
    %v2962 = vld [vmem:[%s13 + $0xb4c] sm:$0xff]
    %v2963 = vld [vmem:[%s13 + $0xb54] sm:$0xff]
    %v2964 = vld [vmem:[%s13 + $0xb5c] sm:$0xf]
    %v2965 = vld [vmem:[%s13 + $0xb60] sm:$0xff]
    %v2966 = vld [vmem:[%s13 + $0xb68] sm:$0xff]
    %v2967 = vld [vmem:[%s13 + $0xb70] sm:$0xff]
    %v2968 = vld [vmem:[%s13 + $0xb78] sm:$0xf]
    %v2969 = vld [vmem:[%s13 + $0xb7c] sm:$0xff]
    %v2970 = vld [vmem:[%s13 + $0xb84] sm:$0xff]
    %v2971 = vld [vmem:[%s13 + $0xb8c] sm:$0xff]
    %v2972 = vld [vmem:[%s13 + $0xb94] sm:$0xf]
    %v2973 = vld [vmem:[%s13 + $0xb98] sm:$0xff]
    %v2974 = vld [vmem:[%s13 + $0xba0] sm:$0xff]
    %v2975 = vld [vmem:[%s13 + $0xba8] sm:$0xff]
    %v2976 = vld [vmem:[%s13 + $0xbb0] sm:$0xf]
    %v2977 = vld [vmem:[%s13 + $0xbb4] sm:$0xff]
    %v2978 = vld [vmem:[%s13 + $0xbbc] sm:$0xff]
    %v2979 = vld [vmem:[%s13 + $0xbc4] sm:$0xff]
    %v2980 = vld [vmem:[%s13 + $0xbcc] sm:$0xf]
    %v2981 = vld [vmem:[%s13 + $0xbd0] sm:$0xff]
    %v2982 = vld [vmem:[%s13 + $0xbd8] sm:$0xff]
    %v2983 = vld [vmem:[%s13 + $0xbe0] sm:$0xff]
    %v2984 = vld [vmem:[%s13 + $0xbe8] sm:$0xf]
    %v2985 = vld [vmem:[%s13 + $0xbec] sm:$0xff]
    %v2986 = vld [vmem:[%s13 + $0xbf4] sm:$0xff]
    %v2987 = vld [vmem:[%s13 + $0xbfc] sm:$0xff]
    %v2988 = vld [vmem:[%s13 + $0xc04] sm:$0xf]
    %v2989 = vld [vmem:[%s13 + $0xc08] sm:$0xff]
    %v2990 = vld [vmem:[%s13 + $0xc10] sm:$0xff]
    %v2991 = vld [vmem:[%s13 + $0xc18] sm:$0xff]
    %v2992 = vld [vmem:[%s13 + $0xc20] sm:$0xf]
    %v2993 = vld [vmem:[%s13 + $0xc24] sm:$0xff]
    %v2994 = vld [vmem:[%s13 + $0xc2c] sm:$0xff]
    %v2995 = vld [vmem:[%s13 + $0xc34] sm:$0xff]
    %v2996 = vld [vmem:[%s13 + $0xc3c] sm:$0xf]
    %v2997 = vld [vmem:[%s13 + $0xc40] sm:$0xff]
    %v2998 = vld [vmem:[%s13 + $0xc48] sm:$0xff]
    %v2999 = vld [vmem:[%s13 + $0xc50] sm:$0xff]
    %v3000 = vld [vmem:[%s13 + $0xc58] sm:$0xf]
    %v3001 = vld [vmem:[%s13 + $0xc5c] sm:$0xff]
    %v3002 = vld [vmem:[%s13 + $0xc64] sm:$0xff]
    %v3003 = vld [vmem:[%s13 + $0xc6c] sm:$0xff]
    %v3004 = vld [vmem:[%s13 + $0xc74] sm:$0xf]
    %v3005 = vld [vmem:[%s13 + $0xc78] sm:$0xff]
    %v3006 = vld [vmem:[%s13 + $0xc80] sm:$0xff]
    %v3007 = vld [vmem:[%s13 + $0xc88] sm:$0xff]
    %v3008 = vld [vmem:[%s13 + $0xc90] sm:$0xf]
    %v3009 = vld [vmem:[%s13 + $0xc94] sm:$0xff]
    %v3010 = vld [vmem:[%s13 + $0xc9c] sm:$0xff]
    %v3011 = vld [vmem:[%s13 + $0xca4] sm:$0xff]
    %v3012 = vld [vmem:[%s13 + $0xcac] sm:$0xf]
    %v3013 = vld [vmem:[%s13 + $0xcb0] sm:$0xff]
    %v3014 = vld [vmem:[%s13 + $0xcb8] sm:$0xff]
    %v3015 = vld [vmem:[%s13 + $0xcc0] sm:$0xff]
    %v3016 = vld [vmem:[%s13 + $0xcc8] sm:$0xf]
    %v3017 = vld [vmem:[%s13 + $0xccc] sm:$0xff]
    %v3018 = vld [vmem:[%s13 + $0xcd4] sm:$0xff]
    %v3019 = vld [vmem:[%s13 + $0xcdc] sm:$0xff]
    %v3020 = vld [vmem:[%s13 + $0xce4] sm:$0xf]
    %v3021 = vld [vmem:[%s13 + $0xce8] sm:$0xff]
    %v3022 = vld [vmem:[%s13 + $0xcf0] sm:$0xff]
    %v3023 = vld [vmem:[%s13 + $0xcf8] sm:$0xff]
    %v3024 = vld [vmem:[%s13 + $0xd00] sm:$0xf]
    %v3025 = vld [vmem:[%s13 + $0xd04] sm:$0xff]
    %v3026 = vld [vmem:[%s13 + $0xd0c] sm:$0xff]
    %v3027 = vld [vmem:[%s13 + $0xd14] sm:$0xff]
    %v3028 = vld [vmem:[%s13 + $0xd1c] sm:$0xf]
    %v3029 = vld [vmem:[%s13 + $0xd20] sm:$0xff]
    %v3030 = vld [vmem:[%s13 + $0xd28] sm:$0xff]
    %v3031 = vld [vmem:[%s13 + $0xd30] sm:$0xff]
    %v3032 = vld [vmem:[%s13 + $0xd38] sm:$0xf]
    %v3033 = vld [vmem:[%s13 + $0xd3c] sm:$0xff]
    %v3034 = vld [vmem:[%s13 + $0xd44] sm:$0xff]
    %v3035 = vld [vmem:[%s13 + $0xd4c] sm:$0xff]
    %v3036 = vld [vmem:[%s13 + $0xd54] sm:$0xf]
    %v3037 = vld [vmem:[%s13 + $0xd58] sm:$0xff]
    %v3038 = vld [vmem:[%s13 + $0xd60] sm:$0xff]
    %v3039 = vld [vmem:[%s13 + $0xd68] sm:$0xff]
    %v3040 = vld [vmem:[%s13 + $0xd70] sm:$0xf]
    %v3041 = vld [vmem:[%s13 + $0xd74] sm:$0xff]
    %v3042 = vld [vmem:[%s13 + $0xd7c] sm:$0xff]
    %v3043 = vld [vmem:[%s13 + $0xd84] sm:$0xff]
    %v3044 = vld [vmem:[%s13 + $0xd8c] sm:$0xf]
    %v3045 = vld [vmem:[%s13 + $0xd90] sm:$0xff]
    %v3046 = vld [vmem:[%s13 + $0xd98] sm:$0xff]
    %v3047 = vld [vmem:[%s13 + $0xda0] sm:$0xff]
    %v3048 = vld [vmem:[%s13 + $0xda8] sm:$0xf]
    %v3049 = vld [vmem:[%s13 + $0xdac] sm:$0xff]
    %v3050 = vld [vmem:[%s13 + $0xdb4] sm:$0xff]
    %v3051 = vld [vmem:[%s13 + $0xdbc] sm:$0xff]
    %v3052 = vld [vmem:[%s13 + $0xdc4] sm:$0xf]
    %v3053 = vld [vmem:[%s13 + $0xdc8] sm:$0xff]
    %v3054 = vld [vmem:[%s13 + $0xdd0] sm:$0xff]
    %v3055 = vld [vmem:[%s13 + $0xdd8] sm:$0xff]
    %v3056 = vld [vmem:[%s13 + $0xde0] sm:$0xf]
    %v3057 = vld [vmem:[%s13 + $0xde4] sm:$0xff]
    %v3058 = vld [vmem:[%s13 + $0xdec] sm:$0xff]
    %v3059 = vld [vmem:[%s13 + $0xdf4] sm:$0xff]
    %v3060 = vld [vmem:[%s13 + $0xdfc] sm:$0xf]
    %v3061 = vunpack.c.l.bf16 %v2549
    %v3062 = vunpack.c.h.bf16 %v2549
    %v3063 = vunpack.c.l.bf16 %v2550
    %v3064 = vunpack.c.h.bf16 %v2550
    %v3065 = vunpack.c.l.bf16 %v2551
    %v3066 = vunpack.c.h.bf16 %v2551
    %v3067 = vunpack.c.l.bf16 %v2552
    %v3068 = vunpack.c.l.bf16 %v2553
    %v3069 = vunpack.c.h.bf16 %v2553
    %v3070 = vunpack.c.l.bf16 %v2554
    %v3071 = vunpack.c.h.bf16 %v2554
    %v3072 = vunpack.c.l.bf16 %v2555
    %v3073 = vunpack.c.h.bf16 %v2555
    %v3074 = vunpack.c.l.bf16 %v2556
    %v3075 = vunpack.c.l.bf16 %v2557
    %v3076 = vunpack.c.h.bf16 %v2557
    %v3077 = vunpack.c.l.bf16 %v2558
    %v3078 = vunpack.c.h.bf16 %v2558
    %v3079 = vunpack.c.l.bf16 %v2559
    %v3080 = vunpack.c.h.bf16 %v2559
    %v3081 = vunpack.c.l.bf16 %v2560
    %v3082 = vunpack.c.l.bf16 %v2561
    %v3083 = vunpack.c.h.bf16 %v2561
    %v3084 = vunpack.c.l.bf16 %v2562
    %v3085 = vunpack.c.h.bf16 %v2562
    %v3086 = vunpack.c.l.bf16 %v2563
    %v3087 = vunpack.c.h.bf16 %v2563
    %v3088 = vunpack.c.l.bf16 %v2564
    %v3089 = vunpack.c.l.bf16 %v2565
    %v3090 = vunpack.c.h.bf16 %v2565
    %v3091 = vunpack.c.l.bf16 %v2566
    %v3092 = vunpack.c.h.bf16 %v2566
    %v3093 = vunpack.c.l.bf16 %v2567
    %v3094 = vunpack.c.h.bf16 %v2567
    %v3095 = vunpack.c.l.bf16 %v2568
    %v3096 = vunpack.c.l.bf16 %v2569
    %v3097 = vunpack.c.h.bf16 %v2569
    %v3098 = vunpack.c.l.bf16 %v2570
    %v3099 = vunpack.c.h.bf16 %v2570
    %v3100 = vunpack.c.l.bf16 %v2571
    %v3101 = vunpack.c.h.bf16 %v2571
    %v3102 = vunpack.c.l.bf16 %v2572
    %v3103 = vunpack.c.l.bf16 %v2573
    %v3104 = vunpack.c.h.bf16 %v2573
    %v3105 = vunpack.c.l.bf16 %v2574
    %v3106 = vunpack.c.h.bf16 %v2574
    %v3107 = vunpack.c.l.bf16 %v2575
    %v3108 = vunpack.c.h.bf16 %v2575
    %v3109 = vunpack.c.l.bf16 %v2576
    %v3110 = vunpack.c.l.bf16 %v2577
    %v3111 = vunpack.c.h.bf16 %v2577
    %v3112 = vunpack.c.l.bf16 %v2578
    %v3113 = vunpack.c.h.bf16 %v2578
    %v3114 = vunpack.c.l.bf16 %v2579
    %v3115 = vunpack.c.h.bf16 %v2579
    %v3116 = vunpack.c.l.bf16 %v2580
    %v3117 = vunpack.c.l.bf16 %v2581
    %v3118 = vunpack.c.h.bf16 %v2581
    %v3119 = vunpack.c.l.bf16 %v2582
    %v3120 = vunpack.c.h.bf16 %v2582
    %v3121 = vunpack.c.l.bf16 %v2583
    %v3122 = vunpack.c.h.bf16 %v2583
    %v3123 = vunpack.c.l.bf16 %v2584
    %v3124 = vunpack.c.l.bf16 %v2585
    %v3125 = vunpack.c.h.bf16 %v2585
    %v3126 = vunpack.c.l.bf16 %v2586
    %v3127 = vunpack.c.h.bf16 %v2586
    %v3128 = vunpack.c.l.bf16 %v2587
    %v3129 = vunpack.c.h.bf16 %v2587
    %v3130 = vunpack.c.l.bf16 %v2588
    %v3131 = vunpack.c.l.bf16 %v2589
    %v3132 = vunpack.c.h.bf16 %v2589
    %v3133 = vunpack.c.l.bf16 %v2590
    %v3134 = vunpack.c.h.bf16 %v2590
    %v3135 = vunpack.c.l.bf16 %v2591
    %v3136 = vunpack.c.h.bf16 %v2591
    %v3137 = vunpack.c.l.bf16 %v2592
    %v3138 = vunpack.c.l.bf16 %v2593
    %v3139 = vunpack.c.h.bf16 %v2593
    %v3140 = vunpack.c.l.bf16 %v2594
    %v3141 = vunpack.c.h.bf16 %v2594
    %v3142 = vunpack.c.l.bf16 %v2595
    %v3143 = vunpack.c.h.bf16 %v2595
    %v3144 = vunpack.c.l.bf16 %v2596
    %v3145 = vunpack.c.l.bf16 %v2597
    %v3146 = vunpack.c.h.bf16 %v2597
    %v3147 = vunpack.c.l.bf16 %v2598
    %v3148 = vunpack.c.h.bf16 %v2598
    %v3149 = vunpack.c.l.bf16 %v2599
    %v3150 = vunpack.c.h.bf16 %v2599
    %v3151 = vunpack.c.l.bf16 %v2600
    %v3152 = vunpack.c.l.bf16 %v2601
    %v3153 = vunpack.c.h.bf16 %v2601
    %v3154 = vunpack.c.l.bf16 %v2602
    %v3155 = vunpack.c.h.bf16 %v2602
    %v3156 = vunpack.c.l.bf16 %v2603
    %v3157 = vunpack.c.h.bf16 %v2603
    %v3158 = vunpack.c.l.bf16 %v2604
    %v3159 = vunpack.c.l.bf16 %v2605
    %v3160 = vunpack.c.h.bf16 %v2605
    %v3161 = vunpack.c.l.bf16 %v2606
    %v3162 = vunpack.c.h.bf16 %v2606
    %v3163 = vunpack.c.l.bf16 %v2607
    %v3164 = vunpack.c.h.bf16 %v2607
    %v3165 = vunpack.c.l.bf16 %v2608
    %v3166 = vunpack.c.l.bf16 %v2609
    %v3167 = vunpack.c.h.bf16 %v2609
    %v3168 = vunpack.c.l.bf16 %v2610
    %v3169 = vunpack.c.h.bf16 %v2610
    %v3170 = vunpack.c.l.bf16 %v2611
    %v3171 = vunpack.c.h.bf16 %v2611
    %v3172 = vunpack.c.l.bf16 %v2612
    %v3173 = vunpack.c.l.bf16 %v2613
    %v3174 = vunpack.c.h.bf16 %v2613
    %v3175 = vunpack.c.l.bf16 %v2614
    %v3176 = vunpack.c.h.bf16 %v2614
    %v3177 = vunpack.c.l.bf16 %v2615
    %v3178 = vunpack.c.h.bf16 %v2615
    %v3179 = vunpack.c.l.bf16 %v2616
    %v3180 = vunpack.c.l.bf16 %v2617
    %v3181 = vunpack.c.h.bf16 %v2617
    %v3182 = vunpack.c.l.bf16 %v2618
    %v3183 = vunpack.c.h.bf16 %v2618
    %v3184 = vunpack.c.l.bf16 %v2619
    %v3185 = vunpack.c.h.bf16 %v2619
    %v3186 = vunpack.c.l.bf16 %v2620
    %v3187 = vunpack.c.l.bf16 %v2621
    %v3188 = vunpack.c.h.bf16 %v2621
    %v3189 = vunpack.c.l.bf16 %v2622
    %v3190 = vunpack.c.h.bf16 %v2622
    %v3191 = vunpack.c.l.bf16 %v2623
    %v3192 = vunpack.c.h.bf16 %v2623
    %v3193 = vunpack.c.l.bf16 %v2624
    %v3194 = vunpack.c.l.bf16 %v2625
    %v3195 = vunpack.c.h.bf16 %v2625
    %v3196 = vunpack.c.l.bf16 %v2626
    %v3197 = vunpack.c.h.bf16 %v2626
    %v3198 = vunpack.c.l.bf16 %v2627
    %v3199 = vunpack.c.h.bf16 %v2627
    %v3200 = vunpack.c.l.bf16 %v2628
    %v3201 = vunpack.c.l.bf16 %v2629
    %v3202 = vunpack.c.h.bf16 %v2629
    %v3203 = vunpack.c.l.bf16 %v2630
    %v3204 = vunpack.c.h.bf16 %v2630
    %v3205 = vunpack.c.l.bf16 %v2631
    %v3206 = vunpack.c.h.bf16 %v2631
    %v3207 = vunpack.c.l.bf16 %v2632
    %v3208 = vunpack.c.l.bf16 %v2633
    %v3209 = vunpack.c.h.bf16 %v2633
    %v3210 = vunpack.c.l.bf16 %v2634
    %v3211 = vunpack.c.h.bf16 %v2634
    %v3212 = vunpack.c.l.bf16 %v2635
    %v3213 = vunpack.c.h.bf16 %v2635
    %v3214 = vunpack.c.l.bf16 %v2636
    %v3215 = vunpack.c.l.bf16 %v2637
    %v3216 = vunpack.c.h.bf16 %v2637
    %v3217 = vunpack.c.l.bf16 %v2638
    %v3218 = vunpack.c.h.bf16 %v2638
    %v3219 = vunpack.c.l.bf16 %v2639
    %v3220 = vunpack.c.h.bf16 %v2639
    %v3221 = vunpack.c.l.bf16 %v2640
    %v3222 = vunpack.c.l.bf16 %v2641
    %v3223 = vunpack.c.h.bf16 %v2641
    %v3224 = vunpack.c.l.bf16 %v2642
    %v3225 = vunpack.c.h.bf16 %v2642
    %v3226 = vunpack.c.l.bf16 %v2643
    %v3227 = vunpack.c.h.bf16 %v2643
    %v3228 = vunpack.c.l.bf16 %v2644
    %v3229 = vunpack.c.l.bf16 %v2645
    %v3230 = vunpack.c.h.bf16 %v2645
    %v3231 = vunpack.c.l.bf16 %v2646
    %v3232 = vunpack.c.h.bf16 %v2646
    %v3233 = vunpack.c.l.bf16 %v2647
    %v3234 = vunpack.c.h.bf16 %v2647
    %v3235 = vunpack.c.l.bf16 %v2648
    %v3236 = vunpack.c.l.bf16 %v2649
    %v3237 = vunpack.c.h.bf16 %v2649
    %v3238 = vunpack.c.l.bf16 %v2650
    %v3239 = vunpack.c.h.bf16 %v2650
    %v3240 = vunpack.c.l.bf16 %v2651
    %v3241 = vunpack.c.h.bf16 %v2651
    %v3242 = vunpack.c.l.bf16 %v2652
    %v3243 = vunpack.c.l.bf16 %v2653
    %v3244 = vunpack.c.h.bf16 %v2653
    %v3245 = vunpack.c.l.bf16 %v2654
    %v3246 = vunpack.c.h.bf16 %v2654
    %v3247 = vunpack.c.l.bf16 %v2655
    %v3248 = vunpack.c.h.bf16 %v2655
    %v3249 = vunpack.c.l.bf16 %v2656
    %v3250 = vunpack.c.l.bf16 %v2657
    %v3251 = vunpack.c.h.bf16 %v2657
    %v3252 = vunpack.c.l.bf16 %v2658
    %v3253 = vunpack.c.h.bf16 %v2658
    %v3254 = vunpack.c.l.bf16 %v2659
    %v3255 = vunpack.c.h.bf16 %v2659
    %v3256 = vunpack.c.l.bf16 %v2660
    %v3257 = vunpack.c.l.bf16 %v2661
    %v3258 = vunpack.c.h.bf16 %v2661
    %v3259 = vunpack.c.l.bf16 %v2662
    %v3260 = vunpack.c.h.bf16 %v2662
    %v3261 = vunpack.c.l.bf16 %v2663
    %v3262 = vunpack.c.h.bf16 %v2663
    %v3263 = vunpack.c.l.bf16 %v2664
    %v3264 = vunpack.c.l.bf16 %v2665
    %v3265 = vunpack.c.h.bf16 %v2665
    %v3266 = vunpack.c.l.bf16 %v2666
    %v3267 = vunpack.c.h.bf16 %v2666
    %v3268 = vunpack.c.l.bf16 %v2667
    %v3269 = vunpack.c.h.bf16 %v2667
    %v3270 = vunpack.c.l.bf16 %v2668
    %v3271 = vunpack.c.l.bf16 %v2669
    %v3272 = vunpack.c.h.bf16 %v2669
    %v3273 = vunpack.c.l.bf16 %v2670
    %v3274 = vunpack.c.h.bf16 %v2670
    %v3275 = vunpack.c.l.bf16 %v2671
    %v3276 = vunpack.c.h.bf16 %v2671
    %v3277 = vunpack.c.l.bf16 %v2672
    %v3278 = vunpack.c.l.bf16 %v2673
    %v3279 = vunpack.c.h.bf16 %v2673
    %v3280 = vunpack.c.l.bf16 %v2674
    %v3281 = vunpack.c.h.bf16 %v2674
    %v3282 = vunpack.c.l.bf16 %v2675
    %v3283 = vunpack.c.h.bf16 %v2675
    %v3284 = vunpack.c.l.bf16 %v2676
    %v3285 = vunpack.c.l.bf16 %v2677
    %v3286 = vunpack.c.h.bf16 %v2677
    %v3287 = vunpack.c.l.bf16 %v2678
    %v3288 = vunpack.c.h.bf16 %v2678
    %v3289 = vunpack.c.l.bf16 %v2679
    %v3290 = vunpack.c.h.bf16 %v2679
    %v3291 = vunpack.c.l.bf16 %v2680
    %v3292 = vunpack.c.l.bf16 %v2681
    %v3293 = vunpack.c.h.bf16 %v2681
    %v3294 = vunpack.c.l.bf16 %v2682
    %v3295 = vunpack.c.h.bf16 %v2682
    %v3296 = vunpack.c.l.bf16 %v2683
    %v3297 = vunpack.c.h.bf16 %v2683
    %v3298 = vunpack.c.l.bf16 %v2684
    %v3299 = vunpack.c.l.bf16 %v2685
    %v3300 = vunpack.c.h.bf16 %v2685
    %v3301 = vunpack.c.l.bf16 %v2686
    %v3302 = vunpack.c.h.bf16 %v2686
    %v3303 = vunpack.c.l.bf16 %v2687
    %v3304 = vunpack.c.h.bf16 %v2687
    %v3305 = vunpack.c.l.bf16 %v2688
    %v3306 = vunpack.c.l.bf16 %v2689
    %v3307 = vunpack.c.h.bf16 %v2689
    %v3308 = vunpack.c.l.bf16 %v2690
    %v3309 = vunpack.c.h.bf16 %v2690
    %v3310 = vunpack.c.l.bf16 %v2691
    %v3311 = vunpack.c.h.bf16 %v2691
    %v3312 = vunpack.c.l.bf16 %v2692
    %v3313 = vunpack.c.l.bf16 %v2693
    %v3314 = vunpack.c.h.bf16 %v2693
    %v3315 = vunpack.c.l.bf16 %v2694
    %v3316 = vunpack.c.h.bf16 %v2694
    %v3317 = vunpack.c.l.bf16 %v2695
    %v3318 = vunpack.c.h.bf16 %v2695
    %v3319 = vunpack.c.l.bf16 %v2696
    %v3320 = vunpack.c.l.bf16 %v2697
    %v3321 = vunpack.c.h.bf16 %v2697
    %v3322 = vunpack.c.l.bf16 %v2698
    %v3323 = vunpack.c.h.bf16 %v2698
    %v3324 = vunpack.c.l.bf16 %v2699
    %v3325 = vunpack.c.h.bf16 %v2699
    %v3326 = vunpack.c.l.bf16 %v2700
    %v3327 = vunpack.c.l.bf16 %v2701
    %v3328 = vunpack.c.h.bf16 %v2701
    %v3329 = vunpack.c.l.bf16 %v2702
    %v3330 = vunpack.c.h.bf16 %v2702
    %v3331 = vunpack.c.l.bf16 %v2703
    %v3332 = vunpack.c.h.bf16 %v2703
    %v3333 = vunpack.c.l.bf16 %v2704
    %v3334 = vunpack.c.l.bf16 %v2705
    %v3335 = vunpack.c.h.bf16 %v2705
    %v3336 = vunpack.c.l.bf16 %v2706
    %v3337 = vunpack.c.h.bf16 %v2706
    %v3338 = vunpack.c.l.bf16 %v2707
    %v3339 = vunpack.c.h.bf16 %v2707
    %v3340 = vunpack.c.l.bf16 %v2708
    %v3341 = vunpack.c.l.bf16 %v2709
    %v3342 = vunpack.c.h.bf16 %v2709
    %v3343 = vunpack.c.l.bf16 %v2710
    %v3344 = vunpack.c.h.bf16 %v2710
    %v3345 = vunpack.c.l.bf16 %v2711
    %v3346 = vunpack.c.h.bf16 %v2711
    %v3347 = vunpack.c.l.bf16 %v2712
    %v3348 = vunpack.c.l.bf16 %v2713
    %v3349 = vunpack.c.h.bf16 %v2713
    %v3350 = vunpack.c.l.bf16 %v2714
    %v3351 = vunpack.c.h.bf16 %v2714
    %v3352 = vunpack.c.l.bf16 %v2715
    %v3353 = vunpack.c.h.bf16 %v2715
    %v3354 = vunpack.c.l.bf16 %v2716
    %v3355 = vunpack.c.l.bf16 %v2717
    %v3356 = vunpack.c.h.bf16 %v2717
    %v3357 = vunpack.c.l.bf16 %v2718
    %v3358 = vunpack.c.h.bf16 %v2718
    %v3359 = vunpack.c.l.bf16 %v2719
    %v3360 = vunpack.c.h.bf16 %v2719
    %v3361 = vunpack.c.l.bf16 %v2720
    %v3362 = vunpack.c.l.bf16 %v2721
    %v3363 = vunpack.c.h.bf16 %v2721
    %v3364 = vunpack.c.l.bf16 %v2722
    %v3365 = vunpack.c.h.bf16 %v2722
    %v3366 = vunpack.c.l.bf16 %v2723
    %v3367 = vunpack.c.h.bf16 %v2723
    %v3368 = vunpack.c.l.bf16 %v2724
    %v3369 = vunpack.c.l.bf16 %v2725
    %v3370 = vunpack.c.h.bf16 %v2725
    %v3371 = vunpack.c.l.bf16 %v2726
    %v3372 = vunpack.c.h.bf16 %v2726
    %v3373 = vunpack.c.l.bf16 %v2727
    %v3374 = vunpack.c.h.bf16 %v2727
    %v3375 = vunpack.c.l.bf16 %v2728
    %v3376 = vunpack.c.l.bf16 %v2729
    %v3377 = vunpack.c.h.bf16 %v2729
    %v3378 = vunpack.c.l.bf16 %v2730
    %v3379 = vunpack.c.h.bf16 %v2730
    %v3380 = vunpack.c.l.bf16 %v2731
    %v3381 = vunpack.c.h.bf16 %v2731
    %v3382 = vunpack.c.l.bf16 %v2732
    %v3383 = vunpack.c.l.bf16 %v2733
    %v3384 = vunpack.c.h.bf16 %v2733
    %v3385 = vunpack.c.l.bf16 %v2734
    %v3386 = vunpack.c.h.bf16 %v2734
    %v3387 = vunpack.c.l.bf16 %v2735
    %v3388 = vunpack.c.h.bf16 %v2735
    %v3389 = vunpack.c.l.bf16 %v2736
    %v3390 = vunpack.c.l.bf16 %v2737
    %v3391 = vunpack.c.h.bf16 %v2737
    %v3392 = vunpack.c.l.bf16 %v2738
    %v3393 = vunpack.c.h.bf16 %v2738
    %v3394 = vunpack.c.l.bf16 %v2739
    %v3395 = vunpack.c.h.bf16 %v2739
    %v3396 = vunpack.c.l.bf16 %v2740
    %v3397 = vunpack.c.l.bf16 %v2741
    %v3398 = vunpack.c.h.bf16 %v2741
    %v3399 = vunpack.c.l.bf16 %v2742
    %v3400 = vunpack.c.h.bf16 %v2742
    %v3401 = vunpack.c.l.bf16 %v2743
    %v3402 = vunpack.c.h.bf16 %v2743
    %v3403 = vunpack.c.l.bf16 %v2744
    %v3404 = vunpack.c.l.bf16 %v2745
    %v3405 = vunpack.c.h.bf16 %v2745
    %v3406 = vunpack.c.l.bf16 %v2746
    %v3407 = vunpack.c.h.bf16 %v2746
    %v3408 = vunpack.c.l.bf16 %v2747
    %v3409 = vunpack.c.h.bf16 %v2747
    %v3410 = vunpack.c.l.bf16 %v2748
    %v3411 = vunpack.c.l.bf16 %v2749
    %v3412 = vunpack.c.h.bf16 %v2749
    %v3413 = vunpack.c.l.bf16 %v2750
    %v3414 = vunpack.c.h.bf16 %v2750
    %v3415 = vunpack.c.l.bf16 %v2751
    %v3416 = vunpack.c.h.bf16 %v2751
    %v3417 = vunpack.c.l.bf16 %v2752
    %v3418 = vunpack.c.l.bf16 %v2753
    %v3419 = vunpack.c.h.bf16 %v2753
    %v3420 = vunpack.c.l.bf16 %v2754
    %v3421 = vunpack.c.h.bf16 %v2754
    %v3422 = vunpack.c.l.bf16 %v2755
    %v3423 = vunpack.c.h.bf16 %v2755
    %v3424 = vunpack.c.l.bf16 %v2756
    %v3425 = vunpack.c.l.bf16 %v2757
    %v3426 = vunpack.c.h.bf16 %v2757
    %v3427 = vunpack.c.l.bf16 %v2758
    %v3428 = vunpack.c.h.bf16 %v2758
    %v3429 = vunpack.c.l.bf16 %v2759
    %v3430 = vunpack.c.h.bf16 %v2759
    %v3431 = vunpack.c.l.bf16 %v2760
    %v3432 = vunpack.c.l.bf16 %v2761
    %v3433 = vunpack.c.h.bf16 %v2761
    %v3434 = vunpack.c.l.bf16 %v2762
    %v3435 = vunpack.c.h.bf16 %v2762
    %v3436 = vunpack.c.l.bf16 %v2763
    %v3437 = vunpack.c.h.bf16 %v2763
    %v3438 = vunpack.c.l.bf16 %v2764
    %v3439 = vunpack.c.l.bf16 %v2765
    %v3440 = vunpack.c.h.bf16 %v2765
    %v3441 = vunpack.c.l.bf16 %v2766
    %v3442 = vunpack.c.h.bf16 %v2766
    %v3443 = vunpack.c.l.bf16 %v2767
    %v3444 = vunpack.c.h.bf16 %v2767
    %v3445 = vunpack.c.l.bf16 %v2768
    %v3446 = vunpack.c.l.bf16 %v2769
    %v3447 = vunpack.c.h.bf16 %v2769
    %v3448 = vunpack.c.l.bf16 %v2770
    %v3449 = vunpack.c.h.bf16 %v2770
    %v3450 = vunpack.c.l.bf16 %v2771
    %v3451 = vunpack.c.h.bf16 %v2771
    %v3452 = vunpack.c.l.bf16 %v2772
    %v3453 = vunpack.c.l.bf16 %v2773
    %v3454 = vunpack.c.h.bf16 %v2773
    %v3455 = vunpack.c.l.bf16 %v2774
    %v3456 = vunpack.c.h.bf16 %v2774
    %v3457 = vunpack.c.l.bf16 %v2775
    %v3458 = vunpack.c.h.bf16 %v2775
    %v3459 = vunpack.c.l.bf16 %v2776
    %v3460 = vunpack.c.l.bf16 %v2777
    %v3461 = vunpack.c.h.bf16 %v2777
    %v3462 = vunpack.c.l.bf16 %v2778
    %v3463 = vunpack.c.h.bf16 %v2778
    %v3464 = vunpack.c.l.bf16 %v2779
    %v3465 = vunpack.c.h.bf16 %v2779
    %v3466 = vunpack.c.l.bf16 %v2780
    %v3467 = vunpack.c.l.bf16 %v2781
    %v3468 = vunpack.c.h.bf16 %v2781
    %v3469 = vunpack.c.l.bf16 %v2782
    %v3470 = vunpack.c.h.bf16 %v2782
    %v3471 = vunpack.c.l.bf16 %v2783
    %v3472 = vunpack.c.h.bf16 %v2783
    %v3473 = vunpack.c.l.bf16 %v2784
    %v3474 = vunpack.c.l.bf16 %v2785
    %v3475 = vunpack.c.h.bf16 %v2785
    %v3476 = vunpack.c.l.bf16 %v2786
    %v3477 = vunpack.c.h.bf16 %v2786
    %v3478 = vunpack.c.l.bf16 %v2787
    %v3479 = vunpack.c.h.bf16 %v2787
    %v3480 = vunpack.c.l.bf16 %v2788
    %v3481 = vunpack.c.l.bf16 %v2789
    %v3482 = vunpack.c.h.bf16 %v2789
    %v3483 = vunpack.c.l.bf16 %v2790
    %v3484 = vunpack.c.h.bf16 %v2790
    %v3485 = vunpack.c.l.bf16 %v2791
    %v3486 = vunpack.c.h.bf16 %v2791
    %v3487 = vunpack.c.l.bf16 %v2792
    %v3488 = vunpack.c.l.bf16 %v2793
    %v3489 = vunpack.c.h.bf16 %v2793
    %v3490 = vunpack.c.l.bf16 %v2794
    %v3491 = vunpack.c.h.bf16 %v2794
    %v3492 = vunpack.c.l.bf16 %v2795
    %v3493 = vunpack.c.h.bf16 %v2795
    %v3494 = vunpack.c.l.bf16 %v2796
    %v3495 = vunpack.c.l.bf16 %v2797
    %v3496 = vunpack.c.h.bf16 %v2797
    %v3497 = vunpack.c.l.bf16 %v2798
    %v3498 = vunpack.c.h.bf16 %v2798
    %v3499 = vunpack.c.l.bf16 %v2799
    %v3500 = vunpack.c.h.bf16 %v2799
    %v3501 = vunpack.c.l.bf16 %v2800
    %v3502 = vunpack.c.l.bf16 %v2801
    %v3503 = vunpack.c.h.bf16 %v2801
    %v3504 = vunpack.c.l.bf16 %v2802
    %v3505 = vunpack.c.h.bf16 %v2802
    %v3506 = vunpack.c.l.bf16 %v2803
    %v3507 = vunpack.c.h.bf16 %v2803
    %v3508 = vunpack.c.l.bf16 %v2804
    %v3509 = vunpack.c.l.bf16 %v2805
    %v3510 = vunpack.c.h.bf16 %v2805
    %v3511 = vunpack.c.l.bf16 %v2806
    %v3512 = vunpack.c.h.bf16 %v2806
    %v3513 = vunpack.c.l.bf16 %v2807
    %v3514 = vunpack.c.h.bf16 %v2807
    %v3515 = vunpack.c.l.bf16 %v2808
    %v3516 = vunpack.c.l.bf16 %v2809
    %v3517 = vunpack.c.h.bf16 %v2809
    %v3518 = vunpack.c.l.bf16 %v2810
    %v3519 = vunpack.c.h.bf16 %v2810
    %v3520 = vunpack.c.l.bf16 %v2811
    %v3521 = vunpack.c.h.bf16 %v2811
    %v3522 = vunpack.c.l.bf16 %v2812
    %v3523 = vunpack.c.l.bf16 %v2813
    %v3524 = vunpack.c.h.bf16 %v2813
    %v3525 = vunpack.c.l.bf16 %v2814
    %v3526 = vunpack.c.h.bf16 %v2814
    %v3527 = vunpack.c.l.bf16 %v2815
    %v3528 = vunpack.c.h.bf16 %v2815
    %v3529 = vunpack.c.l.bf16 %v2816
    %v3530 = vunpack.c.l.bf16 %v2817
    %v3531 = vunpack.c.h.bf16 %v2817
    %v3532 = vunpack.c.l.bf16 %v2818
    %v3533 = vunpack.c.h.bf16 %v2818
    %v3534 = vunpack.c.l.bf16 %v2819
    %v3535 = vunpack.c.h.bf16 %v2819
    %v3536 = vunpack.c.l.bf16 %v2820
    %v3537 = vunpack.c.l.bf16 %v2821
    %v3538 = vunpack.c.h.bf16 %v2821
    %v3539 = vunpack.c.l.bf16 %v2822
    %v3540 = vunpack.c.h.bf16 %v2822
    %v3541 = vunpack.c.l.bf16 %v2823
    %v3542 = vunpack.c.h.bf16 %v2823
    %v3543 = vunpack.c.l.bf16 %v2824
    %v3544 = vunpack.c.l.bf16 %v2825
    %v3545 = vunpack.c.h.bf16 %v2825
    %v3546 = vunpack.c.l.bf16 %v2826
    %v3547 = vunpack.c.h.bf16 %v2826
    %v3548 = vunpack.c.l.bf16 %v2827
    %v3549 = vunpack.c.h.bf16 %v2827
    %v3550 = vunpack.c.l.bf16 %v2828
    %v3551 = vunpack.c.l.bf16 %v2829
    %v3552 = vunpack.c.h.bf16 %v2829
    %v3553 = vunpack.c.l.bf16 %v2830
    %v3554 = vunpack.c.h.bf16 %v2830
    %v3555 = vunpack.c.l.bf16 %v2831
    %v3556 = vunpack.c.h.bf16 %v2831
    %v3557 = vunpack.c.l.bf16 %v2832
    %v3558 = vunpack.c.l.bf16 %v2833
    %v3559 = vunpack.c.h.bf16 %v2833
    %v3560 = vunpack.c.l.bf16 %v2834
    %v3561 = vunpack.c.h.bf16 %v2834
    %v3562 = vunpack.c.l.bf16 %v2835
    %v3563 = vunpack.c.h.bf16 %v2835
    %v3564 = vunpack.c.l.bf16 %v2836
    %v3565 = vunpack.c.l.bf16 %v2837
    %v3566 = vunpack.c.h.bf16 %v2837
    %v3567 = vunpack.c.l.bf16 %v2838
    %v3568 = vunpack.c.h.bf16 %v2838
    %v3569 = vunpack.c.l.bf16 %v2839
    %v3570 = vunpack.c.h.bf16 %v2839
    %v3571 = vunpack.c.l.bf16 %v2840
    %v3572 = vunpack.c.l.bf16 %v2841
    %v3573 = vunpack.c.h.bf16 %v2841
    %v3574 = vunpack.c.l.bf16 %v2842
    %v3575 = vunpack.c.h.bf16 %v2842
    %v3576 = vunpack.c.l.bf16 %v2843
    %v3577 = vunpack.c.h.bf16 %v2843
    %v3578 = vunpack.c.l.bf16 %v2844
    %v3579 = vunpack.c.l.bf16 %v2845
    %v3580 = vunpack.c.h.bf16 %v2845
    %v3581 = vunpack.c.l.bf16 %v2846
    %v3582 = vunpack.c.h.bf16 %v2846
    %v3583 = vunpack.c.l.bf16 %v2847
    %v3584 = vunpack.c.h.bf16 %v2847
    %v3585 = vunpack.c.l.bf16 %v2848
    %v3586 = vunpack.c.l.bf16 %v2849
    %v3587 = vunpack.c.h.bf16 %v2849
    %v3588 = vunpack.c.l.bf16 %v2850
    %v3589 = vunpack.c.h.bf16 %v2850
    %v3590 = vunpack.c.l.bf16 %v2851
    %v3591 = vunpack.c.h.bf16 %v2851
    %v3592 = vunpack.c.l.bf16 %v2852
    %v3593 = vunpack.c.l.bf16 %v2853
    %v3594 = vunpack.c.h.bf16 %v2853
    %v3595 = vunpack.c.l.bf16 %v2854
    %v3596 = vunpack.c.h.bf16 %v2854
    %v3597 = vunpack.c.l.bf16 %v2855
    %v3598 = vunpack.c.h.bf16 %v2855
    %v3599 = vunpack.c.l.bf16 %v2856
    %v3600 = vunpack.c.l.bf16 %v2857
    %v3601 = vunpack.c.h.bf16 %v2857
    %v3602 = vunpack.c.l.bf16 %v2858
    %v3603 = vunpack.c.h.bf16 %v2858
    %v3604 = vunpack.c.l.bf16 %v2859
    %v3605 = vunpack.c.h.bf16 %v2859
    %v3606 = vunpack.c.l.bf16 %v2860
    %v3607 = vunpack.c.l.bf16 %v2861
    %v3608 = vunpack.c.h.bf16 %v2861
    %v3609 = vunpack.c.l.bf16 %v2862
    %v3610 = vunpack.c.h.bf16 %v2862
    %v3611 = vunpack.c.l.bf16 %v2863
    %v3612 = vunpack.c.h.bf16 %v2863
    %v3613 = vunpack.c.l.bf16 %v2864
    %v3614 = vunpack.c.l.bf16 %v2865
    %v3615 = vunpack.c.h.bf16 %v2865
    %v3616 = vunpack.c.l.bf16 %v2866
    %v3617 = vunpack.c.h.bf16 %v2866
    %v3618 = vunpack.c.l.bf16 %v2867
    %v3619 = vunpack.c.h.bf16 %v2867
    %v3620 = vunpack.c.l.bf16 %v2868
    %v3621 = vunpack.c.l.bf16 %v2869
    %v3622 = vunpack.c.h.bf16 %v2869
    %v3623 = vunpack.c.l.bf16 %v2870
    %v3624 = vunpack.c.h.bf16 %v2870
    %v3625 = vunpack.c.l.bf16 %v2871
    %v3626 = vunpack.c.h.bf16 %v2871
    %v3627 = vunpack.c.l.bf16 %v2872
    %v3628 = vunpack.c.l.bf16 %v2873
    %v3629 = vunpack.c.h.bf16 %v2873
    %v3630 = vunpack.c.l.bf16 %v2874
    %v3631 = vunpack.c.h.bf16 %v2874
    %v3632 = vunpack.c.l.bf16 %v2875
    %v3633 = vunpack.c.h.bf16 %v2875
    %v3634 = vunpack.c.l.bf16 %v2876
    %v3635 = vunpack.c.l.bf16 %v2877
    %v3636 = vunpack.c.h.bf16 %v2877
    %v3637 = vunpack.c.l.bf16 %v2878
    %v3638 = vunpack.c.h.bf16 %v2878
    %v3639 = vunpack.c.l.bf16 %v2879
    %v3640 = vunpack.c.h.bf16 %v2879
    %v3641 = vunpack.c.l.bf16 %v2880
    %v3642 = vunpack.c.l.bf16 %v2881
    %v3643 = vunpack.c.h.bf16 %v2881
    %v3644 = vunpack.c.l.bf16 %v2882
    %v3645 = vunpack.c.h.bf16 %v2882
    %v3646 = vunpack.c.l.bf16 %v2883
    %v3647 = vunpack.c.h.bf16 %v2883
    %v3648 = vunpack.c.l.bf16 %v2884
    %v3649 = vunpack.c.l.bf16 %v2885
    %v3650 = vunpack.c.h.bf16 %v2885
    %v3651 = vunpack.c.l.bf16 %v2886
    %v3652 = vunpack.c.h.bf16 %v2886
    %v3653 = vunpack.c.l.bf16 %v2887
    %v3654 = vunpack.c.h.bf16 %v2887
    %v3655 = vunpack.c.l.bf16 %v2888
    %v3656 = vunpack.c.l.bf16 %v2889
    %v3657 = vunpack.c.h.bf16 %v2889
    %v3658 = vunpack.c.l.bf16 %v2890
    %v3659 = vunpack.c.h.bf16 %v2890
    %v3660 = vunpack.c.l.bf16 %v2891
    %v3661 = vunpack.c.h.bf16 %v2891
    %v3662 = vunpack.c.l.bf16 %v2892
    %v3663 = vunpack.c.l.bf16 %v2893
    %v3664 = vunpack.c.h.bf16 %v2893
    %v3665 = vunpack.c.l.bf16 %v2894
    %v3666 = vunpack.c.h.bf16 %v2894
    %v3667 = vunpack.c.l.bf16 %v2895
    %v3668 = vunpack.c.h.bf16 %v2895
    %v3669 = vunpack.c.l.bf16 %v2896
    %v3670 = vunpack.c.l.bf16 %v2897
    %v3671 = vunpack.c.h.bf16 %v2897
    %v3672 = vunpack.c.l.bf16 %v2898
    %v3673 = vunpack.c.h.bf16 %v2898
    %v3674 = vunpack.c.l.bf16 %v2899
    %v3675 = vunpack.c.h.bf16 %v2899
    %v3676 = vunpack.c.l.bf16 %v2900
    %v3677 = vunpack.c.l.bf16 %v2901
    %v3678 = vunpack.c.h.bf16 %v2901
    %v3679 = vunpack.c.l.bf16 %v2902
    %v3680 = vunpack.c.h.bf16 %v2902
    %v3681 = vunpack.c.l.bf16 %v2903
    %v3682 = vunpack.c.h.bf16 %v2903
    %v3683 = vunpack.c.l.bf16 %v2904
    %v3684 = vunpack.c.l.bf16 %v2905
    %v3685 = vunpack.c.h.bf16 %v2905
    %v3686 = vunpack.c.l.bf16 %v2906
    %v3687 = vunpack.c.h.bf16 %v2906
    %v3688 = vunpack.c.l.bf16 %v2907
    %v3689 = vunpack.c.h.bf16 %v2907
    %v3690 = vunpack.c.l.bf16 %v2908
    %v3691 = vunpack.c.l.bf16 %v2909
    %v3692 = vunpack.c.h.bf16 %v2909
    %v3693 = vunpack.c.l.bf16 %v2910
    %v3694 = vunpack.c.h.bf16 %v2910
    %v3695 = vunpack.c.l.bf16 %v2911
    %v3696 = vunpack.c.h.bf16 %v2911
    %v3697 = vunpack.c.l.bf16 %v2912
    %v3698 = vunpack.c.l.bf16 %v2913
    %v3699 = vunpack.c.h.bf16 %v2913
    %v3700 = vunpack.c.l.bf16 %v2914
    %v3701 = vunpack.c.h.bf16 %v2914
    %v3702 = vunpack.c.l.bf16 %v2915
    %v3703 = vunpack.c.h.bf16 %v2915
    %v3704 = vunpack.c.l.bf16 %v2916
    %v3705 = vunpack.c.l.bf16 %v2917
    %v3706 = vunpack.c.h.bf16 %v2917
    %v3707 = vunpack.c.l.bf16 %v2918
    %v3708 = vunpack.c.h.bf16 %v2918
    %v3709 = vunpack.c.l.bf16 %v2919
    %v3710 = vunpack.c.h.bf16 %v2919
    %v3711 = vunpack.c.l.bf16 %v2920
    %v3712 = vunpack.c.l.bf16 %v2921
    %v3713 = vunpack.c.h.bf16 %v2921
    %v3714 = vunpack.c.l.bf16 %v2922
    %v3715 = vunpack.c.h.bf16 %v2922
    %v3716 = vunpack.c.l.bf16 %v2923
    %v3717 = vunpack.c.h.bf16 %v2923
    %v3718 = vunpack.c.l.bf16 %v2924
    %v3719 = vunpack.c.l.bf16 %v2925
    %v3720 = vunpack.c.h.bf16 %v2925
    %v3721 = vunpack.c.l.bf16 %v2926
    %v3722 = vunpack.c.h.bf16 %v2926
    %v3723 = vunpack.c.l.bf16 %v2927
    %v3724 = vunpack.c.h.bf16 %v2927
    %v3725 = vunpack.c.l.bf16 %v2928
    %v3726 = vunpack.c.l.bf16 %v2929
    %v3727 = vunpack.c.h.bf16 %v2929
    %v3728 = vunpack.c.l.bf16 %v2930
    %v3729 = vunpack.c.h.bf16 %v2930
    %v3730 = vunpack.c.l.bf16 %v2931
    %v3731 = vunpack.c.h.bf16 %v2931
    %v3732 = vunpack.c.l.bf16 %v2932
    %v3733 = vunpack.c.l.bf16 %v2933
    %v3734 = vunpack.c.h.bf16 %v2933
    %v3735 = vunpack.c.l.bf16 %v2934
    %v3736 = vunpack.c.h.bf16 %v2934
    %v3737 = vunpack.c.l.bf16 %v2935
    %v3738 = vunpack.c.h.bf16 %v2935
    %v3739 = vunpack.c.l.bf16 %v2936
    %v3740 = vunpack.c.l.bf16 %v2937
    %v3741 = vunpack.c.h.bf16 %v2937
    %v3742 = vunpack.c.l.bf16 %v2938
    %v3743 = vunpack.c.h.bf16 %v2938
    %v3744 = vunpack.c.l.bf16 %v2939
    %v3745 = vunpack.c.h.bf16 %v2939
    %v3746 = vunpack.c.l.bf16 %v2940
    %v3747 = vunpack.c.l.bf16 %v2941
    %v3748 = vunpack.c.h.bf16 %v2941
    %v3749 = vunpack.c.l.bf16 %v2942
    %v3750 = vunpack.c.h.bf16 %v2942
    %v3751 = vunpack.c.l.bf16 %v2943
    %v3752 = vunpack.c.h.bf16 %v2943
    %v3753 = vunpack.c.l.bf16 %v2944
    %v3754 = vunpack.c.l.bf16 %v2945
    %v3755 = vunpack.c.h.bf16 %v2945
    %v3756 = vunpack.c.l.bf16 %v2946
    %v3757 = vunpack.c.h.bf16 %v2946
    %v3758 = vunpack.c.l.bf16 %v2947
    %v3759 = vunpack.c.h.bf16 %v2947
    %v3760 = vunpack.c.l.bf16 %v2948
    %v3761 = vunpack.c.l.bf16 %v2949
    %v3762 = vunpack.c.h.bf16 %v2949
    %v3763 = vunpack.c.l.bf16 %v2950
    %v3764 = vunpack.c.h.bf16 %v2950
    %v3765 = vunpack.c.l.bf16 %v2951
    %v3766 = vunpack.c.h.bf16 %v2951
    %v3767 = vunpack.c.l.bf16 %v2952
    %v3768 = vunpack.c.l.bf16 %v2953
    %v3769 = vunpack.c.h.bf16 %v2953
    %v3770 = vunpack.c.l.bf16 %v2954
    %v3771 = vunpack.c.h.bf16 %v2954
    %v3772 = vunpack.c.l.bf16 %v2955
    %v3773 = vunpack.c.h.bf16 %v2955
    %v3774 = vunpack.c.l.bf16 %v2956
    %v3775 = vunpack.c.l.bf16 %v2957
    %v3776 = vunpack.c.h.bf16 %v2957
    %v3777 = vunpack.c.l.bf16 %v2958
    %v3778 = vunpack.c.h.bf16 %v2958
    %v3779 = vunpack.c.l.bf16 %v2959
    %v3780 = vunpack.c.h.bf16 %v2959
    %v3781 = vunpack.c.l.bf16 %v2960
    %v3782 = vunpack.c.l.bf16 %v2961
    %v3783 = vunpack.c.h.bf16 %v2961
    %v3784 = vunpack.c.l.bf16 %v2962
    %v3785 = vunpack.c.h.bf16 %v2962
    %v3786 = vunpack.c.l.bf16 %v2963
    %v3787 = vunpack.c.h.bf16 %v2963
    %v3788 = vunpack.c.l.bf16 %v2964
    %v3789 = vunpack.c.l.bf16 %v2965
    %v3790 = vunpack.c.h.bf16 %v2965
    %v3791 = vunpack.c.l.bf16 %v2966
    %v3792 = vunpack.c.h.bf16 %v2966
    %v3793 = vunpack.c.l.bf16 %v2967
    %v3794 = vunpack.c.h.bf16 %v2967
    %v3795 = vunpack.c.l.bf16 %v2968
    %v3796 = vunpack.c.l.bf16 %v2969
    %v3797 = vunpack.c.h.bf16 %v2969
    %v3798 = vunpack.c.l.bf16 %v2970
    %v3799 = vunpack.c.h.bf16 %v2970
    %v3800 = vunpack.c.l.bf16 %v2971
    %v3801 = vunpack.c.h.bf16 %v2971
    %v3802 = vunpack.c.l.bf16 %v2972
    %v3803 = vunpack.c.l.bf16 %v2973
    %v3804 = vunpack.c.h.bf16 %v2973
    %v3805 = vunpack.c.l.bf16 %v2974
    %v3806 = vunpack.c.h.bf16 %v2974
    %v3807 = vunpack.c.l.bf16 %v2975
    %v3808 = vunpack.c.h.bf16 %v2975
    %v3809 = vunpack.c.l.bf16 %v2976
    %v3810 = vunpack.c.l.bf16 %v2977
    %v3811 = vunpack.c.h.bf16 %v2977
    %v3812 = vunpack.c.l.bf16 %v2978
    %v3813 = vunpack.c.h.bf16 %v2978
    %v3814 = vunpack.c.l.bf16 %v2979
    %v3815 = vunpack.c.h.bf16 %v2979
    %v3816 = vunpack.c.l.bf16 %v2980
    %v3817 = vunpack.c.l.bf16 %v2981
    %v3818 = vunpack.c.h.bf16 %v2981
    %v3819 = vunpack.c.l.bf16 %v2982
    %v3820 = vunpack.c.h.bf16 %v2982
    %v3821 = vunpack.c.l.bf16 %v2983
    %v3822 = vunpack.c.h.bf16 %v2983
    %v3823 = vunpack.c.l.bf16 %v2984
    %v3824 = vunpack.c.l.bf16 %v2985
    %v3825 = vunpack.c.h.bf16 %v2985
    %v3826 = vunpack.c.l.bf16 %v2986
    %v3827 = vunpack.c.h.bf16 %v2986
    %v3828 = vunpack.c.l.bf16 %v2987
    %v3829 = vunpack.c.h.bf16 %v2987
    %v3830 = vunpack.c.l.bf16 %v2988
    %v3831 = vunpack.c.l.bf16 %v2989
    %v3832 = vunpack.c.h.bf16 %v2989
    %v3833 = vunpack.c.l.bf16 %v2990
    %v3834 = vunpack.c.h.bf16 %v2990
    %v3835 = vunpack.c.l.bf16 %v2991
    %v3836 = vunpack.c.h.bf16 %v2991
    %v3837 = vunpack.c.l.bf16 %v2992
    %v3838 = vunpack.c.l.bf16 %v2993
    %v3839 = vunpack.c.h.bf16 %v2993
    %v3840 = vunpack.c.l.bf16 %v2994
    %v3841 = vunpack.c.h.bf16 %v2994
    %v3842 = vunpack.c.l.bf16 %v2995
    %v3843 = vunpack.c.h.bf16 %v2995
    %v3844 = vunpack.c.l.bf16 %v2996
    %v3845 = vunpack.c.l.bf16 %v2997
    %v3846 = vunpack.c.h.bf16 %v2997
    %v3847 = vunpack.c.l.bf16 %v2998
    %v3848 = vunpack.c.h.bf16 %v2998
    %v3849 = vunpack.c.l.bf16 %v2999
    %v3850 = vunpack.c.h.bf16 %v2999
    %v3851 = vunpack.c.l.bf16 %v3000
    %v3852 = vunpack.c.l.bf16 %v3001
    %v3853 = vunpack.c.h.bf16 %v3001
    %v3854 = vunpack.c.l.bf16 %v3002
    %v3855 = vunpack.c.h.bf16 %v3002
    %v3856 = vunpack.c.l.bf16 %v3003
    %v3857 = vunpack.c.h.bf16 %v3003
    %v3858 = vunpack.c.l.bf16 %v3004
    %v3859 = vunpack.c.l.bf16 %v3005
    %v3860 = vunpack.c.h.bf16 %v3005
    %v3861 = vunpack.c.l.bf16 %v3006
    %v3862 = vunpack.c.h.bf16 %v3006
    %v3863 = vunpack.c.l.bf16 %v3007
    %v3864 = vunpack.c.h.bf16 %v3007
    %v3865 = vunpack.c.l.bf16 %v3008
    %v3866 = vunpack.c.l.bf16 %v3009
    %v3867 = vunpack.c.h.bf16 %v3009
    %v3868 = vunpack.c.l.bf16 %v3010
    %v3869 = vunpack.c.h.bf16 %v3010
    %v3870 = vunpack.c.l.bf16 %v3011
    %v3871 = vunpack.c.h.bf16 %v3011
    %v3872 = vunpack.c.l.bf16 %v3012
    %v3873 = vunpack.c.l.bf16 %v3013
    %v3874 = vunpack.c.h.bf16 %v3013
    %v3875 = vunpack.c.l.bf16 %v3014
    %v3876 = vunpack.c.h.bf16 %v3014
    %v3877 = vunpack.c.l.bf16 %v3015
    %v3878 = vunpack.c.h.bf16 %v3015
    %v3879 = vunpack.c.l.bf16 %v3016
    %v3880 = vunpack.c.l.bf16 %v3017
    %v3881 = vunpack.c.h.bf16 %v3017
    %v3882 = vunpack.c.l.bf16 %v3018
    %v3883 = vunpack.c.h.bf16 %v3018
    %v3884 = vunpack.c.l.bf16 %v3019
    %v3885 = vunpack.c.h.bf16 %v3019
    %v3886 = vunpack.c.l.bf16 %v3020
    %v3887 = vunpack.c.l.bf16 %v3021
    %v3888 = vunpack.c.h.bf16 %v3021
    %v3889 = vunpack.c.l.bf16 %v3022
    %v3890 = vunpack.c.h.bf16 %v3022
    %v3891 = vunpack.c.l.bf16 %v3023
    %v3892 = vunpack.c.h.bf16 %v3023
    %v3893 = vunpack.c.l.bf16 %v3024
    %v3894 = vunpack.c.l.bf16 %v3025
    %v3895 = vunpack.c.h.bf16 %v3025
    %v3896 = vunpack.c.l.bf16 %v3026
    %v3897 = vunpack.c.h.bf16 %v3026
    %v3898 = vunpack.c.l.bf16 %v3027
    %v3899 = vunpack.c.h.bf16 %v3027
    %v3900 = vunpack.c.l.bf16 %v3028
    %v3901 = vunpack.c.l.bf16 %v3029
    %v3902 = vunpack.c.h.bf16 %v3029
    %v3903 = vunpack.c.l.bf16 %v3030
    %v3904 = vunpack.c.h.bf16 %v3030
    %v3905 = vunpack.c.l.bf16 %v3031
    %v3906 = vunpack.c.h.bf16 %v3031
    %v3907 = vunpack.c.l.bf16 %v3032
    %v3908 = vunpack.c.l.bf16 %v3033
    %v3909 = vunpack.c.h.bf16 %v3033
    %v3910 = vunpack.c.l.bf16 %v3034
    %v3911 = vunpack.c.h.bf16 %v3034
    %v3912 = vunpack.c.l.bf16 %v3035
    %v3913 = vunpack.c.h.bf16 %v3035
    %v3914 = vunpack.c.l.bf16 %v3036
    %v3915 = vunpack.c.l.bf16 %v3037
    %v3916 = vunpack.c.h.bf16 %v3037
    %v3917 = vunpack.c.l.bf16 %v3038
    %v3918 = vunpack.c.h.bf16 %v3038
    %v3919 = vunpack.c.l.bf16 %v3039
    %v3920 = vunpack.c.h.bf16 %v3039
    %v3921 = vunpack.c.l.bf16 %v3040
    %v3922 = vunpack.c.l.bf16 %v3041
    %v3923 = vunpack.c.h.bf16 %v3041
    %v3924 = vunpack.c.l.bf16 %v3042
    %v3925 = vunpack.c.h.bf16 %v3042
    %v3926 = vunpack.c.l.bf16 %v3043
    %v3927 = vunpack.c.h.bf16 %v3043
    %v3928 = vunpack.c.l.bf16 %v3044
    %v3929 = vunpack.c.l.bf16 %v3045
    %v3930 = vunpack.c.h.bf16 %v3045
    %v3931 = vunpack.c.l.bf16 %v3046
    %v3932 = vunpack.c.h.bf16 %v3046
    %v3933 = vunpack.c.l.bf16 %v3047
    %v3934 = vunpack.c.h.bf16 %v3047
    %v3935 = vunpack.c.l.bf16 %v3048
    %v3936 = vunpack.c.l.bf16 %v3049
    %v3937 = vunpack.c.h.bf16 %v3049
    %v3938 = vunpack.c.l.bf16 %v3050
    %v3939 = vunpack.c.h.bf16 %v3050
    %v3940 = vunpack.c.l.bf16 %v3051
    %v3941 = vunpack.c.h.bf16 %v3051
    %v3942 = vunpack.c.l.bf16 %v3052
    %v3943 = vunpack.c.l.bf16 %v3053
    %v3944 = vunpack.c.h.bf16 %v3053
    %v3945 = vunpack.c.l.bf16 %v3054
    %v3946 = vunpack.c.h.bf16 %v3054
    %v3947 = vunpack.c.l.bf16 %v3055
    %v3948 = vunpack.c.h.bf16 %v3055
    %v3949 = vunpack.c.l.bf16 %v3056
    %v3950 = vunpack.c.l.bf16 %v3057
    %v3951 = vunpack.c.h.bf16 %v3057
    %v3952 = vunpack.c.l.bf16 %v3058
    %v3953 = vunpack.c.h.bf16 %v3058
    %v3954 = vunpack.c.l.bf16 %v3059
    %v3955 = vunpack.c.h.bf16 %v3059
    %v3956 = vunpack.c.l.bf16 %v3060
    %v3957 = vld [vmem:[%s14] sm:$0x7f]
    %v3959 = vlaneseq
    %v3960 = vshrl.u32 %v3959, 7
    %v3961 = vsub.s32 0, %v3960
    %v3962 = vrot.slane %v3957, %v3961
    %v3963 = vlaneseq
    %v3964 = vshrl.u32 %v3963, 7
    %v3965 = vsub.s32 1, %v3964
    %v3966 = vrot.slane %v3957, %v3965
    %v3967 = vlaneseq
    %v3968 = vshrl.u32 %v3967, 7
    %v3969 = vsub.s32 2, %v3968
    %v3970 = vrot.slane %v3957, %v3969
    %v3971 = vlaneseq
    %v3972 = vshrl.u32 %v3971, 7
    %v3973 = vsub.s32 3, %v3972
    %v3974 = vrot.slane %v3957, %v3973
    %v3975 = vlaneseq
    %v3976 = vshrl.u32 %v3975, 7
    %v3977 = vsub.s32 4, %v3976
    %v3978 = vrot.slane %v3957, %v3977
    %v3979 = vlaneseq
    %v3980 = vshrl.u32 %v3979, 7
    %v3981 = vsub.s32 5, %v3980
    %v3982 = vrot.slane %v3957, %v3981
    %v3983 = vlaneseq
    %v3984 = vshrl.u32 %v3983, 7
    %v3985 = vsub.s32 6, %v3984
    %v3986 = vrot.slane %v3957, %v3985
    %3994 = vmatprep.subr.mxu0 %v3167
    %3995 = vmatpush1.msra.mxu0 %v3166
    %3996 = vmatprep.subr.mxu0 %v3160
    %3997 = vmatpush1.msra.mxu0 %v3159
    %3998 = vmatprep.subr.mxu0 %v3153
    %3999 = vmatpush1.msra.mxu0 %v3152
    %4000 = vmatprep.subr.mxu0 %v3146
    %4001 = vmatpush1.msra.mxu0 %v3145
    %4002 = vmatprep.subr.mxu0 %v3139
    %4003 = vmatpush1.msra.mxu0 %v3138
    %4004 = vmatprep.subr.mxu0 %v3132
    %4005 = vmatpush1.msra.mxu0 %v3131
    %4006 = vmatprep.subr.mxu0 %v3125
    %4007 = vmatpush1.msra.mxu0 %v3124
    %4008 = vmatprep.subr.mxu0 %v3118
    %4009 = vmatpush1.msra.mxu0 %v3117
    %4010 = vmatprep.subr.mxu0 %v3111
    %4011 = vmatpush1.msra.mxu0 %v3110
    %4012 = vmatprep.subr.mxu0 %v3104
    %4013 = vmatpush1.msra.mxu0 %v3103
    %4014 = vmatprep.subr.mxu0 %v3097
    %4015 = vmatpush1.msra.mxu0 %v3096
    %4016 = vmatprep.subr.mxu0 %v3090
    %4017 = vmatpush1.msra.mxu0 %v3089
    %4018 = vmatprep.subr.mxu0 %v3083
    %4019 = vmatpush1.msra.mxu0 %v3082
    %4020 = vmatprep.subr.mxu0 %v3076
    %4021 = vmatpush1.msra.mxu0 %v3075
    %4022 = vmatprep.subr.mxu0 %v3069
    %4023 = vmatpush1.msra.mxu0 %v3068
    %4024 = vmatprep.subr.mxu0 %v3062
    %4025 = vmatpush1.msra.mxu0 %v3061
    %4026 = vmatprep.subr.mxu0 %v3279
    %4027 = vmatpush2.msra.mxu0 %v3278
    %4028 = vmatprep.subr.mxu0 %v3272
    %4029 = vmatpush2.msra.mxu0 %v3271
    %4030 = vmatprep.subr.mxu0 %v3265
    %4031 = vmatpush2.msra.mxu0 %v3264
    %4032 = vmatprep.subr.mxu0 %v3258
    %4033 = vmatpush2.msra.mxu0 %v3257
    %4034 = vmatprep.subr.mxu0 %v3251
    %4035 = vmatpush2.msra.mxu0 %v3250
    %4036 = vmatprep.subr.mxu0 %v3244
    %4037 = vmatpush2.msra.mxu0 %v3243
    %4038 = vmatprep.subr.mxu0 %v3237
    %4039 = vmatpush2.msra.mxu0 %v3236
    %4040 = vmatprep.subr.mxu0 %v3230
    %4041 = vmatpush2.msra.mxu0 %v3229
    %4042 = vmatprep.subr.mxu0 %v3223
    %4043 = vmatpush2.msra.mxu0 %v3222
    %4044 = vmatprep.subr.mxu0 %v3216
    %4045 = vmatpush2.msra.mxu0 %v3215
    %4046 = vmatprep.subr.mxu0 %v3209
    %4047 = vmatpush2.msra.mxu0 %v3208
    %4048 = vmatprep.subr.mxu0 %v3202
    %4049 = vmatpush2.msra.mxu0 %v3201
    %4050 = vmatprep.subr.mxu0 %v3195
    %4051 = vmatpush2.msra.mxu0 %v3194
    %4052 = vmatprep.subr.mxu0 %v3188
    %4053 = vmatpush2.msra.mxu0 %v3187
    %4054 = vmatprep.subr.mxu0 %v3181
    %4055 = vmatpush2.msra.mxu0 %v3180
    %4056 = vmatprep.subr.mxu0 %v3174
    %4057 = vmatpush2.msra.mxu0 %v3173
    %4058 = vmatprep.mubr.f32.mxu0 %v2542
    %4059 = vmatmul.mubr.f32.gmra.mxu0 %v2541
    %v4060 = vpop.f32.mrf.mxu0
    %v4061 = vadd.f32 %v3962, %v4060
    %v4062 = vpop.f32.mrf.mxu0
    %v4063 = vadd.f32 %v3966, %v4062
    %4064 = vdwg.mxu0
    %4065 = vmatprep.subr.mxu0 %v3391
    %4066 = vmatpush1.msra.mxu0 %v3390
    %4067 = vmatprep.subr.mxu0 %v3384
    %4068 = vmatpush1.msra.mxu0 %v3383
    %4069 = vmatprep.subr.mxu0 %v3377
    %4070 = vmatpush1.msra.mxu0 %v3376
    %4071 = vmatprep.subr.mxu0 %v3370
    %4072 = vmatpush1.msra.mxu0 %v3369
    %4073 = vmatprep.subr.mxu0 %v3363
    %4074 = vmatpush1.msra.mxu0 %v3362
    %4075 = vmatprep.subr.mxu0 %v3356
    %4076 = vmatpush1.msra.mxu0 %v3355
    %4077 = vmatprep.subr.mxu0 %v3349
    %4078 = vmatpush1.msra.mxu0 %v3348
    %4079 = vmatprep.subr.mxu0 %v3342
    %4080 = vmatpush1.msra.mxu0 %v3341
    %4081 = vmatprep.subr.mxu0 %v3335
    %4082 = vmatpush1.msra.mxu0 %v3334
    %4083 = vmatprep.subr.mxu0 %v3328
    %4084 = vmatpush1.msra.mxu0 %v3327
    %4085 = vmatprep.subr.mxu0 %v3321
    %4086 = vmatpush1.msra.mxu0 %v3320
    %4087 = vmatprep.subr.mxu0 %v3314
    %4088 = vmatpush1.msra.mxu0 %v3313
    %4089 = vmatprep.subr.mxu0 %v3307
    %4090 = vmatpush1.msra.mxu0 %v3306
    %4091 = vmatprep.subr.mxu0 %v3300
    %4092 = vmatpush1.msra.mxu0 %v3299
    %4093 = vmatprep.subr.mxu0 %v3293
    %4094 = vmatpush1.msra.mxu0 %v3292
    %4095 = vmatprep.subr.mxu0 %v3286
    %4096 = vmatpush1.msra.mxu0 %v3285
    %4097 = vmatprep.subr.mxu0 %v3503
    %4098 = vmatpush2.msra.mxu0 %v3502
    %4099 = vmatprep.subr.mxu0 %v3496
    %4100 = vmatpush2.msra.mxu0 %v3495
    %4101 = vmatprep.subr.mxu0 %v3489
    %4102 = vmatpush2.msra.mxu0 %v3488
    %4103 = vmatprep.subr.mxu0 %v3482
    %4104 = vmatpush2.msra.mxu0 %v3481
    %4105 = vmatprep.subr.mxu0 %v3475
    %4106 = vmatpush2.msra.mxu0 %v3474
    %4107 = vmatprep.subr.mxu0 %v3468
    %4108 = vmatpush2.msra.mxu0 %v3467
    %4109 = vmatprep.subr.mxu0 %v3461
    %4110 = vmatpush2.msra.mxu0 %v3460
    %4111 = vmatprep.subr.mxu0 %v3454
    %4112 = vmatpush2.msra.mxu0 %v3453
    %4113 = vmatprep.subr.mxu0 %v3447
    %4114 = vmatpush2.msra.mxu0 %v3446
    %4115 = vmatprep.subr.mxu0 %v3440
    %4116 = vmatpush2.msra.mxu0 %v3439
    %4117 = vmatprep.subr.mxu0 %v3433
    %4118 = vmatpush2.msra.mxu0 %v3432
    %4119 = vmatprep.subr.mxu0 %v3426
    %4120 = vmatpush2.msra.mxu0 %v3425
    %4121 = vmatprep.subr.mxu0 %v3419
    %4122 = vmatpush2.msra.mxu0 %v3418
    %4123 = vmatprep.subr.mxu0 %v3412
    %4124 = vmatpush2.msra.mxu0 %v3411
    %4125 = vmatprep.subr.mxu0 %v3405
    %4126 = vmatpush2.msra.mxu0 %v3404
    %4127 = vmatprep.subr.mxu0 %v3398
    %4128 = vmatpush2.msra.mxu0 %v3397
    %4129 = vmatprep.mubr.f32.mxu0 %v2544
    %4130 = vmatmul.mubr.f32.gmra.mxu0 %v2543
    %v4131 = vpop.f32.mrf.mxu0
    %v4132 = vadd.f32 %v4061, %v4131
    %v4133 = vpop.f32.mrf.mxu0
    %v4134 = vadd.f32 %v4063, %v4133
    %4135 = vdwg.mxu0
    %4136 = vmatprep.subr.mxu0 %v3615
    %4137 = vmatpush1.msra.mxu0 %v3614
    %4138 = vmatprep.subr.mxu0 %v3608
    %4139 = vmatpush1.msra.mxu0 %v3607
    %4140 = vmatprep.subr.mxu0 %v3601
    %4141 = vmatpush1.msra.mxu0 %v3600
    %4142 = vmatprep.subr.mxu0 %v3594
    %4143 = vmatpush1.msra.mxu0 %v3593
    %4144 = vmatprep.subr.mxu0 %v3587
    %4145 = vmatpush1.msra.mxu0 %v3586
    %4146 = vmatprep.subr.mxu0 %v3580
    %4147 = vmatpush1.msra.mxu0 %v3579
    %4148 = vmatprep.subr.mxu0 %v3573
    %4149 = vmatpush1.msra.mxu0 %v3572
    %4150 = vmatprep.subr.mxu0 %v3566
    %4151 = vmatpush1.msra.mxu0 %v3565
    %4152 = vmatprep.subr.mxu0 %v3559
    %4153 = vmatpush1.msra.mxu0 %v3558
    %4154 = vmatprep.subr.mxu0 %v3552
    %4155 = vmatpush1.msra.mxu0 %v3551
    %4156 = vmatprep.subr.mxu0 %v3545
    %4157 = vmatpush1.msra.mxu0 %v3544
    %4158 = vmatprep.subr.mxu0 %v3538
    %4159 = vmatpush1.msra.mxu0 %v3537
    %4160 = vmatprep.subr.mxu0 %v3531
    %4161 = vmatpush1.msra.mxu0 %v3530
    %4162 = vmatprep.subr.mxu0 %v3524
    %4163 = vmatpush1.msra.mxu0 %v3523
    %4164 = vmatprep.subr.mxu0 %v3517
    %4165 = vmatpush1.msra.mxu0 %v3516
    %4166 = vmatprep.subr.mxu0 %v3510
    %4167 = vmatpush1.msra.mxu0 %v3509
    %4168 = vmatprep.subr.mxu0 %v3727
    %4169 = vmatpush2.msra.mxu0 %v3726
    %4170 = vmatprep.subr.mxu0 %v3720
    %4171 = vmatpush2.msra.mxu0 %v3719
    %4172 = vmatprep.subr.mxu0 %v3713
    %4173 = vmatpush2.msra.mxu0 %v3712
    %4174 = vmatprep.subr.mxu0 %v3706
    %4175 = vmatpush2.msra.mxu0 %v3705
    %4176 = vmatprep.subr.mxu0 %v3699
    %4177 = vmatpush2.msra.mxu0 %v3698
    %4178 = vmatprep.subr.mxu0 %v3692
    %4179 = vmatpush2.msra.mxu0 %v3691
    %4180 = vmatprep.subr.mxu0 %v3685
    %4181 = vmatpush2.msra.mxu0 %v3684
    %4182 = vmatprep.subr.mxu0 %v3678
    %4183 = vmatpush2.msra.mxu0 %v3677
    %4184 = vmatprep.subr.mxu0 %v3671
    %4185 = vmatpush2.msra.mxu0 %v3670
    %4186 = vmatprep.subr.mxu0 %v3664
    %4187 = vmatpush2.msra.mxu0 %v3663
    %4188 = vmatprep.subr.mxu0 %v3657
    %4189 = vmatpush2.msra.mxu0 %v3656
    %4190 = vmatprep.subr.mxu0 %v3650
    %4191 = vmatpush2.msra.mxu0 %v3649
    %4192 = vmatprep.subr.mxu0 %v3643
    %4193 = vmatpush2.msra.mxu0 %v3642
    %4194 = vmatprep.subr.mxu0 %v3636
    %4195 = vmatpush2.msra.mxu0 %v3635
    %4196 = vmatprep.subr.mxu0 %v3629
    %4197 = vmatpush2.msra.mxu0 %v3628
    %4198 = vmatprep.subr.mxu0 %v3622
    %4199 = vmatpush2.msra.mxu0 %v3621
    %4200 = vmatprep.mubr.f32.mxu0 %v2546
    %4201 = vmatmul.mubr.f32.gmra.mxu0 %v2545
    %v4202 = vpop.f32.mrf.mxu0
    %v4203 = vadd.f32 %v4132, %v4202
    %v4204 = vpop.f32.mrf.mxu0
    %v4205 = vadd.f32 %v4134, %v4204
    %4206 = vdwg.mxu0
    %4207 = vmatprep.subr.mxu0 %v3839
    %4208 = vmatpush1.msra.mxu0 %v3838
    %4209 = vmatprep.subr.mxu0 %v3832
    %4210 = vmatpush1.msra.mxu0 %v3831
    %4211 = vmatprep.subr.mxu0 %v3825
    %4212 = vmatpush1.msra.mxu0 %v3824
    %4213 = vmatprep.subr.mxu0 %v3818
    %4214 = vmatpush1.msra.mxu0 %v3817
    %4215 = vmatprep.subr.mxu0 %v3811
    %4216 = vmatpush1.msra.mxu0 %v3810
    %4217 = vmatprep.subr.mxu0 %v3804
    %4218 = vmatpush1.msra.mxu0 %v3803
    %4219 = vmatprep.subr.mxu0 %v3797
    %4220 = vmatpush1.msra.mxu0 %v3796
    %4221 = vmatprep.subr.mxu0 %v3790
    %4222 = vmatpush1.msra.mxu0 %v3789
    %4223 = vmatprep.subr.mxu0 %v3783
    %4224 = vmatpush1.msra.mxu0 %v3782
    %4225 = vmatprep.subr.mxu0 %v3776
    %4226 = vmatpush1.msra.mxu0 %v3775
    %4227 = vmatprep.subr.mxu0 %v3769
    %4228 = vmatpush1.msra.mxu0 %v3768
    %4229 = vmatprep.subr.mxu0 %v3762
    %4230 = vmatpush1.msra.mxu0 %v3761
    %4231 = vmatprep.subr.mxu0 %v3755
    %4232 = vmatpush1.msra.mxu0 %v3754
    %4233 = vmatprep.subr.mxu0 %v3748
    %4234 = vmatpush1.msra.mxu0 %v3747
    %4235 = vmatprep.subr.mxu0 %v3741
    %4236 = vmatpush1.msra.mxu0 %v3740
    %4237 = vmatprep.subr.mxu0 %v3734
    %4238 = vmatpush1.msra.mxu0 %v3733
    %4239 = vmatprep.subr.mxu0 %v3951
    %4240 = vmatpush2.msra.mxu0 %v3950
    %4241 = vmatprep.subr.mxu0 %v3944
    %4242 = vmatpush2.msra.mxu0 %v3943
    %4243 = vmatprep.subr.mxu0 %v3937
    %4244 = vmatpush2.msra.mxu0 %v3936
    %4245 = vmatprep.subr.mxu0 %v3930
    %4246 = vmatpush2.msra.mxu0 %v3929
    %4247 = vmatprep.subr.mxu0 %v3923
    %4248 = vmatpush2.msra.mxu0 %v3922
    %4249 = vmatprep.subr.mxu0 %v3916
    %4250 = vmatpush2.msra.mxu0 %v3915
    %4251 = vmatprep.subr.mxu0 %v3909
    %4252 = vmatpush2.msra.mxu0 %v3908
    %4253 = vmatprep.subr.mxu0 %v3902
    %4254 = vmatpush2.msra.mxu0 %v3901
    %4255 = vmatprep.subr.mxu0 %v3895
    %4256 = vmatpush2.msra.mxu0 %v3894
    %4257 = vmatprep.subr.mxu0 %v3888
    %4258 = vmatpush2.msra.mxu0 %v3887
    %4259 = vmatprep.subr.mxu0 %v3881
    %4260 = vmatpush2.msra.mxu0 %v3880
    %4261 = vmatprep.subr.mxu0 %v3874
    %4262 = vmatpush2.msra.mxu0 %v3873
    %4263 = vmatprep.subr.mxu0 %v3867
    %4264 = vmatpush2.msra.mxu0 %v3866
    %4265 = vmatprep.subr.mxu0 %v3860
    %4266 = vmatpush2.msra.mxu0 %v3859
    %4267 = vmatprep.subr.mxu0 %v3853
    %4268 = vmatpush2.msra.mxu0 %v3852
    %4269 = vmatprep.subr.mxu0 %v3846
    %4270 = vmatpush2.msra.mxu0 %v3845
    %4271 = vmatprep.mubr.f32.mxu0 %v2548
    %4272 = vmatmul.mubr.f32.gmra.mxu0 %v2547
    %v4273 = vpop.f32.mrf.mxu0
    %v4274 = vadd.f32 %v4203, %v4273
    %v4275 = vpop.f32.mrf.mxu0
    %v4276 = vadd.f32 %v4205, %v4275
    %4277 = vdwg.mxu0
    %4278 = vmatprep.subr.mxu0 %v3169
    %4279 = vmatpush1.msra.mxu0 %v3168
    %4280 = vmatprep.subr.mxu0 %v3162
    %4281 = vmatpush1.msra.mxu0 %v3161
    %4282 = vmatprep.subr.mxu0 %v3155
    %4283 = vmatpush1.msra.mxu0 %v3154
    %4284 = vmatprep.subr.mxu0 %v3148
    %4285 = vmatpush1.msra.mxu0 %v3147
    %4286 = vmatprep.subr.mxu0 %v3141
    %4287 = vmatpush1.msra.mxu0 %v3140
    %4288 = vmatprep.subr.mxu0 %v3134
    %4289 = vmatpush1.msra.mxu0 %v3133
    %4290 = vmatprep.subr.mxu0 %v3127
    %4291 = vmatpush1.msra.mxu0 %v3126
    %4292 = vmatprep.subr.mxu0 %v3120
    %4293 = vmatpush1.msra.mxu0 %v3119
    %4294 = vmatprep.subr.mxu0 %v3113
    %4295 = vmatpush1.msra.mxu0 %v3112
    %4296 = vmatprep.subr.mxu0 %v3106
    %4297 = vmatpush1.msra.mxu0 %v3105
    %4298 = vmatprep.subr.mxu0 %v3099
    %4299 = vmatpush1.msra.mxu0 %v3098
    %4300 = vmatprep.subr.mxu0 %v3092
    %4301 = vmatpush1.msra.mxu0 %v3091
    %4302 = vmatprep.subr.mxu0 %v3085
    %4303 = vmatpush1.msra.mxu0 %v3084
    %4304 = vmatprep.subr.mxu0 %v3078
    %4305 = vmatpush1.msra.mxu0 %v3077
    %4306 = vmatprep.subr.mxu0 %v3071
    %4307 = vmatpush1.msra.mxu0 %v3070
    %4308 = vmatprep.subr.mxu0 %v3064
    %4309 = vmatpush1.msra.mxu0 %v3063
    %4310 = vmatprep.subr.mxu0 %v3281
    %4311 = vmatpush2.msra.mxu0 %v3280
    %4312 = vmatprep.subr.mxu0 %v3274
    %4313 = vmatpush2.msra.mxu0 %v3273
    %4314 = vmatprep.subr.mxu0 %v3267
    %4315 = vmatpush2.msra.mxu0 %v3266
    %4316 = vmatprep.subr.mxu0 %v3260
    %4317 = vmatpush2.msra.mxu0 %v3259
    %4318 = vmatprep.subr.mxu0 %v3253
    %4319 = vmatpush2.msra.mxu0 %v3252
    %4320 = vmatprep.subr.mxu0 %v3246
    %4321 = vmatpush2.msra.mxu0 %v3245
    %4322 = vmatprep.subr.mxu0 %v3239
    %4323 = vmatpush2.msra.mxu0 %v3238
    %4324 = vmatprep.subr.mxu0 %v3232
    %4325 = vmatpush2.msra.mxu0 %v3231
    %4326 = vmatprep.subr.mxu0 %v3225
    %4327 = vmatpush2.msra.mxu0 %v3224
    %4328 = vmatprep.subr.mxu0 %v3218
    %4329 = vmatpush2.msra.mxu0 %v3217
    %4330 = vmatprep.subr.mxu0 %v3211
    %4331 = vmatpush2.msra.mxu0 %v3210
    %4332 = vmatprep.subr.mxu0 %v3204
    %4333 = vmatpush2.msra.mxu0 %v3203
    %4334 = vmatprep.subr.mxu0 %v3197
    %4335 = vmatpush2.msra.mxu0 %v3196
    %4336 = vmatprep.subr.mxu0 %v3190
    %4337 = vmatpush2.msra.mxu0 %v3189
    %4338 = vmatprep.subr.mxu0 %v3183
    %4339 = vmatpush2.msra.mxu0 %v3182
    %4340 = vmatprep.subr.mxu0 %v3176
    %4341 = vmatpush2.msra.mxu0 %v3175
    %4342 = vmatprep.mubr.f32.mxu0 %v2542
    %4343 = vmatmul.mubr.f32.gmra.mxu0 %v2541
    %v4344 = vpop.f32.mrf.mxu0
    %v4345 = vadd.f32 %v3970, %v4344
    %v4346 = vpop.f32.mrf.mxu0
    %v4347 = vadd.f32 %v3974, %v4346
    %4348 = vdwg.mxu0
    %4349 = vmatprep.subr.mxu0 %v3393
    %4350 = vmatpush1.msra.mxu0 %v3392
    %4351 = vmatprep.subr.mxu0 %v3386
    %4352 = vmatpush1.msra.mxu0 %v3385
    %4353 = vmatprep.subr.mxu0 %v3379
    %4354 = vmatpush1.msra.mxu0 %v3378
    %4355 = vmatprep.subr.mxu0 %v3372
    %4356 = vmatpush1.msra.mxu0 %v3371
    %4357 = vmatprep.subr.mxu0 %v3365
    %4358 = vmatpush1.msra.mxu0 %v3364
    %4359 = vmatprep.subr.mxu0 %v3358
    %4360 = vmatpush1.msra.mxu0 %v3357
    %4361 = vmatprep.subr.mxu0 %v3351
    %4362 = vmatpush1.msra.mxu0 %v3350
    %4363 = vmatprep.subr.mxu0 %v3344
    %4364 = vmatpush1.msra.mxu0 %v3343
    %4365 = vmatprep.subr.mxu0 %v3337
    %4366 = vmatpush1.msra.mxu0 %v3336
    %4367 = vmatprep.subr.mxu0 %v3330
    %4368 = vmatpush1.msra.mxu0 %v3329
    %4369 = vmatprep.subr.mxu0 %v3323
    %4370 = vmatpush1.msra.mxu0 %v3322
    %4371 = vmatprep.subr.mxu0 %v3316
    %4372 = vmatpush1.msra.mxu0 %v3315
    %4373 = vmatprep.subr.mxu0 %v3309
    %4374 = vmatpush1.msra.mxu0 %v3308
    %4375 = vmatprep.subr.mxu0 %v3302
    %4376 = vmatpush1.msra.mxu0 %v3301
    %4377 = vmatprep.subr.mxu0 %v3295
    %4378 = vmatpush1.msra.mxu0 %v3294
    %4379 = vmatprep.subr.mxu0 %v3288
    %4380 = vmatpush1.msra.mxu0 %v3287
    %4381 = vmatprep.subr.mxu0 %v3505
    %4382 = vmatpush2.msra.mxu0 %v3504
    %4383 = vmatprep.subr.mxu0 %v3498
    %4384 = vmatpush2.msra.mxu0 %v3497
    %4385 = vmatprep.subr.mxu0 %v3491
    %4386 = vmatpush2.msra.mxu0 %v3490
    %4387 = vmatprep.subr.mxu0 %v3484
    %4388 = vmatpush2.msra.mxu0 %v3483
    %4389 = vmatprep.subr.mxu0 %v3477
    %4390 = vmatpush2.msra.mxu0 %v3476
    %4391 = vmatprep.subr.mxu0 %v3470
    %4392 = vmatpush2.msra.mxu0 %v3469
    %4393 = vmatprep.subr.mxu0 %v3463
    %4394 = vmatpush2.msra.mxu0 %v3462
    %4395 = vmatprep.subr.mxu0 %v3456
    %4396 = vmatpush2.msra.mxu0 %v3455
    %4397 = vmatprep.subr.mxu0 %v3449
    %4398 = vmatpush2.msra.mxu0 %v3448
    %4399 = vmatprep.subr.mxu0 %v3442
    %4400 = vmatpush2.msra.mxu0 %v3441
    %4401 = vmatprep.subr.mxu0 %v3435
    %4402 = vmatpush2.msra.mxu0 %v3434
    %4403 = vmatprep.subr.mxu0 %v3428
    %4404 = vmatpush2.msra.mxu0 %v3427
    %4405 = vmatprep.subr.mxu0 %v3421
    %4406 = vmatpush2.msra.mxu0 %v3420
    %4407 = vmatprep.subr.mxu0 %v3414
    %4408 = vmatpush2.msra.mxu0 %v3413
    %4409 = vmatprep.subr.mxu0 %v3407
    %4410 = vmatpush2.msra.mxu0 %v3406
    %4411 = vmatprep.subr.mxu0 %v3400
    %4412 = vmatpush2.msra.mxu0 %v3399
    %4413 = vmatprep.mubr.f32.mxu0 %v2544
    %4414 = vmatmul.mubr.f32.gmra.mxu0 %v2543
    %v4415 = vpop.f32.mrf.mxu0
    %v4416 = vadd.f32 %v4345, %v4415
    %v4417 = vpop.f32.mrf.mxu0
    %v4418 = vadd.f32 %v4347, %v4417
    %4419 = vdwg.mxu0
    %4420 = vmatprep.subr.mxu0 %v3617
    %4421 = vmatpush1.msra.mxu0 %v3616
    %4422 = vmatprep.subr.mxu0 %v3610
    %4423 = vmatpush1.msra.mxu0 %v3609
    %4424 = vmatprep.subr.mxu0 %v3603
    %4425 = vmatpush1.msra.mxu0 %v3602
    %4426 = vmatprep.subr.mxu0 %v3596
    %4427 = vmatpush1.msra.mxu0 %v3595
    %4428 = vmatprep.subr.mxu0 %v3589
    %4429 = vmatpush1.msra.mxu0 %v3588
    %4430 = vmatprep.subr.mxu0 %v3582
    %4431 = vmatpush1.msra.mxu0 %v3581
    %4432 = vmatprep.subr.mxu0 %v3575
    %4433 = vmatpush1.msra.mxu0 %v3574
    %4434 = vmatprep.subr.mxu0 %v3568
    %4435 = vmatpush1.msra.mxu0 %v3567
    %4436 = vmatprep.subr.mxu0 %v3561
    %4437 = vmatpush1.msra.mxu0 %v3560
    %4438 = vmatprep.subr.mxu0 %v3554
    %4439 = vmatpush1.msra.mxu0 %v3553
    %4440 = vmatprep.subr.mxu0 %v3547
    %4441 = vmatpush1.msra.mxu0 %v3546
    %4442 = vmatprep.subr.mxu0 %v3540
    %4443 = vmatpush1.msra.mxu0 %v3539
    %4444 = vmatprep.subr.mxu0 %v3533
    %4445 = vmatpush1.msra.mxu0 %v3532
    %4446 = vmatprep.subr.mxu0 %v3526
    %4447 = vmatpush1.msra.mxu0 %v3525
    %4448 = vmatprep.subr.mxu0 %v3519
    %4449 = vmatpush1.msra.mxu0 %v3518
    %4450 = vmatprep.subr.mxu0 %v3512
    %4451 = vmatpush1.msra.mxu0 %v3511
    %4452 = vmatprep.subr.mxu0 %v3729
    %4453 = vmatpush2.msra.mxu0 %v3728
    %4454 = vmatprep.subr.mxu0 %v3722
    %4455 = vmatpush2.msra.mxu0 %v3721
    %4456 = vmatprep.subr.mxu0 %v3715
    %4457 = vmatpush2.msra.mxu0 %v3714
    %4458 = vmatprep.subr.mxu0 %v3708
    %4459 = vmatpush2.msra.mxu0 %v3707
    %4460 = vmatprep.subr.mxu0 %v3701
    %4461 = vmatpush2.msra.mxu0 %v3700
    %4462 = vmatprep.subr.mxu0 %v3694
    %4463 = vmatpush2.msra.mxu0 %v3693
    %4464 = vmatprep.subr.mxu0 %v3687
    %4465 = vmatpush2.msra.mxu0 %v3686
    %4466 = vmatprep.subr.mxu0 %v3680
    %4467 = vmatpush2.msra.mxu0 %v3679
    %4468 = vmatprep.subr.mxu0 %v3673
    %4469 = vmatpush2.msra.mxu0 %v3672
    %4470 = vmatprep.subr.mxu0 %v3666
    %4471 = vmatpush2.msra.mxu0 %v3665
    %4472 = vmatprep.subr.mxu0 %v3659
    %4473 = vmatpush2.msra.mxu0 %v3658
    %4474 = vmatprep.subr.mxu0 %v3652
    %4475 = vmatpush2.msra.mxu0 %v3651
    %4476 = vmatprep.subr.mxu0 %v3645
    %4477 = vmatpush2.msra.mxu0 %v3644
    %4478 = vmatprep.subr.mxu0 %v3638
    %4479 = vmatpush2.msra.mxu0 %v3637
    %4480 = vmatprep.subr.mxu0 %v3631
    %4481 = vmatpush2.msra.mxu0 %v3630
    %4482 = vmatprep.subr.mxu0 %v3624
    %4483 = vmatpush2.msra.mxu0 %v3623
    %4484 = vmatprep.mubr.f32.mxu0 %v2546
    %4485 = vmatmul.mubr.f32.gmra.mxu0 %v2545
    %v4486 = vpop.f32.mrf.mxu0
    %v4487 = vadd.f32 %v4416, %v4486
    %v4488 = vpop.f32.mrf.mxu0
    %v4489 = vadd.f32 %v4418, %v4488
    %4490 = vdwg.mxu0
    %4491 = vmatprep.subr.mxu0 %v3841
    %4492 = vmatpush1.msra.mxu0 %v3840
    %4493 = vmatprep.subr.mxu0 %v3834
    %4494 = vmatpush1.msra.mxu0 %v3833
    %4495 = vmatprep.subr.mxu0 %v3827
    %4496 = vmatpush1.msra.mxu0 %v3826
    %4497 = vmatprep.subr.mxu0 %v3820
    %4498 = vmatpush1.msra.mxu0 %v3819
    %4499 = vmatprep.subr.mxu0 %v3813
    %4500 = vmatpush1.msra.mxu0 %v3812
    %4501 = vmatprep.subr.mxu0 %v3806
    %4502 = vmatpush1.msra.mxu0 %v3805
    %4503 = vmatprep.subr.mxu0 %v3799
    %4504 = vmatpush1.msra.mxu0 %v3798
    %4505 = vmatprep.subr.mxu0 %v3792
    %4506 = vmatpush1.msra.mxu0 %v3791
    %4507 = vmatprep.subr.mxu0 %v3785
    %4508 = vmatpush1.msra.mxu0 %v3784
    %4509 = vmatprep.subr.mxu0 %v3778
    %4510 = vmatpush1.msra.mxu0 %v3777
    %4511 = vmatprep.subr.mxu0 %v3771
    %4512 = vmatpush1.msra.mxu0 %v3770
    %4513 = vmatprep.subr.mxu0 %v3764
    %4514 = vmatpush1.msra.mxu0 %v3763
    %4515 = vmatprep.subr.mxu0 %v3757
    %4516 = vmatpush1.msra.mxu0 %v3756
    %4517 = vmatprep.subr.mxu0 %v3750
    %4518 = vmatpush1.msra.mxu0 %v3749
    %4519 = vmatprep.subr.mxu0 %v3743
    %4520 = vmatpush1.msra.mxu0 %v3742
    %4521 = vmatprep.subr.mxu0 %v3736
    %4522 = vmatpush1.msra.mxu0 %v3735
    %4523 = vmatprep.subr.mxu0 %v3953
    %4524 = vmatpush2.msra.mxu0 %v3952
    %4525 = vmatprep.subr.mxu0 %v3946
    %4526 = vmatpush2.msra.mxu0 %v3945
    %4527 = vmatprep.subr.mxu0 %v3939
    %4528 = vmatpush2.msra.mxu0 %v3938
    %4529 = vmatprep.subr.mxu0 %v3932
    %4530 = vmatpush2.msra.mxu0 %v3931
    %4531 = vmatprep.subr.mxu0 %v3925
    %4532 = vmatpush2.msra.mxu0 %v3924
    %4533 = vmatprep.subr.mxu0 %v3918
    %4534 = vmatpush2.msra.mxu0 %v3917
    %4535 = vmatprep.subr.mxu0 %v3911
    %4536 = vmatpush2.msra.mxu0 %v3910
    %4537 = vmatprep.subr.mxu0 %v3904
    %4538 = vmatpush2.msra.mxu0 %v3903
    %4539 = vmatprep.subr.mxu0 %v3897
    %4540 = vmatpush2.msra.mxu0 %v3896
    %4541 = vmatprep.subr.mxu0 %v3890
    %4542 = vmatpush2.msra.mxu0 %v3889
    %4543 = vmatprep.subr.mxu0 %v3883
    %4544 = vmatpush2.msra.mxu0 %v3882
    %4545 = vmatprep.subr.mxu0 %v3876
    %4546 = vmatpush2.msra.mxu0 %v3875
    %4547 = vmatprep.subr.mxu0 %v3869
    %4548 = vmatpush2.msra.mxu0 %v3868
    %4549 = vmatprep.subr.mxu0 %v3862
    %4550 = vmatpush2.msra.mxu0 %v3861
    %4551 = vmatprep.subr.mxu0 %v3855
    %4552 = vmatpush2.msra.mxu0 %v3854
    %4553 = vmatprep.subr.mxu0 %v3848
    %4554 = vmatpush2.msra.mxu0 %v3847
    %4555 = vmatprep.mubr.f32.mxu0 %v2548
    %4556 = vmatmul.mubr.f32.gmra.mxu0 %v2547
    %v4557 = vpop.f32.mrf.mxu0
    %v4558 = vadd.f32 %v4487, %v4557
    %v4559 = vpop.f32.mrf.mxu0
    %v4560 = vadd.f32 %v4489, %v4559
    %4561 = vdwg.mxu0
    %4562 = vmatprep.subr.mxu0 %v3171
    %4563 = vmatpush1.msra.mxu0 %v3170
    %4564 = vmatprep.subr.mxu0 %v3164
    %4565 = vmatpush1.msra.mxu0 %v3163
    %4566 = vmatprep.subr.mxu0 %v3157
    %4567 = vmatpush1.msra.mxu0 %v3156
    %4568 = vmatprep.subr.mxu0 %v3150
    %4569 = vmatpush1.msra.mxu0 %v3149
    %4570 = vmatprep.subr.mxu0 %v3143
    %4571 = vmatpush1.msra.mxu0 %v3142
    %4572 = vmatprep.subr.mxu0 %v3136
    %4573 = vmatpush1.msra.mxu0 %v3135
    %4574 = vmatprep.subr.mxu0 %v3129
    %4575 = vmatpush1.msra.mxu0 %v3128
    %4576 = vmatprep.subr.mxu0 %v3122
    %4577 = vmatpush1.msra.mxu0 %v3121
    %4578 = vmatprep.subr.mxu0 %v3115
    %4579 = vmatpush1.msra.mxu0 %v3114
    %4580 = vmatprep.subr.mxu0 %v3108
    %4581 = vmatpush1.msra.mxu0 %v3107
    %4582 = vmatprep.subr.mxu0 %v3101
    %4583 = vmatpush1.msra.mxu0 %v3100
    %4584 = vmatprep.subr.mxu0 %v3094
    %4585 = vmatpush1.msra.mxu0 %v3093
    %4586 = vmatprep.subr.mxu0 %v3087
    %4587 = vmatpush1.msra.mxu0 %v3086
    %4588 = vmatprep.subr.mxu0 %v3080
    %4589 = vmatpush1.msra.mxu0 %v3079
    %4590 = vmatprep.subr.mxu0 %v3073
    %4591 = vmatpush1.msra.mxu0 %v3072
    %4592 = vmatprep.subr.mxu0 %v3066
    %4593 = vmatpush1.msra.mxu0 %v3065
    %4594 = vmatprep.subr.mxu0 %v3283
    %4595 = vmatpush2.msra.mxu0 %v3282
    %4596 = vmatprep.subr.mxu0 %v3276
    %4597 = vmatpush2.msra.mxu0 %v3275
    %4598 = vmatprep.subr.mxu0 %v3269
    %4599 = vmatpush2.msra.mxu0 %v3268
    %4600 = vmatprep.subr.mxu0 %v3262
    %4601 = vmatpush2.msra.mxu0 %v3261
    %4602 = vmatprep.subr.mxu0 %v3255
    %4603 = vmatpush2.msra.mxu0 %v3254
    %4604 = vmatprep.subr.mxu0 %v3248
    %4605 = vmatpush2.msra.mxu0 %v3247
    %4606 = vmatprep.subr.mxu0 %v3241
    %4607 = vmatpush2.msra.mxu0 %v3240
    %4608 = vmatprep.subr.mxu0 %v3234
    %4609 = vmatpush2.msra.mxu0 %v3233
    %4610 = vmatprep.subr.mxu0 %v3227
    %4611 = vmatpush2.msra.mxu0 %v3226
    %4612 = vmatprep.subr.mxu0 %v3220
    %4613 = vmatpush2.msra.mxu0 %v3219
    %4614 = vmatprep.subr.mxu0 %v3213
    %4615 = vmatpush2.msra.mxu0 %v3212
    %4616 = vmatprep.subr.mxu0 %v3206
    %4617 = vmatpush2.msra.mxu0 %v3205
    %4618 = vmatprep.subr.mxu0 %v3199
    %4619 = vmatpush2.msra.mxu0 %v3198
    %4620 = vmatprep.subr.mxu0 %v3192
    %4621 = vmatpush2.msra.mxu0 %v3191
    %4622 = vmatprep.subr.mxu0 %v3185
    %4623 = vmatpush2.msra.mxu0 %v3184
    %4624 = vmatprep.subr.mxu0 %v3178
    %4625 = vmatpush2.msra.mxu0 %v3177
    %4626 = vmatprep.mubr.f32.mxu0 %v2542
    %4627 = vmatmul.mubr.f32.gmra.mxu0 %v2541
    %v4628 = vpop.f32.mrf.mxu0
    %v4629 = vadd.f32 %v3978, %v4628
    %v4630 = vpop.f32.mrf.mxu0
    %v4631 = vadd.f32 %v3982, %v4630
    %4632 = vdwg.mxu0
    %4633 = vmatprep.subr.mxu0 %v3395
    %4634 = vmatpush1.msra.mxu0 %v3394
    %4635 = vmatprep.subr.mxu0 %v3388
    %4636 = vmatpush1.msra.mxu0 %v3387
    %4637 = vmatprep.subr.mxu0 %v3381
    %4638 = vmatpush1.msra.mxu0 %v3380
    %4639 = vmatprep.subr.mxu0 %v3374
    %4640 = vmatpush1.msra.mxu0 %v3373
    %4641 = vmatprep.subr.mxu0 %v3367
    %4642 = vmatpush1.msra.mxu0 %v3366
    %4643 = vmatprep.subr.mxu0 %v3360
    %4644 = vmatpush1.msra.mxu0 %v3359
    %4645 = vmatprep.subr.mxu0 %v3353
    %4646 = vmatpush1.msra.mxu0 %v3352
    %4647 = vmatprep.subr.mxu0 %v3346
    %4648 = vmatpush1.msra.mxu0 %v3345
    %4649 = vmatprep.subr.mxu0 %v3339
    %4650 = vmatpush1.msra.mxu0 %v3338
    %4651 = vmatprep.subr.mxu0 %v3332
    %4652 = vmatpush1.msra.mxu0 %v3331
    %4653 = vmatprep.subr.mxu0 %v3325
    %4654 = vmatpush1.msra.mxu0 %v3324
    %4655 = vmatprep.subr.mxu0 %v3318
    %4656 = vmatpush1.msra.mxu0 %v3317
    %4657 = vmatprep.subr.mxu0 %v3311
    %4658 = vmatpush1.msra.mxu0 %v3310
    %4659 = vmatprep.subr.mxu0 %v3304
    %4660 = vmatpush1.msra.mxu0 %v3303
    %4661 = vmatprep.subr.mxu0 %v3297
    %4662 = vmatpush1.msra.mxu0 %v3296
    %4663 = vmatprep.subr.mxu0 %v3290
    %4664 = vmatpush1.msra.mxu0 %v3289
    %4665 = vmatprep.subr.mxu0 %v3507
    %4666 = vmatpush2.msra.mxu0 %v3506
    %4667 = vmatprep.subr.mxu0 %v3500
    %4668 = vmatpush2.msra.mxu0 %v3499
    %4669 = vmatprep.subr.mxu0 %v3493
    %4670 = vmatpush2.msra.mxu0 %v3492
    %4671 = vmatprep.subr.mxu0 %v3486
    %4672 = vmatpush2.msra.mxu0 %v3485
    %4673 = vmatprep.subr.mxu0 %v3479
    %4674 = vmatpush2.msra.mxu0 %v3478
    %4675 = vmatprep.subr.mxu0 %v3472
    %4676 = vmatpush2.msra.mxu0 %v3471
    %4677 = vmatprep.subr.mxu0 %v3465
    %4678 = vmatpush2.msra.mxu0 %v3464
    %4679 = vmatprep.subr.mxu0 %v3458
    %4680 = vmatpush2.msra.mxu0 %v3457
    %4681 = vmatprep.subr.mxu0 %v3451
    %4682 = vmatpush2.msra.mxu0 %v3450
    %4683 = vmatprep.subr.mxu0 %v3444
    %4684 = vmatpush2.msra.mxu0 %v3443
    %4685 = vmatprep.subr.mxu0 %v3437
    %4686 = vmatpush2.msra.mxu0 %v3436
    %4687 = vmatprep.subr.mxu0 %v3430
    %4688 = vmatpush2.msra.mxu0 %v3429
    %4689 = vmatprep.subr.mxu0 %v3423
    %4690 = vmatpush2.msra.mxu0 %v3422
    %4691 = vmatprep.subr.mxu0 %v3416
    %4692 = vmatpush2.msra.mxu0 %v3415
    %4693 = vmatprep.subr.mxu0 %v3409
    %4694 = vmatpush2.msra.mxu0 %v3408
    %4695 = vmatprep.subr.mxu0 %v3402
    %4696 = vmatpush2.msra.mxu0 %v3401
    %4697 = vmatprep.mubr.f32.mxu0 %v2544
    %4698 = vmatmul.mubr.f32.gmra.mxu0 %v2543
    %v4699 = vpop.f32.mrf.mxu0
    %v4700 = vadd.f32 %v4629, %v4699
    %v4701 = vpop.f32.mrf.mxu0
    %v4702 = vadd.f32 %v4631, %v4701
    %4703 = vdwg.mxu0
    %4704 = vmatprep.subr.mxu0 %v3619
    %4705 = vmatpush1.msra.mxu0 %v3618
    %4706 = vmatprep.subr.mxu0 %v3612
    %4707 = vmatpush1.msra.mxu0 %v3611
    %4708 = vmatprep.subr.mxu0 %v3605
    %4709 = vmatpush1.msra.mxu0 %v3604
    %4710 = vmatprep.subr.mxu0 %v3598
    %4711 = vmatpush1.msra.mxu0 %v3597
    %4712 = vmatprep.subr.mxu0 %v3591
    %4713 = vmatpush1.msra.mxu0 %v3590
    %4714 = vmatprep.subr.mxu0 %v3584
    %4715 = vmatpush1.msra.mxu0 %v3583
    %4716 = vmatprep.subr.mxu0 %v3577
    %4717 = vmatpush1.msra.mxu0 %v3576
    %4718 = vmatprep.subr.mxu0 %v3570
    %4719 = vmatpush1.msra.mxu0 %v3569
    %4720 = vmatprep.subr.mxu0 %v3563
    %4721 = vmatpush1.msra.mxu0 %v3562
    %4722 = vmatprep.subr.mxu0 %v3556
    %4723 = vmatpush1.msra.mxu0 %v3555
    %4724 = vmatprep.subr.mxu0 %v3549
    %4725 = vmatpush1.msra.mxu0 %v3548
    %4726 = vmatprep.subr.mxu0 %v3542
    %4727 = vmatpush1.msra.mxu0 %v3541
    %4728 = vmatprep.subr.mxu0 %v3535
    %4729 = vmatpush1.msra.mxu0 %v3534
    %4730 = vmatprep.subr.mxu0 %v3528
    %4731 = vmatpush1.msra.mxu0 %v3527
    %4732 = vmatprep.subr.mxu0 %v3521
    %4733 = vmatpush1.msra.mxu0 %v3520
    %4734 = vmatprep.subr.mxu0 %v3514
    %4735 = vmatpush1.msra.mxu0 %v3513
    %4736 = vmatprep.subr.mxu0 %v3731
    %4737 = vmatpush2.msra.mxu0 %v3730
    %4738 = vmatprep.subr.mxu0 %v3724
    %4739 = vmatpush2.msra.mxu0 %v3723
    %4740 = vmatprep.subr.mxu0 %v3717
    %4741 = vmatpush2.msra.mxu0 %v3716
    %4742 = vmatprep.subr.mxu0 %v3710
    %4743 = vmatpush2.msra.mxu0 %v3709
    %4744 = vmatprep.subr.mxu0 %v3703
    %4745 = vmatpush2.msra.mxu0 %v3702
    %4746 = vmatprep.subr.mxu0 %v3696
    %4747 = vmatpush2.msra.mxu0 %v3695
    %4748 = vmatprep.subr.mxu0 %v3689
    %4749 = vmatpush2.msra.mxu0 %v3688
    %4750 = vmatprep.subr.mxu0 %v3682
    %4751 = vmatpush2.msra.mxu0 %v3681
    %4752 = vmatprep.subr.mxu0 %v3675
    %4753 = vmatpush2.msra.mxu0 %v3674
    %4754 = vmatprep.subr.mxu0 %v3668
    %4755 = vmatpush2.msra.mxu0 %v3667
    %4756 = vmatprep.subr.mxu0 %v3661
    %4757 = vmatpush2.msra.mxu0 %v3660
    %4758 = vmatprep.subr.mxu0 %v3654
    %4759 = vmatpush2.msra.mxu0 %v3653
    %4760 = vmatprep.subr.mxu0 %v3647
    %4761 = vmatpush2.msra.mxu0 %v3646
    %4762 = vmatprep.subr.mxu0 %v3640
    %4763 = vmatpush2.msra.mxu0 %v3639
    %4764 = vmatprep.subr.mxu0 %v3633
    %4765 = vmatpush2.msra.mxu0 %v3632
    %4766 = vmatprep.subr.mxu0 %v3626
    %4767 = vmatpush2.msra.mxu0 %v3625
    %4768 = vmatprep.mubr.f32.mxu0 %v2546
    %4769 = vmatmul.mubr.f32.gmra.mxu0 %v2545
    %v4770 = vpop.f32.mrf.mxu0
    %v4771 = vadd.f32 %v4700, %v4770
    %v4772 = vpop.f32.mrf.mxu0
    %v4773 = vadd.f32 %v4702, %v4772
    %4774 = vdwg.mxu0
    %4775 = vmatprep.subr.mxu0 %v3843
    %4776 = vmatpush1.msra.mxu0 %v3842
    %4777 = vmatprep.subr.mxu0 %v3836
    %4778 = vmatpush1.msra.mxu0 %v3835
    %4779 = vmatprep.subr.mxu0 %v3829
    %4780 = vmatpush1.msra.mxu0 %v3828
    %4781 = vmatprep.subr.mxu0 %v3822
    %4782 = vmatpush1.msra.mxu0 %v3821
    %4783 = vmatprep.subr.mxu0 %v3815
    %4784 = vmatpush1.msra.mxu0 %v3814
    %4785 = vmatprep.subr.mxu0 %v3808
    %4786 = vmatpush1.msra.mxu0 %v3807
    %4787 = vmatprep.subr.mxu0 %v3801
    %4788 = vmatpush1.msra.mxu0 %v3800
    %4789 = vmatprep.subr.mxu0 %v3794
    %4790 = vmatpush1.msra.mxu0 %v3793
    %4791 = vmatprep.subr.mxu0 %v3787
    %4792 = vmatpush1.msra.mxu0 %v3786
    %4793 = vmatprep.subr.mxu0 %v3780
    %4794 = vmatpush1.msra.mxu0 %v3779
    %4795 = vmatprep.subr.mxu0 %v3773
    %4796 = vmatpush1.msra.mxu0 %v3772
    %4797 = vmatprep.subr.mxu0 %v3766
    %4798 = vmatpush1.msra.mxu0 %v3765
    %4799 = vmatprep.subr.mxu0 %v3759
    %4800 = vmatpush1.msra.mxu0 %v3758
    %4801 = vmatprep.subr.mxu0 %v3752
    %4802 = vmatpush1.msra.mxu0 %v3751
    %4803 = vmatprep.subr.mxu0 %v3745
    %4804 = vmatpush1.msra.mxu0 %v3744
    %4805 = vmatprep.subr.mxu0 %v3738
    %4806 = vmatpush1.msra.mxu0 %v3737
    %4807 = vmatprep.subr.mxu0 %v3955
    %4808 = vmatpush2.msra.mxu0 %v3954
    %4809 = vmatprep.subr.mxu0 %v3948
    %4810 = vmatpush2.msra.mxu0 %v3947
    %4811 = vmatprep.subr.mxu0 %v3941
    %4812 = vmatpush2.msra.mxu0 %v3940
    %4813 = vmatprep.subr.mxu0 %v3934
    %4814 = vmatpush2.msra.mxu0 %v3933
    %4815 = vmatprep.subr.mxu0 %v3927
    %4816 = vmatpush2.msra.mxu0 %v3926
    %4817 = vmatprep.subr.mxu0 %v3920
    %4818 = vmatpush2.msra.mxu0 %v3919
    %4819 = vmatprep.subr.mxu0 %v3913
    %4820 = vmatpush2.msra.mxu0 %v3912
    %4821 = vmatprep.subr.mxu0 %v3906
    %4822 = vmatpush2.msra.mxu0 %v3905
    %4823 = vmatprep.subr.mxu0 %v3899
    %4824 = vmatpush2.msra.mxu0 %v3898
    %4825 = vmatprep.subr.mxu0 %v3892
    %4826 = vmatpush2.msra.mxu0 %v3891
    %4827 = vmatprep.subr.mxu0 %v3885
    %4828 = vmatpush2.msra.mxu0 %v3884
    %4829 = vmatprep.subr.mxu0 %v3878
    %4830 = vmatpush2.msra.mxu0 %v3877
    %4831 = vmatprep.subr.mxu0 %v3871
    %4832 = vmatpush2.msra.mxu0 %v3870
    %4833 = vmatprep.subr.mxu0 %v3864
    %4834 = vmatpush2.msra.mxu0 %v3863
    %4835 = vmatprep.subr.mxu0 %v3857
    %4836 = vmatpush2.msra.mxu0 %v3856
    %4837 = vmatprep.subr.mxu0 %v3850
    %4838 = vmatpush2.msra.mxu0 %v3849
    %4839 = vmatprep.mubr.f32.mxu0 %v2548
    %4840 = vmatmul.mubr.f32.gmra.mxu0 %v2547
    %v4841 = vpop.f32.mrf.mxu0
    %v4842 = vadd.f32 %v4771, %v4841
    %v4843 = vpop.f32.mrf.mxu0
    %v4844 = vadd.f32 %v4773, %v4843
    %4845 = vdwg.mxu0
    %4846 = vmatprep.subr.mxu0 0.0
    %4847 = vmatpush1.msra.mxu0 %v3172
    %4848 = vmatprep.subr.mxu0 0.0
    %4849 = vmatpush1.msra.mxu0 %v3165
    %4850 = vmatprep.subr.mxu0 0.0
    %4851 = vmatpush1.msra.mxu0 %v3158
    %4852 = vmatprep.subr.mxu0 0.0
    %4853 = vmatpush1.msra.mxu0 %v3151
    %4854 = vmatprep.subr.mxu0 0.0
    %4855 = vmatpush1.msra.mxu0 %v3144
    %4856 = vmatprep.subr.mxu0 0.0
    %4857 = vmatpush1.msra.mxu0 %v3137
    %4858 = vmatprep.subr.mxu0 0.0
    %4859 = vmatpush1.msra.mxu0 %v3130
    %4860 = vmatprep.subr.mxu0 0.0
    %4861 = vmatpush1.msra.mxu0 %v3123
    %4862 = vmatprep.subr.mxu0 0.0
    %4863 = vmatpush1.msra.mxu0 %v3116
    %4864 = vmatprep.subr.mxu0 0.0
    %4865 = vmatpush1.msra.mxu0 %v3109
    %4866 = vmatprep.subr.mxu0 0.0
    %4867 = vmatpush1.msra.mxu0 %v3102
    %4868 = vmatprep.subr.mxu0 0.0
    %4869 = vmatpush1.msra.mxu0 %v3095
    %4870 = vmatprep.subr.mxu0 0.0
    %4871 = vmatpush1.msra.mxu0 %v3088
    %4872 = vmatprep.subr.mxu0 0.0
    %4873 = vmatpush1.msra.mxu0 %v3081
    %4874 = vmatprep.subr.mxu0 0.0
    %4875 = vmatpush1.msra.mxu0 %v3074
    %4876 = vmatprep.subr.mxu0 0.0
    %4877 = vmatpush1.msra.mxu0 %v3067
    %4878 = vmatprep.subr.mxu0 0.0
    %4879 = vmatpush2.msra.mxu0 %v3284
    %4880 = vmatprep.subr.mxu0 0.0
    %4881 = vmatpush2.msra.mxu0 %v3277
    %4882 = vmatprep.subr.mxu0 0.0
    %4883 = vmatpush2.msra.mxu0 %v3270
    %4884 = vmatprep.subr.mxu0 0.0
    %4885 = vmatpush2.msra.mxu0 %v3263
    %4886 = vmatprep.subr.mxu0 0.0
    %4887 = vmatpush2.msra.mxu0 %v3256
    %4888 = vmatprep.subr.mxu0 0.0
    %4889 = vmatpush2.msra.mxu0 %v3249
    %4890 = vmatprep.subr.mxu0 0.0
    %4891 = vmatpush2.msra.mxu0 %v3242
    %4892 = vmatprep.subr.mxu0 0.0
    %4893 = vmatpush2.msra.mxu0 %v3235
    %4894 = vmatprep.subr.mxu0 0.0
    %4895 = vmatpush2.msra.mxu0 %v3228
    %4896 = vmatprep.subr.mxu0 0.0
    %4897 = vmatpush2.msra.mxu0 %v3221
    %4898 = vmatprep.subr.mxu0 0.0
    %4899 = vmatpush2.msra.mxu0 %v3214
    %4900 = vmatprep.subr.mxu0 0.0
    %4901 = vmatpush2.msra.mxu0 %v3207
    %4902 = vmatprep.subr.mxu0 0.0
    %4903 = vmatpush2.msra.mxu0 %v3200
    %4904 = vmatprep.subr.mxu0 0.0
    %4905 = vmatpush2.msra.mxu0 %v3193
    %4906 = vmatprep.subr.mxu0 0.0
    %4907 = vmatpush2.msra.mxu0 %v3186
    %4908 = vmatprep.subr.mxu0 0.0
    %4909 = vmatpush2.msra.mxu0 %v3179
    %4910 = vmatprep.mubr.f32.mxu0 %v2542
    %4911 = vmatmul.mubr.f32.gmra.mxu0 %v2541
    %v4912 = vpop.f32.mrf.mxu0
    %v4913 = vadd.f32 %v3986, %v4912
    %v4914 = vpop.f32.mrf.mxu0
    %4915 = vdwg.mxu0
    %4916 = vmatprep.subr.mxu0 0.0
    %4917 = vmatpush1.msra.mxu0 %v3396
    %4918 = vmatprep.subr.mxu0 0.0
    %4919 = vmatpush1.msra.mxu0 %v3389
    %4920 = vmatprep.subr.mxu0 0.0
    %4921 = vmatpush1.msra.mxu0 %v3382
    %4922 = vmatprep.subr.mxu0 0.0
    %4923 = vmatpush1.msra.mxu0 %v3375
    %4924 = vmatprep.subr.mxu0 0.0
    %4925 = vmatpush1.msra.mxu0 %v3368
    %4926 = vmatprep.subr.mxu0 0.0
    %4927 = vmatpush1.msra.mxu0 %v3361
    %4928 = vmatprep.subr.mxu0 0.0
    %4929 = vmatpush1.msra.mxu0 %v3354
    %4930 = vmatprep.subr.mxu0 0.0
    %4931 = vmatpush1.msra.mxu0 %v3347
    %4932 = vmatprep.subr.mxu0 0.0
    %4933 = vmatpush1.msra.mxu0 %v3340
    %4934 = vmatprep.subr.mxu0 0.0
    %4935 = vmatpush1.msra.mxu0 %v3333
    %4936 = vmatprep.subr.mxu0 0.0
    %4937 = vmatpush1.msra.mxu0 %v3326
    %4938 = vmatprep.subr.mxu0 0.0
    %4939 = vmatpush1.msra.mxu0 %v3319
    %4940 = vmatprep.subr.mxu0 0.0
    %4941 = vmatpush1.msra.mxu0 %v3312
    %4942 = vmatprep.subr.mxu0 0.0
    %4943 = vmatpush1.msra.mxu0 %v3305
    %4944 = vmatprep.subr.mxu0 0.0
    %4945 = vmatpush1.msra.mxu0 %v3298
    %4946 = vmatprep.subr.mxu0 0.0
    %4947 = vmatpush1.msra.mxu0 %v3291
    %4948 = vmatprep.subr.mxu0 0.0
    %4949 = vmatpush2.msra.mxu0 %v3508
    %4950 = vmatprep.subr.mxu0 0.0
    %4951 = vmatpush2.msra.mxu0 %v3501
    %4952 = vmatprep.subr.mxu0 0.0
    %4953 = vmatpush2.msra.mxu0 %v3494
    %4954 = vmatprep.subr.mxu0 0.0
    %4955 = vmatpush2.msra.mxu0 %v3487
    %4956 = vmatprep.subr.mxu0 0.0
    %4957 = vmatpush2.msra.mxu0 %v3480
    %4958 = vmatprep.subr.mxu0 0.0
    %4959 = vmatpush2.msra.mxu0 %v3473
    %4960 = vmatprep.subr.mxu0 0.0
    %4961 = vmatpush2.msra.mxu0 %v3466
    %4962 = vmatprep.subr.mxu0 0.0
    %4963 = vmatpush2.msra.mxu0 %v3459
    %4964 = vmatprep.subr.mxu0 0.0
    %4965 = vmatpush2.msra.mxu0 %v3452
    %4966 = vmatprep.subr.mxu0 0.0
    %4967 = vmatpush2.msra.mxu0 %v3445
    %4968 = vmatprep.subr.mxu0 0.0
    %4969 = vmatpush2.msra.mxu0 %v3438
    %4970 = vmatprep.subr.mxu0 0.0
    %4971 = vmatpush2.msra.mxu0 %v3431
    %4972 = vmatprep.subr.mxu0 0.0
    %4973 = vmatpush2.msra.mxu0 %v3424
    %4974 = vmatprep.subr.mxu0 0.0
    %4975 = vmatpush2.msra.mxu0 %v3417
    %4976 = vmatprep.subr.mxu0 0.0
    %4977 = vmatpush2.msra.mxu0 %v3410
    %4978 = vmatprep.subr.mxu0 0.0
    %4979 = vmatpush2.msra.mxu0 %v3403
    %4980 = vmatprep.mubr.f32.mxu0 %v2544
    %4981 = vmatmul.mubr.f32.gmra.mxu0 %v2543
    %v4982 = vpop.f32.mrf.mxu0
    %v4983 = vadd.f32 %v4913, %v4982
    %v4984 = vpop.f32.mrf.mxu0
    %4985 = vdwg.mxu0
    %4986 = vmatprep.subr.mxu0 0.0
    %4987 = vmatpush1.msra.mxu0 %v3620
    %4988 = vmatprep.subr.mxu0 0.0
    %4989 = vmatpush1.msra.mxu0 %v3613
    %4990 = vmatprep.subr.mxu0 0.0
    %4991 = vmatpush1.msra.mxu0 %v3606
    %4992 = vmatprep.subr.mxu0 0.0
    %4993 = vmatpush1.msra.mxu0 %v3599
    %4994 = vmatprep.subr.mxu0 0.0
    %4995 = vmatpush1.msra.mxu0 %v3592
    %4996 = vmatprep.subr.mxu0 0.0
    %4997 = vmatpush1.msra.mxu0 %v3585
    %4998 = vmatprep.subr.mxu0 0.0
    %4999 = vmatpush1.msra.mxu0 %v3578
    %5000 = vmatprep.subr.mxu0 0.0
    %5001 = vmatpush1.msra.mxu0 %v3571
    %5002 = vmatprep.subr.mxu0 0.0
    %5003 = vmatpush1.msra.mxu0 %v3564
    %5004 = vmatprep.subr.mxu0 0.0
    %5005 = vmatpush1.msra.mxu0 %v3557
    %5006 = vmatprep.subr.mxu0 0.0
    %5007 = vmatpush1.msra.mxu0 %v3550
    %5008 = vmatprep.subr.mxu0 0.0
    %5009 = vmatpush1.msra.mxu0 %v3543
    %5010 = vmatprep.subr.mxu0 0.0
    %5011 = vmatpush1.msra.mxu0 %v3536
    %5012 = vmatprep.subr.mxu0 0.0
    %5013 = vmatpush1.msra.mxu0 %v3529
    %5014 = vmatprep.subr.mxu0 0.0
    %5015 = vmatpush1.msra.mxu0 %v3522
    %5016 = vmatprep.subr.mxu0 0.0
    %5017 = vmatpush1.msra.mxu0 %v3515
    %5018 = vmatprep.subr.mxu0 0.0
    %5019 = vmatpush2.msra.mxu0 %v3732
    %5020 = vmatprep.subr.mxu0 0.0
    %5021 = vmatpush2.msra.mxu0 %v3725
    %5022 = vmatprep.subr.mxu0 0.0
    %5023 = vmatpush2.msra.mxu0 %v3718
    %5024 = vmatprep.subr.mxu0 0.0
    %5025 = vmatpush2.msra.mxu0 %v3711
    %5026 = vmatprep.subr.mxu0 0.0
    %5027 = vmatpush2.msra.mxu0 %v3704
    %5028 = vmatprep.subr.mxu0 0.0
    %5029 = vmatpush2.msra.mxu0 %v3697
    %5030 = vmatprep.subr.mxu0 0.0
    %5031 = vmatpush2.msra.mxu0 %v3690
    %5032 = vmatprep.subr.mxu0 0.0
    %5033 = vmatpush2.msra.mxu0 %v3683
    %5034 = vmatprep.subr.mxu0 0.0
    %5035 = vmatpush2.msra.mxu0 %v3676
    %5036 = vmatprep.subr.mxu0 0.0
    %5037 = vmatpush2.msra.mxu0 %v3669
    %5038 = vmatprep.subr.mxu0 0.0
    %5039 = vmatpush2.msra.mxu0 %v3662
    %5040 = vmatprep.subr.mxu0 0.0
    %5041 = vmatpush2.msra.mxu0 %v3655
    %5042 = vmatprep.subr.mxu0 0.0
    %5043 = vmatpush2.msra.mxu0 %v3648
    %5044 = vmatprep.subr.mxu0 0.0
    %5045 = vmatpush2.msra.mxu0 %v3641
    %5046 = vmatprep.subr.mxu0 0.0
    %5047 = vmatpush2.msra.mxu0 %v3634
    %5048 = vmatprep.subr.mxu0 0.0
    %5049 = vmatpush2.msra.mxu0 %v3627
    %5050 = vmatprep.mubr.f32.mxu0 %v2546
    %5051 = vmatmul.mubr.f32.gmra.mxu0 %v2545
    %v5052 = vpop.f32.mrf.mxu0
    %v5053 = vadd.f32 %v4983, %v5052
    %v5054 = vpop.f32.mrf.mxu0
    %5055 = vdwg.mxu0
    %5056 = vmatprep.subr.mxu0 0.0
    %5057 = vmatpush1.msra.mxu0 %v3844
    %5058 = vmatprep.subr.mxu0 0.0
    %5059 = vmatpush1.msra.mxu0 %v3837
    %5060 = vmatprep.subr.mxu0 0.0
    %5061 = vmatpush1.msra.mxu0 %v3830
    %5062 = vmatprep.subr.mxu0 0.0
    %5063 = vmatpush1.msra.mxu0 %v3823
    %5064 = vmatprep.subr.mxu0 0.0
    %5065 = vmatpush1.msra.mxu0 %v3816
    %5066 = vmatprep.subr.mxu0 0.0
    %5067 = vmatpush1.msra.mxu0 %v3809
    %5068 = vmatprep.subr.mxu0 0.0
    %5069 = vmatpush1.msra.mxu0 %v3802
    %5070 = vmatprep.subr.mxu0 0.0
    %5071 = vmatpush1.msra.mxu0 %v3795
    %5072 = vmatprep.subr.mxu0 0.0
    %5073 = vmatpush1.msra.mxu0 %v3788
    %5074 = vmatprep.subr.mxu0 0.0
    %5075 = vmatpush1.msra.mxu0 %v3781
    %5076 = vmatprep.subr.mxu0 0.0
    %5077 = vmatpush1.msra.mxu0 %v3774
    %5078 = vmatprep.subr.mxu0 0.0
    %5079 = vmatpush1.msra.mxu0 %v3767
    %5080 = vmatprep.subr.mxu0 0.0
    %5081 = vmatpush1.msra.mxu0 %v3760
    %5082 = vmatprep.subr.mxu0 0.0
    %5083 = vmatpush1.msra.mxu0 %v3753
    %5084 = vmatprep.subr.mxu0 0.0
    %5085 = vmatpush1.msra.mxu0 %v3746
    %5086 = vmatprep.subr.mxu0 0.0
    %5087 = vmatpush1.msra.mxu0 %v3739
    %5088 = vmatprep.subr.mxu0 0.0
    %5089 = vmatpush2.msra.mxu0 %v3956
    %5090 = vmatprep.subr.mxu0 0.0
    %5091 = vmatpush2.msra.mxu0 %v3949
    %5092 = vmatprep.subr.mxu0 0.0
    %5093 = vmatpush2.msra.mxu0 %v3942
    %5094 = vmatprep.subr.mxu0 0.0
    %5095 = vmatpush2.msra.mxu0 %v3935
    %5096 = vmatprep.subr.mxu0 0.0
    %5097 = vmatpush2.msra.mxu0 %v3928
    %5098 = vmatprep.subr.mxu0 0.0
    %5099 = vmatpush2.msra.mxu0 %v3921
    %5100 = vmatprep.subr.mxu0 0.0
    %5101 = vmatpush2.msra.mxu0 %v3914
    %5102 = vmatprep.subr.mxu0 0.0
    %5103 = vmatpush2.msra.mxu0 %v3907
    %5104 = vmatprep.subr.mxu0 0.0
    %5105 = vmatpush2.msra.mxu0 %v3900
    %5106 = vmatprep.subr.mxu0 0.0
    %5107 = vmatpush2.msra.mxu0 %v3893
    %5108 = vmatprep.subr.mxu0 0.0
    %5109 = vmatpush2.msra.mxu0 %v3886
    %5110 = vmatprep.subr.mxu0 0.0
    %5111 = vmatpush2.msra.mxu0 %v3879
    %5112 = vmatprep.subr.mxu0 0.0
    %5113 = vmatpush2.msra.mxu0 %v3872
    %5114 = vmatprep.subr.mxu0 0.0
    %5115 = vmatpush2.msra.mxu0 %v3865
    %5116 = vmatprep.subr.mxu0 0.0
    %5117 = vmatpush2.msra.mxu0 %v3858
    %5118 = vmatprep.subr.mxu0 0.0
    %5119 = vmatpush2.msra.mxu0 %v3851
    %5120 = vmatprep.mubr.f32.mxu0 %v2548
    %5121 = vmatmul.mubr.f32.gmra.mxu0 %v2547
    %v5122 = vpop.f32.mrf.mxu0
    %v5123 = vadd.f32 %v5053, %v5122
    %v5124 = vpop.f32.mrf.mxu0
    %5125 = vdwg.mxu0
    %v5126 = vtanh.pop %v4274
    %v5127 = vtanh.pop %v4276
    %v5128 = vtanh.pop %v4558
    %v5129 = vtanh.pop %v4560
    %v5130 = vtanh.pop %v4842
    %v5131 = vtanh.pop %v4844
    %v5132 = vtanh.pop %v5123
    %5133 = vst [vmem:[#allocation2] sm:$0xff] %v5126
    %5134 = vst [vmem:[#allocation2 + $0x8] sm:$0xff] %v5127
    %5135 = vst [vmem:[#allocation2 + $0x10] sm:$0xff] %v5128
    %5136 = vst [vmem:[#allocation2 + $0x18] sm:$0xff] %v5129
    %5137 = vst [vmem:[#allocation2 + $0x20] sm:$0xff] %v5130
    %5138 = vst [vmem:[#allocation2 + $0x28] sm:$0xff] %v5131
    %vm5139 = vcmask 130048
    %5140 = vst.msk [vmem:[#allocation2 + $0x30] sm:$0xff] %vm5139, %v5132
    // Predicated region
    $region62: #{generator_forward.1} parent=1 // pred_check
      _
    $region63: #{generator_forward.1} parent=1 // pred_check_branch
      %5142 = sbr.rel (0) target = $region65
    $region64: #{generator_forward.1} parent=1 // pred_region
      %s5144 = ssub.s32 896, 896
      %5145 = vsyncadd [#allocation3], %s5144
      %s5147 = sshll.u32 [#allocation2], 4
      %s5148 = int_to_ptr.vmem [resolvable:$true] %s5147
      %5150 = dma.vmem_to_hbm [thread:$0]  %s5148, 896, %s15, [#allocation3]
    $region65: #{generator_forward.1} parent=1 // pred_fallthru
      _
    // Predicated region
    $region66: #{generator_forward.1} parent=1 // pred_check
      _
    $region67: #{generator_forward.1} parent=1 // pred_check_branch
      %5152 = sbr.rel (0) target = $region69
    $region68: #{generator_forward.1} parent=1 // pred_region
      %5153 = dma.done [#allocation3], 896
    $region69: #{generator_forward.1} parent=1 // pred_fallthru
      _
    %5154 = vsyncpa [#allocation3], 1

</llo_original>
